<compile_context>
chip_gen: v7x
topology: tpu7x:2x2x1
jax: 0.10.0
libtpu: 0.0.40
codegen_flags: <defaults>
</compile_context>

<pallas_src>
import math
import functools

import jax
import jax.numpy as jnp
from jax.experimental import pallas as pl
from jax.experimental.pallas import tpu as pltpu


# ----------------------------- helpers -----------------------------

VMEM_LIMIT_BYTES = 48 * 1024 * 1024   # re-derived for v7x's 64 MiB physical VMEM


def _round_up(n, m):
    return ((n + m - 1) // m) * m


def _pick_tile(dim, candidates):
    """Largest candidate that evenly divides `dim`; else the full dim (always legal)."""
    for c in candidates:
        if c <= dim and dim % c == 0:
            return c
    return dim


_M_TILES = (1024, 512, 256, 128, 64, 32, 16, 8)   # row (sublane) tiles
_M_TILES_LN = (256, 128, 64, 32, 16, 8)           # smaller cap when full-D rows resident
_N_TILES = (1024, 512, 256, 128)                  # lane tiles
_K_TILES = (1024, 512, 256, 128)
_K_TILES_LN = (512, 256, 128)
_ATTN_TILES = (512, 256, 128, 64, 32, 16, 8)


def _params(semantics):
    return pltpu.CompilerParams(dimension_semantics=semantics,
                                vmem_limit_bytes=VMEM_LIMIT_BYTES)


# ----------------------------- generic tiled linear (+bias, optional ReLU) -----------------------------

def _linear_kernel(x_ref, w_ref, b_ref, o_ref, acc_ref, *, activation):
    @pl.when(pl.program_id(2) == 0)
    def _():
        acc_ref[...] = jnp.zeros_like(acc_ref)

    acc_ref[...] += jnp.dot(x_ref[...].astype(jnp.bfloat16), w_ref[...],
                            preferred_element_type=jnp.float32)

    @pl.when(pl.program_id(2) == pl.num_programs(2) - 1)
    def _():
        y = acc_ref[...] + b_ref[...]
        if activation == "relu":
            y = jnp.maximum(y, 0.0)
        o_ref[...] = y.astype(o_ref.dtype)


def pallas_linear(x, w, b, activation=None, out_dtype=jnp.float32):
    """y = x @ w + b.  x: (M,K), w: (K,N) bf16 (pre-transposed), b: (N,)."""
    M, K = x.shape
    N = w.shape[1]
    tm = _pick_tile(M, _M_TILES)
    tn = _pick_tile(N, _N_TILES)
    tk = _pick_tile(K, _K_TILES)
    grid = (M // tm, N // tn, K // tk)
    return pl.pallas_call(
        functools.partial(_linear_kernel, activation=activation),
        out_shape=jax.ShapeDtypeStruct((M, N), out_dtype),
        grid=grid,
        in_specs=[pl.BlockSpec((tm, tk), lambda i, j, k: (i, k)),
                  pl.BlockSpec((tk, tn), lambda i, j, k: (k, j)),
                  pl.BlockSpec((1, tn), lambda i, j, k: (0, j))],
        out_specs=pl.BlockSpec((tm, tn), lambda i, j, k: (i, j)),
        scratch_shapes=[pltpu.VMEM((tm, tn), jnp.float32)],
        compiler_params=_params(("parallel", "parallel", "arbitrary")),
    )(x, w, b.reshape(1, N))


# ----------------------------- fused QKV projection with head-split layout -----------------------------

def _qkv_kernel(x_ref, wq_ref, wk_ref, wv_ref, bq_ref, bk_ref, bv_ref,
                q_ref, k_ref, v_ref, qacc, kacc, vacc, *, q_scale):
    kk = pl.program_id(3)

    @pl.when(kk == 0)
    def _():
        qacc[...] = jnp.zeros_like(qacc)
        kacc[...] = jnp.zeros_like(kacc)
        vacc[...] = jnp.zeros_like(vacc)

    xb = x_ref[0].astype(jnp.bfloat16)                         # (ts, tk)
    qacc[...] += jnp.dot(xb, wq_ref[0], preferred_element_type=jnp.float32)
    kacc[...] += jnp.dot(xb, wk_ref[0], preferred_element_type=jnp.float32)
    vacc[...] += jnp.dot(xb, wv_ref[0], preferred_element_type=jnp.float32)

    @pl.when(kk == pl.num_programs(3) - 1)
    def _():
        # 1/sqrt(dh) folded into Q here (not into the (S,S) score matrix).
        q_ref[0, 0] = ((qacc[...] + bq_ref[0]) * q_scale).astype(q_ref.dtype)
        k_ref[0, 0] = (kacc[...] + bk_ref[0]).astype(k_ref.dtype)
        v_ref[0, 0] = (vacc[...] + bv_ref[0]).astype(v_ref.dtype)


def pallas_qkv_heads(x, wq, wk, wv, bq, bk, bv, q_scale):
    """x: (B,S,D) f32.  wq/wk/wv: (H,D,dh) bf16.  bq/bk/bv: (H,1,dh) f32.
    Returns q, k, v each (B,H,S,dh) bf16 (head-major, lane-dense per head)."""
    B, S, D = x.shape
    H, _, dh = wq.shape
    ts = _pick_tile(S, _M_TILES)
    tk = _pick_tile(D, _K_TILES)
    grid = (B, H, S // ts, D // tk)
    out = jax.ShapeDtypeStruct((B, H, S, dh), jnp.bfloat16)
    hspec = pl.BlockSpec((1, 1, ts, dh), lambda b, h, s, k: (b, h, s, 0))
    wspec = pl.BlockSpec((1, tk, dh), lambda b, h, s, k: (h, k, 0))
    bspec = pl.BlockSpec((1, 1, dh), lambda b, h, s, k: (h, 0, 0))
    return pl.pallas_call(
        functools.partial(_qkv_kernel, q_scale=q_scale),
        out_shape=(out, out, out),
        grid=grid,
        in_specs=[pl.BlockSpec((1, ts, tk), lambda b, h, s, k: (b, s, k)),
                  wspec, wspec, wspec, bspec, bspec, bspec],
        out_specs=(hspec, hspec, hspec),
        scratch_shapes=[pltpu.VMEM((ts, dh), jnp.float32),
                        pltpu.VMEM((ts, dh), jnp.float32),
                        pltpu.VMEM((ts, dh), jnp.float32)],
        compiler_params=_params(("parallel", "parallel", "parallel", "arbitrary")),
    )(x, wq, wk, wv, bq, bk, bv)


# ----------------------------- flash-tiled causal attention -----------------------------

def _flash_kernel(q_ref, k_ref, v_ref, o_ref, m_sc, l_sc, acc_sc, *, tq, tkv):
    qi = pl.program_id(2)
    ki = pl.program_id(3)

    @pl.when(ki == 0)
    def _():
        m_sc[...] = jnp.full_like(m_sc, -jnp.inf)
        l_sc[...] = jnp.zeros_like(l_sc)
        acc_sc[...] = jnp.zeros_like(acc_sc)

    # Skip kv blocks that are entirely above the causal diagonal.
    @pl.when(ki * tkv <= qi * tq + (tq - 1))
    def _():
        q = q_ref[0, 0]                                         # (tq, dh) bf16, pre-scaled
        k = k_ref[0, 0]                                         # (tkv, dh) bf16
        # contract the dh axes directly: no materialized K transpose
        s = jax.lax.dot_general(q, k, (((1,), (1,)), ((), ())),
                                preferred_element_type=jnp.float32)  # (tq, tkv)
        row = qi * tq + jax.lax.broadcasted_iota(jnp.int32, (tq, tkv), 0)
        col = ki * tkv + jax.lax.broadcasted_iota(jnp.int32, (tq, tkv), 1)
        s = jnp.where(col <= row, s, -1e30)

        m_prev = m_sc[...]
        m_new = jnp.maximum(m_prev, jnp.max(s, axis=-1, keepdims=True))
        alpha = jnp.exp(m_prev - m_new)
        p = jnp.exp(s - m_new)
        l_sc[...] = alpha * l_sc[...] + jnp.sum(p, axis=-1, keepdims=True)
        acc_sc[...] = alpha * acc_sc[...] + jnp.dot(
            p.astype(jnp.bfloat16), v_ref[0, 0], preferred_element_type=jnp.float32)
        m_sc[...] = m_new

    @pl.when(ki == pl.num_programs(3) - 1)
    def _():
        inv = pl.reciprocal(l_sc[...], approx=True)
        o_ref[0, 0] = (acc_sc[...] * inv).astype(o_ref.dtype)


def pallas_flash_attention(q, k, v):
    """q,k,v: (B,H,S,dh) bf16 (q pre-scaled).  Returns (B,H,S,dh) bf16."""
    B, H, S, dh = q.shape
    tq = _pick_tile(S, _ATTN_TILES)
    tkv = _pick_tile(S, _ATTN_TILES)
    grid = (B, H, S // tq, S // tkv)
    return pl.pallas_call(
        functools.partial(_flash_kernel, tq=tq, tkv=tkv),
        out_shape=jax.ShapeDtypeStruct((B, H, S, dh), jnp.bfloat16),
        grid=grid,
        in_specs=[pl.BlockSpec((1, 1, tq, dh), lambda b, h, qi, ki: (b, h, qi, 0)),
                  pl.BlockSpec((1, 1, tkv, dh), lambda b, h, qi, ki: (b, h, ki, 0)),
                  pl.BlockSpec((1, 1, tkv, dh), lambda b, h, qi, ki: (b, h, ki, 0))],
        out_specs=pl.BlockSpec((1, 1, tq, dh), lambda b, h, qi, ki: (b, h, qi, 0)),
        scratch_shapes=[pltpu.VMEM((tq, 1), jnp.float32),
                        pltpu.VMEM((tq, 1), jnp.float32),
                        pltpu.VMEM((tq, dh), jnp.float32)],
        compiler_params=_params(("parallel", "parallel", "parallel", "arbitrary")),
    )(q, k, v)


# ----------------------------- fused out-proj (head contraction) + residual + LayerNorm -----------------------------

def _outproj_add_ln_kernel(a_ref, w_ref, b_ref, r_ref, g_ref, bln_ref,
                           o_ref, acc_ref, *, eps):
    h = pl.program_id(2)

    @pl.when(h == 0)
    def _():
        acc_ref[...] = jnp.zeros_like(acc_ref)

    # head-concat happens implicitly in the accumulator (contraction over heads)
    acc_ref[...] += jnp.dot(a_ref[0, 0], w_ref[0],
                            preferred_element_type=jnp.float32)

    @pl.when(h == pl.num_programs(2) - 1)
    def _():
        z = acc_ref[...] + b_ref[...] + r_ref[0]
        mu = jnp.mean(z, axis=-1, keepdims=True)
        var = jnp.mean(jnp.square(z - mu), axis=-1, keepdims=True)
        zn = (z - mu) * jax.lax.rsqrt(var + eps)
        o_ref[0] = (zn * g_ref[...] + bln_ref[...]).astype(o_ref.dtype)


def pallas_outproj_add_layernorm(attn, w, b, resid, gamma, beta, eps=1e-5):
    """LayerNorm(resid + concat_heads(attn) @ W_o + b).
    attn: (B,H,S,dh) bf16; w: (H,dh,D) bf16; resid: (B,S,D) f32."""
    B, H, S, dh = attn.shape
    D = w.shape[2]
    ts = _pick_tile(S, _M_TILES_LN)
    grid = (B, S // ts, H)
    return pl.pallas_call(
        functools.partial(_outproj_add_ln_kernel, eps=eps),
        out_shape=jax.ShapeDtypeStruct((B, S, D), jnp.float32),
        grid=grid,
        in_specs=[pl.BlockSpec((1, 1, ts, dh), lambda b, s, h: (b, h, s, 0)),
                  pl.BlockSpec((1, dh, D), lambda b, s, h: (h, 0, 0)),
                  pl.BlockSpec((1, D), lambda b, s, h: (0, 0)),
                  pl.BlockSpec((1, ts, D), lambda b, s, h: (b, s, 0)),
                  pl.BlockSpec((1, D), lambda b, s, h: (0, 0)),
                  pl.BlockSpec((1, D), lambda b, s, h: (0, 0))],
        out_specs=pl.BlockSpec((1, ts, D), lambda b, s, h: (b, s, 0)),
        scratch_shapes=[pltpu.VMEM((ts, D), jnp.float32)],
        compiler_params=_params(("parallel", "parallel", "arbitrary")),
    )(attn, w, b.reshape(1, D), resid, gamma.reshape(1, D), beta.reshape(1, D))


# ----------------------------- fused linear + residual-add + LayerNorm (FFN second matmul) -----------------------------

def _linear_add_ln_kernel(x_ref, w_ref, b_ref, r_ref, g_ref, bln_ref,
                          o_ref, acc_ref, *, eps):
    k = pl.program_id(1)

    @pl.when(k == 0)
    def _():
        acc_ref[...] = jnp.zeros_like(acc_ref)

    acc_ref[...] += jnp.dot(x_ref[...].astype(jnp.bfloat16), w_ref[...],
                            preferred_element_type=jnp.float32)

    @pl.when(k == pl.num_programs(1) - 1)
    def _():
        z = acc_ref[...] + b_ref[...] + r_ref[...]
        mu = jnp.mean(z, axis=-1, keepdims=True)
        var = jnp.mean(jnp.square(z - mu), axis=-1, keepdims=True)
        zn = (z - mu) * jax.lax.rsqrt(var + eps)
        o_ref[...] = (zn * g_ref[...] + bln_ref[...]).astype(o_ref.dtype)


def pallas_linear_add_layernorm(x, w, b, resid, gamma, beta, eps=1e-5):
    """LayerNorm(resid + x @ w + b); N (model dim) kept whole so LN sees full rows."""
    M, K = x.shape
    N = w.shape[1]
    tm = _pick_tile(M, _M_TILES_LN)
    tk = _pick_tile(K, _K_TILES_LN)
    grid = (M // tm, K // tk)
    return pl.pallas_call(
        functools.partial(_linear_add_ln_kernel, eps=eps),
        out_shape=jax.ShapeDtypeStruct((M, N), jnp.float32),
        grid=grid,
        in_specs=[pl.BlockSpec((tm, tk), lambda i, k: (i, k)),
                  pl.BlockSpec((tk, N), lambda i, k: (k, 0)),
                  pl.BlockSpec((1, N), lambda i, k: (0, 0)),
                  pl.BlockSpec((tm, N), lambda i, k: (i, 0)),
                  pl.BlockSpec((1, N), lambda i, k: (0, 0)),
                  pl.BlockSpec((1, N), lambda i, k: (0, 0))],
        out_specs=pl.BlockSpec((tm, N), lambda i, k: (i, 0)),
        scratch_shapes=[pltpu.VMEM((tm, N), jnp.float32)],
        compiler_params=_params(("parallel", "arbitrary")),
    )(x, w, b.reshape(1, N), resid, gamma.reshape(1, N), beta.reshape(1, N))


# ----------------------------- decoder: vocab projection with fused batch-first -> seq-first layout -----------------------------

def _decoder_kernel(x_ref, w_ref, b_ref, o_ref, acc_ref):
    k = pl.program_id(3)

    @pl.when(k == 0)
    def _():
        acc_ref[...] = jnp.zeros_like(acc_ref)

    acc_ref[...] += jnp.dot(x_ref[0].astype(jnp.bfloat16), w_ref[...],
                            preferred_element_type=jnp.float32)

    @pl.when(k == pl.num_programs(3) - 1)
    def _():
        o_ref[...] = (acc_ref[...] + b_ref[...]).astype(o_ref.dtype)


def pallas_decoder(x, w, b, ntoken):
    """x: (B,S,D) batch-first f32; w: (D,Np) bf16 (vocab padded); b: (Np,).
    Returns seq-first logits (S,B,ntoken); the layout change is done by the
    out_spec index map, no separate XLA transpose of the activations."""
    B, S, D = x.shape
    Np = w.shape[1]
    ts = _pick_tile(S, _M_TILES)
    tn = _pick_tile(Np, _N_TILES)
    tk = _pick_tile(D, _K_TILES)
    nj = Np // tn
    grid = (S // ts, B, nj, D // tk)
    out = pl.pallas_call(
        _decoder_kernel,
        out_shape=jax.ShapeDtypeStruct((S, B * Np), jnp.float32),
        grid=grid,
        in_specs=[pl.BlockSpec((1, ts, tk), lambda s, b, j, k: (b, s, k)),
                  pl.BlockSpec((tk, tn), lambda s, b, j, k: (k, j)),
                  pl.BlockSpec((1, tn), lambda s, b, j, k: (0, j))],
        out_specs=pl.BlockSpec((ts, tn), lambda s, b, j, k: (s, b * nj + j)),
        scratch_shapes=[pltpu.VMEM((ts, tn), jnp.float32)],
        compiler_params=_params(("parallel", "parallel", "parallel", "arbitrary")),
    )(x, w, b.reshape(1, Np))
    return out.reshape(S, B, Np)[:, :, :ntoken]


# ----------------------------- embedding-scale + positional-encoding add -----------------------------

def _embed_pe_kernel(x_ref, pe_ref, o_ref, *, scale):
    o_ref[...] = x_ref[...] * scale + pe_ref[...][None, :, :]


def pallas_embed_pe(x, pe_s, scale):
    """x: (B,S,D) embeddings, pe_s: (S,D) positional table (never broadcast in HBM)."""
    B, S, D = x.shape
    ts = _pick_tile(S, _M_TILES)
    return pl.pallas_call(
        functools.partial(_embed_pe_kernel, scale=scale),
        out_shape=jax.ShapeDtypeStruct((B, S, D), jnp.float32),
        grid=(B, S // ts),
        in_specs=[pl.BlockSpec((1, ts, D), lambda b, s: (b, s, 0)),
                  pl.BlockSpec((ts, D), lambda b, s: (s, 0))],
        out_specs=pl.BlockSpec((1, ts, D), lambda b, s: (b, s, 0)),
        compiler_params=_params(("parallel", "parallel")),
    )(x, pe_s)


# ----------------------------- model glue (plain JAX) -----------------------------

def make_positional_encoding(max_len, d_model):
    position = jnp.arange(max_len, dtype=jnp.float32)[:, None]
    div_term = jnp.exp(jnp.arange(0, d_model, 2, dtype=jnp.float32)
                       * (-math.log(10000.0) / d_model))
    pe = jnp.zeros((max_len, d_model), dtype=jnp.float32)
    pe = pe.at[:, 0::2].set(jnp.sin(position * div_term))
    pe = pe.at[:, 1::2].set(jnp.cos(position * div_term))
    return pe  # (max_len, d_model)


def init_params(key, ntoken, ninp, nhead, nhid, num_layers):
    """Weights stored ONCE in kernel-friendly layouts: pre-transposed (K,N),
    per-head splits for attention, vocab padded to a lane-friendly multiple, bf16."""
    dh = ninp // nhead
    ntoken_pad = _round_up(ntoken, 512)

    def u(k, shape, scale=0.1):
        return jax.random.uniform(k, shape, jnp.float32, -scale, scale)

    keys = iter(jax.random.split(key, 4 + num_layers * 8))
    dec_w = u(next(keys), (ninp, ntoken))
    dec_w = jnp.pad(dec_w, ((0, 0), (0, ntoken_pad - ntoken)))
    params = {
        "emb":   u(next(keys), (ntoken, ninp)),                 # nn.Embedding weight
        "dec_w": dec_w.astype(jnp.bfloat16),                    # decoder, (K, Np)
        "dec_b": jnp.zeros((ntoken_pad,), jnp.float32),         # zeroed in init_weights
    }
    layers = []
    for _ in range(num_layers):
        layers.append({
            # in-proj stored per head, pre-transposed (H, D, dh)
            "wq": u(next(keys), (nhead, ninp, dh), 0.05).astype(jnp.bfloat16),
            "wk": u(next(keys), (nhead, ninp, dh), 0.05).astype(jnp.bfloat16),
            "wv": u(next(keys), (nhead, ninp, dh), 0.05).astype(jnp.bfloat16),
            "bq": jnp.zeros((nhead, 1, dh), jnp.float32),
            "bk": jnp.zeros((nhead, 1, dh), jnp.float32),
            "bv": jnp.zeros((nhead, 1, dh), jnp.float32),
            # out-proj stored per head (H, dh, D)
            "wo": u(next(keys), (nhead, dh, ninp), 0.05).astype(jnp.bfloat16),
            "bo": jnp.zeros((ninp,), jnp.float32),
            "lin1_w": u(next(keys), (ninp, nhid), 0.05).astype(jnp.bfloat16),
            "lin1_b": jnp.zeros((nhid,), jnp.float32),
            "lin2_w": u(next(keys), (nhid, ninp), 0.05).astype(jnp.bfloat16),
            "lin2_b": jnp.zeros((ninp,), jnp.float32),
            "ln1_g": jnp.ones((ninp,), jnp.float32),
            "ln1_b": jnp.zeros((ninp,), jnp.float32),
            "ln2_g": jnp.ones((ninp,), jnp.float32),
            "ln2_b": jnp.zeros((ninp,), jnp.float32),
        })
    params["layers"] = layers
    return params


def encoder_layer_forward(x, lp, nhead):
    # PyTorch TransformerEncoderLayer defaults: post-norm, ReLU.  x: (B, S, D) f32.
    B, S, D = x.shape
    dh = D // nhead

    q, k, v = pallas_qkv_heads(x, lp["wq"], lp["wk"], lp["wv"],
                               lp["bq"], lp["bk"], lp["bv"],
                               q_scale=1.0 / math.sqrt(dh))      # (B,H,S,dh) bf16 each
    attn = pallas_flash_attention(q, k, v)                       # (B,H,S,dh) bf16

    # out-proj (contraction over heads) + residual + LayerNorm1 fused
    x1 = pallas_outproj_add_layernorm(attn, lp["wo"], lp["bo"],
                                      x, lp["ln1_g"], lp["ln1_b"])   # (B,S,D) f32
    x1_2d = x1.reshape(B * S, D)

    # FFN: lin1+ReLU (bf16 hidden), then lin2 + residual + LayerNorm2 fused
    h = pallas_linear(x1_2d, lp["lin1_w"], lp["lin1_b"],
                      activation="relu", out_dtype=jnp.bfloat16)
    x2 = pallas_linear_add_layernorm(h, lp["lin2_w"], lp["lin2_b"],
                                     x1_2d, lp["ln2_g"], lp["ln2_b"])
    return x2.reshape(B, S, D)


def transformer_forward(src, params, pe, nhead, ninp, ntoken):
    # src: (S, B) int32 token ids -> logits (S, B, ntoken)
    S, B = src.shape

    # TODO(synk): the nn.Embedding gather stays an XLA gather; could be fused into
    # pallas_embed_pe via scalar-prefetched token ids + a DMA row gather.
    emb = params["emb"][src.T]                              # (B, S, ninp), batch-first
    x = pallas_embed_pe(emb, pe[:S], math.sqrt(ninp))       # *sqrt(ninp) + PE, fused
    # TODO(synk): dropout (pos_encoder / encoder layers) omitted — eval-mode identity.

    for lp in params["layers"]:
        x = encoder_layer_forward(x, lp, nhead)

    # decoder folds the batch-first -> seq-first layout change into its out_spec
    return pallas_decoder(x, params["dec_w"], params["dec_b"], ntoken)  # (S,B,ntoken)


# ----------------------------- demo -----------------------------

if __name__ == "__main__":
    S, B = 8, 2
    ntoken, ninp, nhead, nhid = 50, 32, 2, 64
    num_encode_layers = 2

    root = jax.random.PRNGKey(0)
    k_param, k_src = jax.random.split(root)
    params = init_params(k_param, ntoken, ninp, nhead, nhid, num_encode_layers)
    pe = make_positional_encoding(5000, ninp)

    src = jax.random.randint(k_src, (S, B), 0, ntoken, dtype=jnp.int32)

    fwd = jax.jit(functools.partial(transformer_forward,
                                    nhead=nhead, ninp=ninp, ntoken=ntoken))
    out = fwd(src, params, pe)
    out = jax.block_until_ready(out)

    assert out.shape == (S, B, ntoken), out.shape
    assert bool(jnp.all(jnp.isfinite(out)))
    print("KERNEL_OK")
</pallas_src>

<mosaic_0001>
module attributes {stable_mosaic.version = 11 : i64} {
  func.func @_embed_pe_kernel(%arg0: i32, %arg1: i32, %arg2: memref<1x8x32xf32, #tpu.memory_space<vmem>>, %arg3: memref<8x32xf32, #tpu.memory_space<vmem>>, %arg4: memref<1x8x32xf32, #tpu.memory_space<vmem>>) attributes {dimension_semantics = [#tpu.dimension_semantics<parallel>, #tpu.dimension_semantics<parallel>], iteration_bounds = array<i64: 2, 1>, scalar_prefetch = 0 : i64, scratch_operands = 0 : i64, tpu.core_type = #tpu.core_type<tc>, window_params = [{transform_indices = @transform_0, window_bounds = array<i64: 1, 8, 32>}, {transform_indices = @transform_1, window_bounds = array<i64: 8, 32>}, {transform_indices = @transform_2, window_bounds = array<i64: 1, 8, 32>}]} {
    %c0 = arith.constant 0 : index
    %c0_0 = arith.constant 0 : index
    %c0_1 = arith.constant 0 : index
    %0 = vector.load %arg2[%c0, %c0_0, %c0_1] : memref<1x8x32xf32, #tpu.memory_space<vmem>>, vector<1x8x32xf32>
    %cst = arith.constant 5.65685415 : f32
    %1 = vector.broadcast %cst : f32 to vector<1x8x32xf32>
    %2 = arith.mulf %0, %1 : vector<1x8x32xf32>
    %c0_2 = arith.constant 0 : index
    %c0_3 = arith.constant 0 : index
    %3 = vector.load %arg3[%c0_2, %c0_3] : memref<8x32xf32, #tpu.memory_space<vmem>>, vector<8x32xf32>
    %4 = vector.shape_cast %3 : vector<8x32xf32> to vector<1x8x32xf32>
    %5 = arith.addf %2, %4 : vector<1x8x32xf32>
    %c0_4 = arith.constant 0 : index
    %c0_5 = arith.constant 0 : index
    %c0_6 = arith.constant 0 : index
    %6 = vector.load %arg4[%c0_4, %c0_5, %c0_6] : memref<1x8x32xf32, #tpu.memory_space<vmem>>, vector<1x8x32xf32>
    tpu.vector_store %arg4[%c0_4, %c0_5, %c0_6], %5 {strides = array<i32>} : memref<1x8x32xf32, #tpu.memory_space<vmem>>, vector<1x8x32xf32>,
    return
  }
  func.func @transform_0(%arg0: i32, %arg1: i32) -> (i32, i32, i32) {
    %c0_i32 = arith.constant 0 : i32
    %c0_i32_0 = arith.constant 0 : i32
    return %arg0, %arg1, %c0_i32 : i32, i32, i32
  }
  func.func @transform_1(%arg0: i32, %arg1: i32) -> (i32, i32) {
    %c0_i32 = arith.constant 0 : i32
    %c0_i32_0 = arith.constant 0 : i32
    return %arg1, %c0_i32 : i32, i32
  }
  func.func @transform_2(%arg0: i32, %arg1: i32) -> (i32, i32, i32) {
    %c0_i32 = arith.constant 0 : i32
    %c0_i32_0 = arith.constant 0 : i32
    return %arg0, %arg1, %c0_i32 : i32, i32, i32
  }
}

module attributes {stable_mosaic.version = 11 : i64} {
  func.func @_qkv_kernel(%arg0: i32, %arg1: i32, %arg2: i32, %arg3: i32, %arg4: memref<1x8x32xf32, #tpu.memory_space<vmem>>, %arg5: memref<1x32x16xbf16, #tpu.memory_space<vmem>>, %arg6: memref<1x32x16xbf16, #tpu.memory_space<vmem>>, %arg7: memref<1x32x16xbf16, #tpu.memory_space<vmem>>, %arg8: memref<1x1x16xf32, #tpu.memory_space<vmem>>, %arg9: memref<1x1x16xf32, #tpu.memory_space<vmem>>, %arg10: memref<1x1x16xf32, #tpu.memory_space<vmem>>, %arg11: memref<1x1x8x16xbf16, #tpu.memory_space<vmem>>, %arg12: memref<1x1x8x16xbf16, #tpu.memory_space<vmem>>, %arg13: memref<1x1x8x16xbf16, #tpu.memory_space<vmem>>, %arg14: memref<8x16xf32, #tpu.memory_space<vmem>>, %arg15: memref<8x16xf32, #tpu.memory_space<vmem>>, %arg16: memref<8x16xf32, #tpu.memory_space<vmem>>) attributes {dimension_semantics = [#tpu.dimension_semantics<parallel>, #tpu.dimension_semantics<parallel>, #tpu.dimension_semantics<parallel>, #tpu.dimension_semantics<arbitrary>], iteration_bounds = array<i64: 2, 2, 1, 1>, scalar_prefetch = 0 : i64, scratch_operands = 3 : i64, tpu.core_type = #tpu.core_type<tc>, window_params = [{transform_indices = @transform_0, window_bounds = array<i64: 1, 8, 32>}, {transform_indices = @transform_1, window_bounds = array<i64: 1, 32, 16>}, {transform_indices = @transform_2, window_bounds = array<i64: 1, 32, 16>}, {transform_indices = @transform_3, window_bounds = array<i64: 1, 32, 16>}, {transform_indices = @transform_4, window_bounds = array<i64: 1, 1, 16>}, {transform_indices = @transform_5, window_bounds = array<i64: 1, 1, 16>}, {transform_indices = @transform_6, window_bounds = array<i64: 1, 1, 16>}, {transform_indices = @transform_7, window_bounds = array<i64: 1, 1, 8, 16>}, {transform_indices = @transform_8, window_bounds = array<i64: 1, 1, 8, 16>}, {transform_indices = @transform_9, window_bounds = array<i64: 1, 1, 8, 16>}]} {
    %c0_i32 = arith.constant 0 : i32
    %0 = arith.cmpi eq, %arg3, %c0_i32 : i32
    %1 = arith.extui %0 : i1 to i32
    %c0_i32_0 = arith.constant 0 : i32
    %2 = arith.cmpi ne, %1, %c0_i32_0 : i32
    scf.if %2 {
      %cst_28 = arith.constant 0.000000e+00 : f32
      %27 = vector.broadcast %cst_28 : f32 to vector<8x16xf32>
      %c0_29 = arith.constant 0 : index
      %c0_30 = arith.constant 0 : index
      %28 = vector.load %arg14[%c0_29, %c0_30] : memref<8x16xf32, #tpu.memory_space<vmem>>, vector<8x16xf32>
      tpu.vector_store %arg14[%c0_29, %c0_30], %27 {strides = array<i32>} : memref<8x16xf32, #tpu.memory_space<vmem>>, vector<8x16xf32>,
      %cst_31 = arith.constant 0.000000e+00 : f32
      %29 = vector.broadcast %cst_31 : f32 to vector<8x16xf32>
      %c0_32 = arith.constant 0 : index
      %c0_33 = arith.constant 0 : index
      %30 = vector.load %arg15[%c0_32, %c0_33] : memref<8x16xf32, #tpu.memory_space<vmem>>, vector<8x16xf32>
      tpu.vector_store %arg15[%c0_32, %c0_33], %29 {strides = array<i32>} : memref<8x16xf32, #tpu.memory_space<vmem>>, vector<8x16xf32>,
      %cst_34 = arith.constant 0.000000e+00 : f32
      %31 = vector.broadcast %cst_34 : f32 to vector<8x16xf32>
      %c0_35 = arith.constant 0 : index
      %c0_36 = arith.constant 0 : index
      %32 = vector.load %arg16[%c0_35, %c0_36] : memref<8x16xf32, #tpu.memory_space<vmem>>, vector<8x16xf32>
      tpu.vector_store %arg16[%c0_35, %c0_36], %31 {strides = array<i32>} : memref<8x16xf32, #tpu.memory_space<vmem>>, vector<8x16xf32>,
    } else {
    }
    %c0 = arith.constant 0 : index
    %c0_1 = arith.constant 0 : index
    %c0_2 = arith.constant 0 : index
    %3 = vector.load %arg4[%c0, %c0_1, %c0_2] : memref<1x8x32xf32, #tpu.memory_space<vmem>>, vector<1x8x32xf32>
    %4 = vector.shape_cast %3 : vector<1x8x32xf32> to vector<8x32xf32>
    %5 = arith.truncf %4 : vector<8x32xf32> to vector<8x32xbf16>
    %c0_3 = arith.constant 0 : index
    %c0_4 = arith.constant 0 : index
    %6 = vector.load %arg14[%c0_3, %c0_4] : memref<8x16xf32, #tpu.memory_space<vmem>>, vector<8x16xf32>
    %c0_5 = arith.constant 0 : index
    %c0_6 = arith.constant 0 : index
    %c0_7 = arith.constant 0 : index
    %7 = vector.load %arg5[%c0_5, %c0_6, %c0_7] : memref<1x32x16xbf16, #tpu.memory_space<vmem>>, vector<1x32x16xbf16>
    %8 = vector.shape_cast %7 : vector<1x32x16xbf16> to vector<32x16xbf16>
    %cst = arith.constant dense<0.000000e+00> : vector<8x16xf32>
    %9 = tpu.matmul %5, %8, %cst {dimension_numbers = #tpu.dot_dimension_numbers<[1], [0], [0], [1], [0, 0, 1, 1], [], []>} : vector<8x32xbf16>, vector<32x16xbf16>, vector<8x16xf32> -> vector<8x16xf32>
    %10 = arith.addf %6, %9 : vector<8x16xf32>
    %c0_8 = arith.constant 0 : index
    %c0_9 = arith.constant 0 : index
    %11 = vector.load %arg14[%c0_8, %c0_9] : memref<8x16xf32, #tpu.memory_space<vmem>>, vector<8x16xf32>
    tpu.vector_store %arg14[%c0_8, %c0_9], %10 {strides = array<i32>} : memref<8x16xf32, #tpu.memory_space<vmem>>, vector<8x16xf32>,
    %c0_10 = arith.constant 0 : index
    %c0_11 = arith.constant 0 : index
    %12 = vector.load %arg15[%c0_10, %c0_11] : memref<8x16xf32, #tpu.memory_space<vmem>>, vector<8x16xf32>
    %c0_12 = arith.constant 0 : index
    %c0_13 = arith.constant 0 : index
    %c0_14 = arith.constant 0 : index
    %13 = vector.load %arg6[%c0_12, %c0_13, %c0_14] : memref<1x32x16xbf16, #tpu.memory_space<vmem>>, vector<1x32x16xbf16>
    %14 = vector.shape_cast %13 : vector<1x32x16xbf16> to vector<32x16xbf16>
    %cst_15 = arith.constant dense<0.000000e+00> : vector<8x16xf32>
    %15 = tpu.matmul %5, %14, %cst_15 {dimension_numbers = #tpu.dot_dimension_numbers<[1], [0], [0], [1], [0, 0, 1, 1], [], []>} : vector<8x32xbf16>, vector<32x16xbf16>, vector<8x16xf32> -> vector<8x16xf32>
    %16 = arith.addf %12, %15 : vector<8x16xf32>
    %c0_16 = arith.constant 0 : index
    %c0_17 = arith.constant 0 : index
    %17 = vector.load %arg15[%c0_16, %c0_17] : memref<8x16xf32, #tpu.memory_space<vmem>>, vector<8x16xf32>
    tpu.vector_store %arg15[%c0_16, %c0_17], %16 {strides = array<i32>} : memref<8x16xf32, #tpu.memory_space<vmem>>, vector<8x16xf32>,
    %c0_18 = arith.constant 0 : index
    %c0_19 = arith.constant 0 : index
    %18 = vector.load %arg16[%c0_18, %c0_19] : memref<8x16xf32, #tpu.memory_space<vmem>>, vector<8x16xf32>
    %c0_20 = arith.constant 0 : index
    %c0_21 = arith.constant 0 : index
    %c0_22 = arith.constant 0 : index
    %19 = vector.load %arg7[%c0_20, %c0_21, %c0_22] : memref<1x32x16xbf16, #tpu.memory_space<vmem>>, vector<1x32x16xbf16>
    %20 = vector.shape_cast %19 : vector<1x32x16xbf16> to vector<32x16xbf16>
    %cst_23 = arith.constant dense<0.000000e+00> : vector<8x16xf32>
    %21 = tpu.matmul %5, %20, %cst_23 {dimension_numbers = #tpu.dot_dimension_numbers<[1], [0], [0], [1], [0, 0, 1, 1], [], []>} : vector<8x32xbf16>, vector<32x16xbf16>, vector<8x16xf32> -> vector<8x16xf32>
    %22 = arith.addf %18, %21 : vector<8x16xf32>
    %c0_24 = arith.constant 0 : index
    %c0_25 = arith.constant 0 : index
    %23 = vector.load %arg16[%c0_24, %c0_25] : memref<8x16xf32, #tpu.memory_space<vmem>>, vector<8x16xf32>
    tpu.vector_store %arg16[%c0_24, %c0_25], %22 {strides = array<i32>} : memref<8x16xf32, #tpu.memory_space<vmem>>, vector<8x16xf32>,
    %c0_i32_26 = arith.constant 0 : i32
    %24 = arith.cmpi eq, %arg3, %c0_i32_26 : i32
    %25 = arith.extui %24 : i1 to i32
    %c0_i32_27 = arith.constant 0 : i32
    %26 = arith.cmpi ne, %25, %c0_i32_27 : i32
    scf.if %26 {
      %c0_28 = arith.constant 0 : index
      %c0_29 = arith.constant 0 : index
      %27 = vector.load %arg14[%c0_28, %c0_29] : memref<8x16xf32, #tpu.memory_space<vmem>>, vector<8x16xf32>
      %c0_30 = arith.constant 0 : index
      %c0_31 = arith.constant 0 : index
      %c0_32 = arith.constant 0 : index
      %28 = vector.load %arg8[%c0_30, %c0_31, %c0_32] : memref<1x1x16xf32, #tpu.memory_space<vmem>>, vector<1x1x16xf32>
      %29 = vector.shape_cast %28 : vector<1x1x16xf32> to vector<1x16xf32>
      %30 = vector.broadcast %29 : vector<1x16xf32> to vector<8x16xf32>
      %31 = arith.addf %27, %30 : vector<8x16xf32>
      %cst_33 = arith.constant 2.500000e-01 : f32
      %32 = vector.broadcast %cst_33 : f32 to vector<8x16xf32>
      %33 = arith.mulf %31, %32 : vector<8x16xf32>
      %34 = arith.truncf %33 : vector<8x16xf32> to vector<8x16xbf16>
      %c0_34 = arith.constant 0 : index
      %c0_35 = arith.constant 0 : index
      %c0_36 = arith.constant 0 : index
      %c0_37 = arith.constant 0 : index
      %35 = vector.load %arg11[%c0_34, %c0_35, %c0_36, %c0_37] : memref<1x1x8x16xbf16, #tpu.memory_space<vmem>>, vector<1x1x8x16xbf16>
      %36 = vector.shape_cast %35 : vector<1x1x8x16xbf16> to vector<8x16xbf16>
      %37 = vector.shape_cast %34 : vector<8x16xbf16> to vector<1x1x8x16xbf16>
      tpu.vector_store %arg11[%c0_34, %c0_35, %c0_36, %c0_37], %37 {strides = array<i32>} : memref<1x1x8x16xbf16, #tpu.memory_space<vmem>>, vector<1x1x8x16xbf16>,
      %c0_38 = arith.constant 0 : index
      %c0_39 = arith.constant 0 : index
      %38 = vector.load %arg15[%c0_38, %c0_39] : memref<8x16xf32, #tpu.memory_space<vmem>>, vector<8x16xf32>
      %c0_40 = arith.constant 0 : index
      %c0_41 = arith.constant 0 : index
      %c0_42 = arith.constant 0 : index
      %39 = vector.load %arg9[%c0_40, %c0_41, %c0_42] : memref<1x1x16xf32, #tpu.memory_space<vmem>>, vector<1x1x16xf32>
      %40 = vector.shape_cast %39 : vector<1x1x16xf32> to vector<1x16xf32>
      %41 = vector.broadcast %40 : vector<1x16xf32> to vector<8x16xf32>
      %42 = arith.addf %38, %41 : vector<8x16xf32>
      %43 = arith.truncf %42 : vector<8x16xf32> to vector<8x16xbf16>
      %c0_43 = arith.constant 0 : index
      %c0_44 = arith.constant 0 : index
      %c0_45 = arith.constant 0 : index
      %c0_46 = arith.constant 0 : index
      %44 = vector.load %arg12[%c0_43, %c0_44, %c0_45, %c0_46] : memref<1x1x8x16xbf16, #tpu.memory_space<vmem>>, vector<1x1x8x16xbf16>
      %45 = vector.shape_cast %44 : vector<1x1x8x16xbf16> to vector<8x16xbf16>
      %46 = vector.shape_cast %43 : vector<8x16xbf16> to vector<1x1x8x16xbf16>
      tpu.vector_store %arg12[%c0_43, %c0_44, %c0_45, %c0_46], %46 {strides = array<i32>} : memref<1x1x8x16xbf16, #tpu.memory_space<vmem>>, vector<1x1x8x16xbf16>,
      %c0_47 = arith.constant 0 : index
      %c0_48 = arith.constant 0 : index
      %47 = vector.load %arg16[%c0_47, %c0_48] : memref<8x16xf32, #tpu.memory_space<vmem>>, vector<8x16xf32>
      %c0_49 = arith.constant 0 : index
      %c0_50 = arith.constant 0 : index
      %c0_51 = arith.constant 0 : index
      %48 = vector.load %arg10[%c0_49, %c0_50, %c0_51] : memref<1x1x16xf32, #tpu.memory_space<vmem>>, vector<1x1x16xf32>
      %49 = vector.shape_cast %48 : vector<1x1x16xf32> to vector<1x16xf32>
      %50 = vector.broadcast %49 : vector<1x16xf32> to vector<8x16xf32>
      %51 = arith.addf %47, %50 : vector<8x16xf32>
      %52 = arith.truncf %51 : vector<8x16xf32> to vector<8x16xbf16>
      %c0_52 = arith.constant 0 : index
      %c0_53 = arith.constant 0 : index
      %c0_54 = arith.constant 0 : index
      %c0_55 = arith.constant 0 : index
      %53 = vector.load %arg13[%c0_52, %c0_53, %c0_54, %c0_55] : memref<1x1x8x16xbf16, #tpu.memory_space<vmem>>, vector<1x1x8x16xbf16>
      %54 = vector.shape_cast %53 : vector<1x1x8x16xbf16> to vector<8x16xbf16>
      %55 = vector.shape_cast %52 : vector<8x16xbf16> to vector<1x1x8x16xbf16>
      tpu.vector_store %arg13[%c0_52, %c0_53, %c0_54, %c0_55], %55 {strides = array<i32>} : memref<1x1x8x16xbf16, #tpu.memory_space<vmem>>, vector<1x1x8x16xbf16>,
    } else {
    }
    return
  }
  func.func @transform_0(%arg0: i32, %arg1: i32, %arg2: i32, %arg3: i32) -> (i32, i32, i32) {
    %c0_i32 = arith.constant 0 : i32
    return %arg0, %arg2, %arg3 : i32, i32, i32
  }
  func.func @transform_1(%arg0: i32, %arg1: i32, %arg2: i32, %arg3: i32) -> (i32, i32, i32) {
    %c0_i32 = arith.constant 0 : i32
    %c0_i32_0 = arith.constant 0 : i32
    return %arg1, %arg3, %c0_i32 : i32, i32, i32
  }
  func.func @transform_2(%arg0: i32, %arg1: i32, %arg2: i32, %arg3: i32) -> (i32, i32, i32) {
    %c0_i32 = arith.constant 0 : i32
    %c0_i32_0 = arith.constant 0 : i32
    return %arg1, %arg3, %c0_i32 : i32, i32, i32
  }
  func.func @transform_3(%arg0: i32, %arg1: i32, %arg2: i32, %arg3: i32) -> (i32, i32, i32) {
    %c0_i32 = arith.constant 0 : i32
    %c0_i32_0 = arith.constant 0 : i32
    return %arg1, %arg3, %c0_i32 : i32, i32, i32
  }
  func.func @transform_4(%arg0: i32, %arg1: i32, %arg2: i32, %arg3: i32) -> (i32, i32, i32) {
    %c0_i32 = arith.constant 0 : i32
    %c0_i32_0 = arith.constant 0 : i32
    %c0_i32_1 = arith.constant 0 : i32
    return %arg1, %c0_i32, %c0_i32_0 : i32, i32, i32
  }
  func.func @transform_5(%arg0: i32, %arg1: i32, %arg2: i32, %arg3: i32) -> (i32, i32, i32) {
    %c0_i32 = arith.constant 0 : i32
    %c0_i32_0 = arith.constant 0 : i32
    %c0_i32_1 = arith.constant 0 : i32
    return %arg1, %c0_i32, %c0_i32_0 : i32, i32, i32
  }
  func.func @transform_6(%arg0: i32, %arg1: i32, %arg2: i32, %arg3: i32) -> (i32, i32, i32) {
    %c0_i32 = arith.constant 0 : i32
    %c0_i32_0 = arith.constant 0 : i32
    %c0_i32_1 = arith.constant 0 : i32
    return %arg1, %c0_i32, %c0_i32_0 : i32, i32, i32
  }
  func.func @transform_7(%arg0: i32, %arg1: i32, %arg2: i32, %arg3: i32) -> (i32, i32, i32, i32) {
    %c0_i32 = arith.constant 0 : i32
    %c0_i32_0 = arith.constant 0 : i32
    return %arg0, %arg1, %arg2, %c0_i32 : i32, i32, i32, i32
  }
  func.func @transform_8(%arg0: i32, %arg1: i32, %arg2: i32, %arg3: i32) -> (i32, i32, i32, i32) {
    %c0_i32 = arith.constant 0 : i32
    %c0_i32_0 = arith.constant 0 : i32
    return %arg0, %arg1, %arg2, %c0_i32 : i32, i32, i32, i32
  }
  func.func @transform_9(%arg0: i32, %arg1: i32, %arg2: i32, %arg3: i32) -> (i32, i32, i32, i32) {
    %c0_i32 = arith.constant 0 : i32
    %c0_i32_0 = arith.constant 0 : i32
    return %arg0, %arg1, %arg2, %c0_i32 : i32, i32, i32, i32
  }
}

module attributes {stable_mosaic.version = 11 : i64} {
  func.func @_flash_kernel(%arg0: i32, %arg1: i32, %arg2: i32, %arg3: i32, %arg4: memref<1x1x8x16xbf16, #tpu.memory_space<vmem>>, %arg5: memref<1x1x8x16xbf16, #tpu.memory_space<vmem>>, %arg6: memref<1x1x8x16xbf16, #tpu.memory_space<vmem>>, %arg7: memref<1x1x8x16xbf16, #tpu.memory_space<vmem>>, %arg8: memref<8x1xf32, #tpu.memory_space<vmem>>, %arg9: memref<8x1xf32, #tpu.memory_space<vmem>>, %arg10: memref<8x16xf32, #tpu.memory_space<vmem>>) attributes {dimension_semantics = [#tpu.dimension_semantics<parallel>, #tpu.dimension_semantics<parallel>, #tpu.dimension_semantics<parallel>, #tpu.dimension_semantics<arbitrary>], iteration_bounds = array<i64: 2, 2, 1, 1>, scalar_prefetch = 0 : i64, scratch_operands = 3 : i64, tpu.core_type = #tpu.core_type<tc>, window_params = [{transform_indices = @transform_0, window_bounds = array<i64: 1, 1, 8, 16>}, {transform_indices = @transform_1, window_bounds = array<i64: 1, 1, 8, 16>}, {transform_indices = @transform_2, window_bounds = array<i64: 1, 1, 8, 16>}, {transform_indices = @transform_3, window_bounds = array<i64: 1, 1, 8, 16>}]} {
    %c0_i32 = arith.constant 0 : i32
    %0 = arith.cmpi eq, %arg3, %c0_i32 : i32
    %1 = arith.extui %0 : i1 to i32
    %c0_i32_0 = arith.constant 0 : i32
    %2 = arith.cmpi ne, %1, %c0_i32_0 : i32
    scf.if %2 {
      %cst = arith.constant 0xFF800000 : f32
      %12 = vector.broadcast %cst : f32 to vector<8x1xf32>
      %c0 = arith.constant 0 : index
      %c0_5 = arith.constant 0 : index
      %13 = vector.load %arg8[%c0, %c0_5] : memref<8x1xf32, #tpu.memory_space<vmem>>, vector<8x1xf32>
      tpu.vector_store %arg8[%c0, %c0_5], %12 {strides = array<i32>} : memref<8x1xf32, #tpu.memory_space<vmem>>, vector<8x1xf32>,
      %cst_6 = arith.constant 0.000000e+00 : f32
      %14 = vector.broadcast %cst_6 : f32 to vector<8x1xf32>
      %c0_7 = arith.constant 0 : index
      %c0_8 = arith.constant 0 : index
      %15 = vector.load %arg9[%c0_7, %c0_8] : memref<8x1xf32, #tpu.memory_space<vmem>>, vector<8x1xf32>
      tpu.vector_store %arg9[%c0_7, %c0_8], %14 {strides = array<i32>} : memref<8x1xf32, #tpu.memory_space<vmem>>, vector<8x1xf32>,
      %cst_9 = arith.constant 0.000000e+00 : f32
      %16 = vector.broadcast %cst_9 : f32 to vector<8x16xf32>
      %c0_10 = arith.constant 0 : index
      %c0_11 = arith.constant 0 : index
      %17 = vector.load %arg10[%c0_10, %c0_11] : memref<8x16xf32, #tpu.memory_space<vmem>>, vector<8x16xf32>
      tpu.vector_store %arg10[%c0_10, %c0_11], %16 {strides = array<i32>} : memref<8x16xf32, #tpu.memory_space<vmem>>, vector<8x16xf32>,
    } else {
    }
    %c8_i32 = arith.constant 8 : i32
    %3 = arith.muli %arg3, %c8_i32 : i32
    %c8_i32_1 = arith.constant 8 : i32
    %4 = arith.muli %arg2, %c8_i32_1 : i32
    %c7_i32 = arith.constant 7 : i32
    %5 = arith.addi %4, %c7_i32 : i32
    %6 = arith.cmpi sle, %3, %5 : i32
    %7 = arith.extui %6 : i1 to i32
    %c0_i32_2 = arith.constant 0 : i32
    %8 = arith.cmpi ne, %7, %c0_i32_2 : i32
    scf.if %8 {
      %c0 = arith.constant 0 : index
      %c0_5 = arith.constant 0 : index
      %c0_6 = arith.constant 0 : index
      %c0_7 = arith.constant 0 : index
      %12 = vector.load %arg4[%c0, %c0_5, %c0_6, %c0_7] : memref<1x1x8x16xbf16, #tpu.memory_space<vmem>>, vector<1x1x8x16xbf16>
      %13 = vector.shape_cast %12 : vector<1x1x8x16xbf16> to vector<8x16xbf16>
      %c0_8 = arith.constant 0 : index
      %c0_9 = arith.constant 0 : index
      %c0_10 = arith.constant 0 : index
      %c0_11 = arith.constant 0 : index
      %14 = vector.load %arg5[%c0_8, %c0_9, %c0_10, %c0_11] : memref<1x1x8x16xbf16, #tpu.memory_space<vmem>>, vector<1x1x8x16xbf16>
      %15 = vector.shape_cast %14 : vector<1x1x8x16xbf16> to vector<8x16xbf16>
      %cst = arith.constant dense<0.000000e+00> : vector<8x8xf32>
      %16 = tpu.matmul %13, %15, %cst {dimension_numbers = #tpu.dot_dimension_numbers<[1], [1], [0], [0], [0, 0, 1, 0], [], []>} : vector<8x16xbf16>, vector<8x16xbf16>, vector<8x8xf32> -> vector<8x8xf32>
      %c8_i32_12 = arith.constant 8 : i32
      %17 = arith.muli %arg2, %c8_i32_12 : i32
      %18 = tpu.iota {dimensions = array<i32: 0>} : vector<8x8xi32>
      %19 = vector.broadcast %17 : i32 to vector<8x8xi32>
      %20 = arith.addi %19, %18 : vector<8x8xi32>
      %c8_i32_13 = arith.constant 8 : i32
      %21 = arith.muli %arg3, %c8_i32_13 : i32
      %22 = tpu.iota {dimensions = array<i32: 1>} : vector<8x8xi32>
      %23 = vector.broadcast %21 : i32 to vector<8x8xi32>
      %24 = arith.addi %23, %22 : vector<8x8xi32>
      %25 = arith.cmpi sle, %24, %20 : vector<8x8xi32>
      %cst_14 = arith.constant -1.000000e+30 : f32
      %26 = vector.broadcast %cst_14 : f32 to vector<8x8xf32>
      %27 = arith.select %25, %16, %26 : vector<8x8xi1>, vector<8x8xf32>
      %c0_15 = arith.constant 0 : index
      %c0_16 = arith.constant 0 : index
      %28 = vector.load %arg8[%c0_15, %c0_16] : memref<8x1xf32, #tpu.memory_space<vmem>>, vector<8x1xf32>
      %cst_17 = arith.constant dense<0xFF800000> : vector<8xf32>
      %29 = vector.multi_reduction <maximumf>, %27, %cst_17 [1] : vector<8x8xf32> to vector<8xf32>
      %30 = vector.shape_cast %29 : vector<8xf32> to vector<8x1xf32>
      %31 = arith.maximumf %28, %30 : vector<8x1xf32>
      %32 = arith.subf %28, %31 : vector<8x1xf32>
      %33 = math.exp %32 : vector<8x1xf32>
      %34 = vector.broadcast %31 : vector<8x1xf32> to vector<8x8xf32>
      %35 = arith.subf %27, %34 : vector<8x8xf32>
      %36 = math.exp %35 : vector<8x8xf32>
      %c0_18 = arith.constant 0 : index
      %c0_19 = arith.constant 0 : index
      %37 = vector.load %arg9[%c0_18, %c0_19] : memref<8x1xf32, #tpu.memory_space<vmem>>, vector<8x1xf32>
      %38 = arith.mulf %33, %37 : vector<8x1xf32>
      %cst_20 = arith.constant dense<0.000000e+00> : vector<8xf32>
      %39 = vector.multi_reduction <add>, %36, %cst_20 [1] : vector<8x8xf32> to vector<8xf32>
      %40 = vector.shape_cast %39 : vector<8xf32> to vector<8x1xf32>
      %41 = arith.addf %38, %40 : vector<8x1xf32>
      %c0_21 = arith.constant 0 : index
      %c0_22 = arith.constant 0 : index
      %42 = vector.load %arg9[%c0_21, %c0_22] : memref<8x1xf32, #tpu.memory_space<vmem>>, vector<8x1xf32>
      tpu.vector_store %arg9[%c0_21, %c0_22], %41 {strides = array<i32>} : memref<8x1xf32, #tpu.memory_space<vmem>>, vector<8x1xf32>,
      %c0_23 = arith.constant 0 : index
      %c0_24 = arith.constant 0 : index
      %43 = vector.load %arg10[%c0_23, %c0_24] : memref<8x16xf32, #tpu.memory_space<vmem>>, vector<8x16xf32>
      %44 = vector.broadcast %33 : vector<8x1xf32> to vector<8x16xf32>
      %45 = arith.mulf %44, %43 : vector<8x16xf32>
      %46 = arith.truncf %36 : vector<8x8xf32> to vector<8x8xbf16>
      %c0_25 = arith.constant 0 : index
      %c0_26 = arith.constant 0 : index
      %c0_27 = arith.constant 0 : index
      %c0_28 = arith.constant 0 : index
      %47 = vector.load %arg6[%c0_25, %c0_26, %c0_27, %c0_28] : memref<1x1x8x16xbf16, #tpu.memory_space<vmem>>, vector<1x1x8x16xbf16>
      %48 = vector.shape_cast %47 : vector<1x1x8x16xbf16> to vector<8x16xbf16>
      %cst_29 = arith.constant dense<0.000000e+00> : vector<8x16xf32>
      %49 = tpu.matmul %46, %48, %cst_29 {dimension_numbers = #tpu.dot_dimension_numbers<[1], [0], [0], [1], [0, 0, 1, 1], [], []>} : vector<8x8xbf16>, vector<8x16xbf16>, vector<8x16xf32> -> vector<8x16xf32>
      %50 = arith.addf %45, %49 : vector<8x16xf32>
      %c0_30 = arith.constant 0 : index
      %c0_31 = arith.constant 0 : index
      %51 = vector.load %arg10[%c0_30, %c0_31] : memref<8x16xf32, #tpu.memory_space<vmem>>, vector<8x16xf32>
      tpu.vector_store %arg10[%c0_30, %c0_31], %50 {strides = array<i32>} : memref<8x16xf32, #tpu.memory_space<vmem>>, vector<8x16xf32>,
      %c0_32 = arith.constant 0 : index
      %c0_33 = arith.constant 0 : index
      %52 = vector.load %arg8[%c0_32, %c0_33] : memref<8x1xf32, #tpu.memory_space<vmem>>, vector<8x1xf32>
      tpu.vector_store %arg8[%c0_32, %c0_33], %31 {strides = array<i32>} : memref<8x1xf32, #tpu.memory_space<vmem>>, vector<8x1xf32>,
    } else {
    }
    %c0_i32_3 = arith.constant 0 : i32
    %9 = arith.cmpi eq, %arg3, %c0_i32_3 : i32
    %10 = arith.extui %9 : i1 to i32
    %c0_i32_4 = arith.constant 0 : i32
    %11 = arith.cmpi ne, %10, %c0_i32_4 : i32
    scf.if %11 {
      %c0 = arith.constant 0 : index
      %c0_5 = arith.constant 0 : index
      %12 = vector.load %arg9[%c0, %c0_5] : memref<8x1xf32, #tpu.memory_space<vmem>>, vector<8x1xf32>
      %13 = tpu.reciprocal %12 {approx = true} : vector<8x1xf32> -> vector<8x1xf32>
      %c0_6 = arith.constant 0 : index
      %c0_7 = arith.constant 0 : index
      %14 = vector.load %arg10[%c0_6, %c0_7] : memref<8x16xf32, #tpu.memory_space<vmem>>, vector<8x16xf32>
      %15 = vector.broadcast %13 : vector<8x1xf32> to vector<8x16xf32>
      %16 = arith.mulf %14, %15 : vector<8x16xf32>
      %17 = arith.truncf %16 : vector<8x16xf32> to vector<8x16xbf16>
      %c0_8 = arith.constant 0 : index
      %c0_9 = arith.constant 0 : index
      %c0_10 = arith.constant 0 : index
      %c0_11 = arith.constant 0 : index
      %18 = vector.load %arg7[%c0_8, %c0_9, %c0_10, %c0_11] : memref<1x1x8x16xbf16, #tpu.memory_space<vmem>>, vector<1x1x8x16xbf16>
      %19 = vector.shape_cast %18 : vector<1x1x8x16xbf16> to vector<8x16xbf16>
      %20 = vector.shape_cast %17 : vector<8x16xbf16> to vector<1x1x8x16xbf16>
      tpu.vector_store %arg7[%c0_8, %c0_9, %c0_10, %c0_11], %20 {strides = array<i32>} : memref<1x1x8x16xbf16, #tpu.memory_space<vmem>>, vector<1x1x8x16xbf16>,
    } else {
    }
    return
  }
  func.func @transform_0(%arg0: i32, %arg1: i32, %arg2: i32, %arg3: i32) -> (i32, i32, i32, i32) {
    %c0_i32 = arith.constant 0 : i32
    %c0_i32_0 = arith.constant 0 : i32
    return %arg0, %arg1, %arg2, %c0_i32 : i32, i32, i32, i32
  }
  func.func @transform_1(%arg0: i32, %arg1: i32, %arg2: i32, %arg3: i32) -> (i32, i32, i32, i32) {
    %c0_i32 = arith.constant 0 : i32
    %c0_i32_0 = arith.constant 0 : i32
    return %arg0, %arg1, %arg3, %c0_i32 : i32, i32, i32, i32
  }
  func.func @transform_2(%arg0: i32, %arg1: i32, %arg2: i32, %arg3: i32) -> (i32, i32, i32, i32) {
    %c0_i32 = arith.constant 0 : i32
    %c0_i32_0 = arith.constant 0 : i32
    return %arg0, %arg1, %arg3, %c0_i32 : i32, i32, i32, i32
  }
  func.func @transform_3(%arg0: i32, %arg1: i32, %arg2: i32, %arg3: i32) -> (i32, i32, i32, i32) {
    %c0_i32 = arith.constant 0 : i32
    %c0_i32_0 = arith.constant 0 : i32
    return %arg0, %arg1, %arg2, %c0_i32 : i32, i32, i32, i32
  }
}

module attributes {stable_mosaic.version = 11 : i64} {
  func.func @_outproj_add_ln_kernel(%arg0: i32, %arg1: i32, %arg2: i32, %arg3: memref<1x1x8x16xbf16, #tpu.memory_space<vmem>>, %arg4: memref<1x16x32xbf16, #tpu.memory_space<vmem>>, %arg5: memref<1x32xf32, #tpu.memory_space<vmem>>, %arg6: memref<1x8x32xf32, #tpu.memory_space<vmem>>, %arg7: memref<1x32xf32, #tpu.memory_space<vmem>>, %arg8: memref<1x32xf32, #tpu.memory_space<vmem>>, %arg9: memref<1x8x32xf32, #tpu.memory_space<vmem>>, %arg10: memref<8x32xf32, #tpu.memory_space<vmem>>) attributes {dimension_semantics = [#tpu.dimension_semantics<parallel>, #tpu.dimension_semantics<parallel>, #tpu.dimension_semantics<arbitrary>], iteration_bounds = array<i64: 2, 1, 2>, scalar_prefetch = 0 : i64, scratch_operands = 1 : i64, tpu.core_type = #tpu.core_type<tc>, window_params = [{transform_indices = @transform_0, window_bounds = array<i64: 1, 1, 8, 16>}, {transform_indices = @transform_1, window_bounds = array<i64: 1, 16, 32>}, {pipeline_mode = #tpu.pipeline_mode<synchronous>, transform_indices = @transform_2, window_bounds = array<i64: 1, 32>}, {transform_indices = @transform_3, window_bounds = array<i64: 1, 8, 32>}, {pipeline_mode = #tpu.pipeline_mode<synchronous>, transform_indices = @transform_4, window_bounds = array<i64: 1, 32>}, {pipeline_mode = #tpu.pipeline_mode<synchronous>, transform_indices = @transform_5, window_bounds = array<i64: 1, 32>}, {transform_indices = @transform_6, window_bounds = array<i64: 1, 8, 32>}]} {
    %c0_i32 = arith.constant 0 : i32
    %0 = arith.cmpi eq, %arg2, %c0_i32 : i32
    %1 = arith.extui %0 : i1 to i32
    %c0_i32_0 = arith.constant 0 : i32
    %2 = arith.cmpi ne, %1, %c0_i32_0 : i32
    scf.if %2 {
      %cst_12 = arith.constant 0.000000e+00 : f32
      %14 = vector.broadcast %cst_12 : f32 to vector<8x32xf32>
      %c0_13 = arith.constant 0 : index
      %c0_14 = arith.constant 0 : index
      %15 = vector.load %arg10[%c0_13, %c0_14] : memref<8x32xf32, #tpu.memory_space<vmem>>, vector<8x32xf32>
      tpu.vector_store %arg10[%c0_13, %c0_14], %14 {strides = array<i32>} : memref<8x32xf32, #tpu.memory_space<vmem>>, vector<8x32xf32>,
    } else {
    }
    %c0 = arith.constant 0 : index
    %c0_1 = arith.constant 0 : index
    %3 = vector.load %arg10[%c0, %c0_1] : memref<8x32xf32, #tpu.memory_space<vmem>>, vector<8x32xf32>
    %c0_2 = arith.constant 0 : index
    %c0_3 = arith.constant 0 : index
    %c0_4 = arith.constant 0 : index
    %c0_5 = arith.constant 0 : index
    %4 = vector.load %arg3[%c0_2, %c0_3, %c0_4, %c0_5] : memref<1x1x8x16xbf16, #tpu.memory_space<vmem>>, vector<1x1x8x16xbf16>
    %5 = vector.shape_cast %4 : vector<1x1x8x16xbf16> to vector<8x16xbf16>
    %c0_6 = arith.constant 0 : index
    %c0_7 = arith.constant 0 : index
    %c0_8 = arith.constant 0 : index
    %6 = vector.load %arg4[%c0_6, %c0_7, %c0_8] : memref<1x16x32xbf16, #tpu.memory_space<vmem>>, vector<1x16x32xbf16>
    %7 = vector.shape_cast %6 : vector<1x16x32xbf16> to vector<16x32xbf16>
    %cst = arith.constant dense<0.000000e+00> : vector<8x32xf32>
    %8 = tpu.matmul %5, %7, %cst {dimension_numbers = #tpu.dot_dimension_numbers<[1], [0], [0], [1], [0, 0, 1, 1], [], []>} : vector<8x16xbf16>, vector<16x32xbf16>, vector<8x32xf32> -> vector<8x32xf32>
    %9 = arith.addf %3, %8 : vector<8x32xf32>
    %c0_9 = arith.constant 0 : index
    %c0_10 = arith.constant 0 : index
    %10 = vector.load %arg10[%c0_9, %c0_10] : memref<8x32xf32, #tpu.memory_space<vmem>>, vector<8x32xf32>
    tpu.vector_store %arg10[%c0_9, %c0_10], %9 {strides = array<i32>} : memref<8x32xf32, #tpu.memory_space<vmem>>, vector<8x32xf32>,
    %c1_i32 = arith.constant 1 : i32
    %11 = arith.cmpi eq, %arg2, %c1_i32 : i32
    %12 = arith.extui %11 : i1 to i32
    %c0_i32_11 = arith.constant 0 : i32
    %13 = arith.cmpi ne, %12, %c0_i32_11 : i32
    scf.if %13 {
      %c0_12 = arith.constant 0 : index
      %c0_13 = arith.constant 0 : index
      %14 = vector.load %arg10[%c0_12, %c0_13] : memref<8x32xf32, #tpu.memory_space<vmem>>, vector<8x32xf32>
      %c0_14 = arith.constant 0 : index
      %c0_15 = arith.constant 0 : index
      %15 = vector.load %arg5[%c0_14, %c0_15] : memref<1x32xf32, #tpu.memory_space<vmem>>, vector<1x32xf32>
      %16 = vector.broadcast %15 : vector<1x32xf32> to vector<8x32xf32>
      %17 = arith.addf %14, %16 : vector<8x32xf32>
      %c0_16 = arith.constant 0 : index
      %c0_17 = arith.constant 0 : index
      %c0_18 = arith.constant 0 : index
      %18 = vector.load %arg6[%c0_16, %c0_17, %c0_18] : memref<1x8x32xf32, #tpu.memory_space<vmem>>, vector<1x8x32xf32>
      %19 = vector.shape_cast %18 : vector<1x8x32xf32> to vector<8x32xf32>
      %20 = arith.addf %17, %19 : vector<8x32xf32>
      %cst_19 = arith.constant dense<0.000000e+00> : vector<8xf32>
      %21 = vector.multi_reduction <add>, %20, %cst_19 [1] : vector<8x32xf32> to vector<8xf32>
      %22 = vector.shape_cast %21 : vector<8xf32> to vector<8x1xf32>
      %cst_20 = arith.constant 3.200000e+01 : f32
      %23 = vector.broadcast %cst_20 : f32 to vector<8x1xf32>
      %24 = arith.divf %22, %23 : vector<8x1xf32>
      %25 = vector.broadcast %24 : vector<8x1xf32> to vector<8x32xf32>
      %26 = arith.subf %20, %25 : vector<8x32xf32>
      %27 = arith.mulf %26, %26 : vector<8x32xf32>
      %cst_21 = arith.constant dense<0.000000e+00> : vector<8xf32>
      %28 = vector.multi_reduction <add>, %27, %cst_21 [1] : vector<8x32xf32> to vector<8xf32>
      %29 = vector.shape_cast %28 : vector<8xf32> to vector<8x1xf32>
      %cst_22 = arith.constant 3.200000e+01 : f32
      %30 = vector.broadcast %cst_22 : f32 to vector<8x1xf32>
      %31 = arith.divf %29, %30 : vector<8x1xf32>
      %32 = vector.broadcast %24 : vector<8x1xf32> to vector<8x32xf32>
      %33 = arith.subf %20, %32 : vector<8x32xf32>
      %cst_23 = arith.constant 9.99999974E-6 : f32
      %34 = vector.broadcast %cst_23 : f32 to vector<8x1xf32>
      %35 = arith.addf %31, %34 : vector<8x1xf32>
      %36 = math.rsqrt %35 : vector<8x1xf32>
      %37 = vector.broadcast %36 : vector<8x1xf32> to vector<8x32xf32>
      %38 = arith.mulf %33, %37 : vector<8x32xf32>
      %c0_24 = arith.constant 0 : index
      %c0_25 = arith.constant 0 : index
      %39 = vector.load %arg7[%c0_24, %c0_25] : memref<1x32xf32, #tpu.memory_space<vmem>>, vector<1x32xf32>
      %40 = vector.broadcast %39 : vector<1x32xf32> to vector<8x32xf32>
      %41 = arith.mulf %38, %40 : vector<8x32xf32>
      %c0_26 = arith.constant 0 : index
      %c0_27 = arith.constant 0 : index
      %42 = vector.load %arg8[%c0_26, %c0_27] : memref<1x32xf32, #tpu.memory_space<vmem>>, vector<1x32xf32>
      %43 = vector.broadcast %42 : vector<1x32xf32> to vector<8x32xf32>
      %44 = arith.addf %41, %43 : vector<8x32xf32>
      %c0_28 = arith.constant 0 : index
      %c0_29 = arith.constant 0 : index
      %c0_30 = arith.constant 0 : index
      %45 = vector.load %arg9[%c0_28, %c0_29, %c0_30] : memref<1x8x32xf32, #tpu.memory_space<vmem>>, vector<1x8x32xf32>
      %46 = vector.shape_cast %45 : vector<1x8x32xf32> to vector<8x32xf32>
      %47 = vector.shape_cast %44 : vector<8x32xf32> to vector<1x8x32xf32>
      tpu.vector_store %arg9[%c0_28, %c0_29, %c0_30], %47 {strides = array<i32>} : memref<1x8x32xf32, #tpu.memory_space<vmem>>, vector<1x8x32xf32>,
    } else {
    }
    return
  }
  func.func @transform_0(%arg0: i32, %arg1: i32, %arg2: i32) -> (i32, i32, i32, i32) {
    %c0_i32 = arith.constant 0 : i32
    %c0_i32_0 = arith.constant 0 : i32
    return %arg0, %arg2, %arg1, %c0_i32 : i32, i32, i32, i32
  }
  func.func @transform_1(%arg0: i32, %arg1: i32, %arg2: i32) -> (i32, i32, i32) {
    %c0_i32 = arith.constant 0 : i32
    %c0_i32_0 = arith.constant 0 : i32
    %c0_i32_1 = arith.constant 0 : i32
    return %arg2, %c0_i32, %c0_i32_0 : i32, i32, i32
  }
  func.func @transform_2(%arg0: i32, %arg1: i32, %arg2: i32) -> (i32, i32) {
    %c0_i32 = arith.constant 0 : i32
    %c0_i32_0 = arith.constant 0 : i32
    %c0_i32_1 = arith.constant 0 : i32
    return %c0_i32, %c0_i32_0 : i32, i32
  }
  func.func @transform_3(%arg0: i32, %arg1: i32, %arg2: i32) -> (i32, i32, i32) {
    %c0_i32 = arith.constant 0 : i32
    %c0_i32_0 = arith.constant 0 : i32
    return %arg0, %arg1, %c0_i32 : i32, i32, i32
  }
  func.func @transform_4(%arg0: i32, %arg1: i32, %arg2: i32) -> (i32, i32) {
    %c0_i32 = arith.constant 0 : i32
    %c0_i32_0 = arith.constant 0 : i32
    %c0_i32_1 = arith.constant 0 : i32
    return %c0_i32, %c0_i32_0 : i32, i32
  }
  func.func @transform_5(%arg0: i32, %arg1: i32, %arg2: i32) -> (i32, i32) {
    %c0_i32 = arith.constant 0 : i32
    %c0_i32_0 = arith.constant 0 : i32
    %c0_i32_1 = arith.constant 0 : i32
    return %c0_i32, %c0_i32_0 : i32, i32
  }
  func.func @transform_6(%arg0: i32, %arg1: i32, %arg2: i32) -> (i32, i32, i32) {
    %c0_i32 = arith.constant 0 : i32
    %c0_i32_0 = arith.constant 0 : i32
    return %arg0, %arg1, %c0_i32 : i32, i32, i32
  }
}

module attributes {stable_mosaic.version = 11 : i64} {
  func.func @_linear_kernel(%arg0: i32, %arg1: i32, %arg2: i32, %arg3: memref<16x32xf32, #tpu.memory_space<vmem>>, %arg4: memref<32x64xbf16, #tpu.memory_space<vmem>>, %arg5: memref<1x64xf32, #tpu.memory_space<vmem>>, %arg6: memref<16x64xbf16, #tpu.memory_space<vmem>>, %arg7: memref<16x64xf32, #tpu.memory_space<vmem>>) attributes {dimension_semantics = [#tpu.dimension_semantics<parallel>, #tpu.dimension_semantics<parallel>, #tpu.dimension_semantics<arbitrary>], iteration_bounds = array<i64: 1, 1, 1>, scalar_prefetch = 0 : i64, scratch_operands = 1 : i64, tpu.core_type = #tpu.core_type<tc>, window_params = [{transform_indices = @transform_0, window_bounds = array<i64: 16, 32>}, {transform_indices = @transform_1, window_bounds = array<i64: 32, 64>}, {transform_indices = @transform_2, window_bounds = array<i64: 1, 64>}, {transform_indices = @transform_3, window_bounds = array<i64: 16, 64>}]} {
    %c0_i32 = arith.constant 0 : i32
    %0 = arith.cmpi eq, %arg2, %c0_i32 : i32
    %1 = arith.extui %0 : i1 to i32
    %c0_i32_0 = arith.constant 0 : i32
    %2 = arith.cmpi ne, %1, %c0_i32_0 : i32
    scf.if %2 {
      %cst_10 = arith.constant 0.000000e+00 : f32
      %13 = vector.broadcast %cst_10 : f32 to vector<16x64xf32>
      %c0_11 = arith.constant 0 : index
      %c0_12 = arith.constant 0 : index
      %14 = vector.load %arg7[%c0_11, %c0_12] : memref<16x64xf32, #tpu.memory_space<vmem>>, vector<16x64xf32>
      tpu.vector_store %arg7[%c0_11, %c0_12], %13 {strides = array<i32>} : memref<16x64xf32, #tpu.memory_space<vmem>>, vector<16x64xf32>,
    } else {
    }
    %c0 = arith.constant 0 : index
    %c0_1 = arith.constant 0 : index
    %3 = vector.load %arg7[%c0, %c0_1] : memref<16x64xf32, #tpu.memory_space<vmem>>, vector<16x64xf32>
    %c0_2 = arith.constant 0 : index
    %c0_3 = arith.constant 0 : index
    %4 = vector.load %arg3[%c0_2, %c0_3] : memref<16x32xf32, #tpu.memory_space<vmem>>, vector<16x32xf32>
    %5 = arith.truncf %4 : vector<16x32xf32> to vector<16x32xbf16>
    %c0_4 = arith.constant 0 : index
    %c0_5 = arith.constant 0 : index
    %6 = vector.load %arg4[%c0_4, %c0_5] : memref<32x64xbf16, #tpu.memory_space<vmem>>, vector<32x64xbf16>
    %cst = arith.constant dense<0.000000e+00> : vector<16x64xf32>
    %7 = tpu.matmul %5, %6, %cst {dimension_numbers = #tpu.dot_dimension_numbers<[1], [0], [0], [1], [0, 0, 1, 1], [], []>} : vector<16x32xbf16>, vector<32x64xbf16>, vector<16x64xf32> -> vector<16x64xf32>
    %8 = arith.addf %3, %7 : vector<16x64xf32>
    %c0_6 = arith.constant 0 : index
    %c0_7 = arith.constant 0 : index
    %9 = vector.load %arg7[%c0_6, %c0_7] : memref<16x64xf32, #tpu.memory_space<vmem>>, vector<16x64xf32>
    tpu.vector_store %arg7[%c0_6, %c0_7], %8 {strides = array<i32>} : memref<16x64xf32, #tpu.memory_space<vmem>>, vector<16x64xf32>,
    %c0_i32_8 = arith.constant 0 : i32
    %10 = arith.cmpi eq, %arg2, %c0_i32_8 : i32
    %11 = arith.extui %10 : i1 to i32
    %c0_i32_9 = arith.constant 0 : i32
    %12 = arith.cmpi ne, %11, %c0_i32_9 : i32
    scf.if %12 {
      %c0_10 = arith.constant 0 : index
      %c0_11 = arith.constant 0 : index
      %13 = vector.load %arg7[%c0_10, %c0_11] : memref<16x64xf32, #tpu.memory_space<vmem>>, vector<16x64xf32>
      %c0_12 = arith.constant 0 : index
      %c0_13 = arith.constant 0 : index
      %14 = vector.load %arg5[%c0_12, %c0_13] : memref<1x64xf32, #tpu.memory_space<vmem>>, vector<1x64xf32>
      %15 = vector.broadcast %14 : vector<1x64xf32> to vector<16x64xf32>
      %16 = arith.addf %13, %15 : vector<16x64xf32>
      %cst_14 = arith.constant 0.000000e+00 : f32
      %17 = vector.broadcast %cst_14 : f32 to vector<16x64xf32>
      %18 = arith.maximumf %16, %17 : vector<16x64xf32>
      %19 = arith.truncf %18 : vector<16x64xf32> to vector<16x64xbf16>
      %c0_15 = arith.constant 0 : index
      %c0_16 = arith.constant 0 : index
      %20 = vector.load %arg6[%c0_15, %c0_16] : memref<16x64xbf16, #tpu.memory_space<vmem>>, vector<16x64xbf16>
      tpu.vector_store %arg6[%c0_15, %c0_16], %19 {strides = array<i32>} : memref<16x64xbf16, #tpu.memory_space<vmem>>, vector<16x64xbf16>,
    } else {
    }
    return
  }
  func.func @transform_0(%arg0: i32, %arg1: i32, %arg2: i32) -> (i32, i32) {
    %c0_i32 = arith.constant 0 : i32
    return %arg0, %arg2 : i32, i32
  }
  func.func @transform_1(%arg0: i32, %arg1: i32, %arg2: i32) -> (i32, i32) {
    %c0_i32 = arith.constant 0 : i32
    return %arg2, %arg1 : i32, i32
  }
  func.func @transform_2(%arg0: i32, %arg1: i32, %arg2: i32) -> (i32, i32) {
    %c0_i32 = arith.constant 0 : i32
    %c0_i32_0 = arith.constant 0 : i32
    return %c0_i32, %arg1 : i32, i32
  }
  func.func @transform_3(%arg0: i32, %arg1: i32, %arg2: i32) -> (i32, i32) {
    %c0_i32 = arith.constant 0 : i32
    return %arg0, %arg1 : i32, i32
  }
}

module attributes {stable_mosaic.version = 11 : i64} {
  func.func @_linear_add_ln_kernel(%arg0: i32, %arg1: i32, %arg2: memref<16x64xbf16, #tpu.memory_space<vmem>>, %arg3: memref<64x32xbf16, #tpu.memory_space<vmem>>, %arg4: memref<1x32xf32, #tpu.memory_space<vmem>>, %arg5: memref<16x32xf32, #tpu.memory_space<vmem>>, %arg6: memref<1x32xf32, #tpu.memory_space<vmem>>, %arg7: memref<1x32xf32, #tpu.memory_space<vmem>>, %arg8: memref<16x32xf32, #tpu.memory_space<vmem>>, %arg9: memref<16x32xf32, #tpu.memory_space<vmem>>) attributes {dimension_semantics = [#tpu.dimension_semantics<parallel>, #tpu.dimension_semantics<arbitrary>], iteration_bounds = array<i64: 1, 1>, scalar_prefetch = 0 : i64, scratch_operands = 1 : i64, tpu.core_type = #tpu.core_type<tc>, window_params = [{transform_indices = @transform_0, window_bounds = array<i64: 16, 64>}, {transform_indices = @transform_1, window_bounds = array<i64: 64, 32>}, {pipeline_mode = #tpu.pipeline_mode<synchronous>, transform_indices = @transform_2, window_bounds = array<i64: 1, 32>}, {transform_indices = @transform_3, window_bounds = array<i64: 16, 32>}, {pipeline_mode = #tpu.pipeline_mode<synchronous>, transform_indices = @transform_4, window_bounds = array<i64: 1, 32>}, {pipeline_mode = #tpu.pipeline_mode<synchronous>, transform_indices = @transform_5, window_bounds = array<i64: 1, 32>}, {transform_indices = @transform_6, window_bounds = array<i64: 16, 32>}]} {
    %c0_i32 = arith.constant 0 : i32
    %0 = arith.cmpi eq, %arg1, %c0_i32 : i32
    %1 = arith.extui %0 : i1 to i32
    %c0_i32_0 = arith.constant 0 : i32
    %2 = arith.cmpi ne, %1, %c0_i32_0 : i32
    scf.if %2 {
      %cst_10 = arith.constant 0.000000e+00 : f32
      %12 = vector.broadcast %cst_10 : f32 to vector<16x32xf32>
      %c0_11 = arith.constant 0 : index
      %c0_12 = arith.constant 0 : index
      %13 = vector.load %arg9[%c0_11, %c0_12] : memref<16x32xf32, #tpu.memory_space<vmem>>, vector<16x32xf32>
      tpu.vector_store %arg9[%c0_11, %c0_12], %12 {strides = array<i32>} : memref<16x32xf32, #tpu.memory_space<vmem>>, vector<16x32xf32>,
    } else {
    }
    %c0 = arith.constant 0 : index
    %c0_1 = arith.constant 0 : index
    %3 = vector.load %arg9[%c0, %c0_1] : memref<16x32xf32, #tpu.memory_space<vmem>>, vector<16x32xf32>
    %c0_2 = arith.constant 0 : index
    %c0_3 = arith.constant 0 : index
    %4 = vector.load %arg2[%c0_2, %c0_3] : memref<16x64xbf16, #tpu.memory_space<vmem>>, vector<16x64xbf16>
    %c0_4 = arith.constant 0 : index
    %c0_5 = arith.constant 0 : index
    %5 = vector.load %arg3[%c0_4, %c0_5] : memref<64x32xbf16, #tpu.memory_space<vmem>>, vector<64x32xbf16>
    %cst = arith.constant dense<0.000000e+00> : vector<16x32xf32>
    %6 = tpu.matmul %4, %5, %cst {dimension_numbers = #tpu.dot_dimension_numbers<[1], [0], [0], [1], [0, 0, 1, 1], [], []>} : vector<16x64xbf16>, vector<64x32xbf16>, vector<16x32xf32> -> vector<16x32xf32>
    %7 = arith.addf %3, %6 : vector<16x32xf32>
    %c0_6 = arith.constant 0 : index
    %c0_7 = arith.constant 0 : index
    %8 = vector.load %arg9[%c0_6, %c0_7] : memref<16x32xf32, #tpu.memory_space<vmem>>, vector<16x32xf32>
    tpu.vector_store %arg9[%c0_6, %c0_7], %7 {strides = array<i32>} : memref<16x32xf32, #tpu.memory_space<vmem>>, vector<16x32xf32>,
    %c0_i32_8 = arith.constant 0 : i32
    %9 = arith.cmpi eq, %arg1, %c0_i32_8 : i32
    %10 = arith.extui %9 : i1 to i32
    %c0_i32_9 = arith.constant 0 : i32
    %11 = arith.cmpi ne, %10, %c0_i32_9 : i32
    scf.if %11 {
      %c0_10 = arith.constant 0 : index
      %c0_11 = arith.constant 0 : index
      %12 = vector.load %arg9[%c0_10, %c0_11] : memref<16x32xf32, #tpu.memory_space<vmem>>, vector<16x32xf32>
      %c0_12 = arith.constant 0 : index
      %c0_13 = arith.constant 0 : index
      %13 = vector.load %arg4[%c0_12, %c0_13] : memref<1x32xf32, #tpu.memory_space<vmem>>, vector<1x32xf32>
      %14 = vector.broadcast %13 : vector<1x32xf32> to vector<16x32xf32>
      %15 = arith.addf %12, %14 : vector<16x32xf32>
      %c0_14 = arith.constant 0 : index
      %c0_15 = arith.constant 0 : index
      %16 = vector.load %arg5[%c0_14, %c0_15] : memref<16x32xf32, #tpu.memory_space<vmem>>, vector<16x32xf32>
      %17 = arith.addf %15, %16 : vector<16x32xf32>
      %cst_16 = arith.constant dense<0.000000e+00> : vector<16xf32>
      %18 = vector.multi_reduction <add>, %17, %cst_16 [1] : vector<16x32xf32> to vector<16xf32>
      %19 = vector.shape_cast %18 : vector<16xf32> to vector<16x1xf32>
      %cst_17 = arith.constant 3.200000e+01 : f32
      %20 = vector.broadcast %cst_17 : f32 to vector<16x1xf32>
      %21 = arith.divf %19, %20 : vector<16x1xf32>
      %22 = vector.broadcast %21 : vector<16x1xf32> to vector<16x32xf32>
      %23 = arith.subf %17, %22 : vector<16x32xf32>
      %24 = arith.mulf %23, %23 : vector<16x32xf32>
      %cst_18 = arith.constant dense<0.000000e+00> : vector<16xf32>
      %25 = vector.multi_reduction <add>, %24, %cst_18 [1] : vector<16x32xf32> to vector<16xf32>
      %26 = vector.shape_cast %25 : vector<16xf32> to vector<16x1xf32>
      %cst_19 = arith.constant 3.200000e+01 : f32
      %27 = vector.broadcast %cst_19 : f32 to vector<16x1xf32>
      %28 = arith.divf %26, %27 : vector<16x1xf32>
      %29 = vector.broadcast %21 : vector<16x1xf32> to vector<16x32xf32>
      %30 = arith.subf %17, %29 : vector<16x32xf32>
      %cst_20 = arith.constant 9.99999974E-6 : f32
      %31 = vector.broadcast %cst_20 : f32 to vector<16x1xf32>
      %32 = arith.addf %28, %31 : vector<16x1xf32>
      %33 = math.rsqrt %32 : vector<16x1xf32>
      %34 = vector.broadcast %33 : vector<16x1xf32> to vector<16x32xf32>
      %35 = arith.mulf %30, %34 : vector<16x32xf32>
      %c0_21 = arith.constant 0 : index
      %c0_22 = arith.constant 0 : index
      %36 = vector.load %arg6[%c0_21, %c0_22] : memref<1x32xf32, #tpu.memory_space<vmem>>, vector<1x32xf32>
      %37 = vector.broadcast %36 : vector<1x32xf32> to vector<16x32xf32>
      %38 = arith.mulf %35, %37 : vector<16x32xf32>
      %c0_23 = arith.constant 0 : index
      %c0_24 = arith.constant 0 : index
      %39 = vector.load %arg7[%c0_23, %c0_24] : memref<1x32xf32, #tpu.memory_space<vmem>>, vector<1x32xf32>
      %40 = vector.broadcast %39 : vector<1x32xf32> to vector<16x32xf32>
      %41 = arith.addf %38, %40 : vector<16x32xf32>
      %c0_25 = arith.constant 0 : index
      %c0_26 = arith.constant 0 : index
      %42 = vector.load %arg8[%c0_25, %c0_26] : memref<16x32xf32, #tpu.memory_space<vmem>>, vector<16x32xf32>
      tpu.vector_store %arg8[%c0_25, %c0_26], %41 {strides = array<i32>} : memref<16x32xf32, #tpu.memory_space<vmem>>, vector<16x32xf32>,
    } else {
    }
    return
  }
  func.func @transform_0(%arg0: i32, %arg1: i32) -> (i32, i32) {
    %c0_i32 = arith.constant 0 : i32
    return %arg0, %arg1 : i32, i32
  }
  func.func @transform_1(%arg0: i32, %arg1: i32) -> (i32, i32) {
    %c0_i32 = arith.constant 0 : i32
    %c0_i32_0 = arith.constant 0 : i32
    return %arg1, %c0_i32 : i32, i32
  }
  func.func @transform_2(%arg0: i32, %arg1: i32) -> (i32, i32) {
    %c0_i32 = arith.constant 0 : i32
    %c0_i32_0 = arith.constant 0 : i32
    %c0_i32_1 = arith.constant 0 : i32
    return %c0_i32, %c0_i32_0 : i32, i32
  }
  func.func @transform_3(%arg0: i32, %arg1: i32) -> (i32, i32) {
    %c0_i32 = arith.constant 0 : i32
    %c0_i32_0 = arith.constant 0 : i32
    return %arg0, %c0_i32 : i32, i32
  }
  func.func @transform_4(%arg0: i32, %arg1: i32) -> (i32, i32) {
    %c0_i32 = arith.constant 0 : i32
    %c0_i32_0 = arith.constant 0 : i32
    %c0_i32_1 = arith.constant 0 : i32
    return %c0_i32, %c0_i32_0 : i32, i32
  }
  func.func @transform_5(%arg0: i32, %arg1: i32) -> (i32, i32) {
    %c0_i32 = arith.constant 0 : i32
    %c0_i32_0 = arith.constant 0 : i32
    %c0_i32_1 = arith.constant 0 : i32
    return %c0_i32, %c0_i32_0 : i32, i32
  }
  func.func @transform_6(%arg0: i32, %arg1: i32) -> (i32, i32) {
    %c0_i32 = arith.constant 0 : i32
    %c0_i32_0 = arith.constant 0 : i32
    return %arg0, %c0_i32 : i32, i32
  }
}

module attributes {stable_mosaic.version = 11 : i64} {
  func.func @_decoder_kernel(%arg0: i32, %arg1: i32, %arg2: i32, %arg3: i32, %arg4: memref<1x8x32xf32, #tpu.memory_space<vmem>>, %arg5: memref<32x512xbf16, #tpu.memory_space<vmem>>, %arg6: memref<1x512xf32, #tpu.memory_space<vmem>>, %arg7: memref<8x512xf32, #tpu.memory_space<vmem>>, %arg8: memref<8x512xf32, #tpu.memory_space<vmem>>) attributes {dimension_semantics = [#tpu.dimension_semantics<parallel>, #tpu.dimension_semantics<parallel>, #tpu.dimension_semantics<parallel>, #tpu.dimension_semantics<arbitrary>], iteration_bounds = array<i64: 1, 2, 1, 1>, scalar_prefetch = 0 : i64, scratch_operands = 1 : i64, tpu.core_type = #tpu.core_type<tc>, window_params = [{transform_indices = @transform_0, window_bounds = array<i64: 1, 8, 32>}, {transform_indices = @transform_1, window_bounds = array<i64: 32, 512>}, {transform_indices = @transform_2, window_bounds = array<i64: 1, 512>}, {transform_indices = @transform_3, window_bounds = array<i64: 8, 512>}]} {
    %c0_i32 = arith.constant 0 : i32
    %0 = arith.cmpi eq, %arg3, %c0_i32 : i32
    %1 = arith.extui %0 : i1 to i32
    %c0_i32_0 = arith.constant 0 : i32
    %2 = arith.cmpi ne, %1, %c0_i32_0 : i32
    scf.if %2 {
      %cst_11 = arith.constant 0.000000e+00 : f32
      %14 = vector.broadcast %cst_11 : f32 to vector<8x512xf32>
      %c0_12 = arith.constant 0 : index
      %c0_13 = arith.constant 0 : index
      %15 = vector.load %arg8[%c0_12, %c0_13] : memref<8x512xf32, #tpu.memory_space<vmem>>, vector<8x512xf32>
      tpu.vector_store %arg8[%c0_12, %c0_13], %14 {strides = array<i32>} : memref<8x512xf32, #tpu.memory_space<vmem>>, vector<8x512xf32>,
    } else {
    }
    %c0 = arith.constant 0 : index
    %c0_1 = arith.constant 0 : index
    %3 = vector.load %arg8[%c0, %c0_1] : memref<8x512xf32, #tpu.memory_space<vmem>>, vector<8x512xf32>
    %c0_2 = arith.constant 0 : index
    %c0_3 = arith.constant 0 : index
    %c0_4 = arith.constant 0 : index
    %4 = vector.load %arg4[%c0_2, %c0_3, %c0_4] : memref<1x8x32xf32, #tpu.memory_space<vmem>>, vector<1x8x32xf32>
    %5 = vector.shape_cast %4 : vector<1x8x32xf32> to vector<8x32xf32>
    %6 = arith.truncf %5 : vector<8x32xf32> to vector<8x32xbf16>
    %c0_5 = arith.constant 0 : index
    %c0_6 = arith.constant 0 : index
    %7 = vector.load %arg5[%c0_5, %c0_6] : memref<32x512xbf16, #tpu.memory_space<vmem>>, vector<32x512xbf16>
    %cst = arith.constant dense<0.000000e+00> : vector<8x512xf32>
    %8 = tpu.matmul %6, %7, %cst {dimension_numbers = #tpu.dot_dimension_numbers<[1], [0], [0], [1], [0, 0, 1, 1], [], []>} : vector<8x32xbf16>, vector<32x512xbf16>, vector<8x512xf32> -> vector<8x512xf32>
    %9 = arith.addf %3, %8 : vector<8x512xf32>
    %c0_7 = arith.constant 0 : index
    %c0_8 = arith.constant 0 : index
    %10 = vector.load %arg8[%c0_7, %c0_8] : memref<8x512xf32, #tpu.memory_space<vmem>>, vector<8x512xf32>
    tpu.vector_store %arg8[%c0_7, %c0_8], %9 {strides = array<i32>} : memref<8x512xf32, #tpu.memory_space<vmem>>, vector<8x512xf32>,
    %c0_i32_9 = arith.constant 0 : i32
    %11 = arith.cmpi eq, %arg3, %c0_i32_9 : i32
    %12 = arith.extui %11 : i1 to i32
    %c0_i32_10 = arith.constant 0 : i32
    %13 = arith.cmpi ne, %12, %c0_i32_10 : i32
    scf.if %13 {
      %c0_11 = arith.constant 0 : index
      %c0_12 = arith.constant 0 : index
      %14 = vector.load %arg8[%c0_11, %c0_12] : memref<8x512xf32, #tpu.memory_space<vmem>>, vector<8x512xf32>
      %c0_13 = arith.constant 0 : index
      %c0_14 = arith.constant 0 : index
      %15 = vector.load %arg6[%c0_13, %c0_14] : memref<1x512xf32, #tpu.memory_space<vmem>>, vector<1x512xf32>
      %16 = vector.broadcast %15 : vector<1x512xf32> to vector<8x512xf32>
      %17 = arith.addf %14, %16 : vector<8x512xf32>
      %c0_15 = arith.constant 0 : index
      %c0_16 = arith.constant 0 : index
      %18 = vector.load %arg7[%c0_15, %c0_16] : memref<8x512xf32, #tpu.memory_space<vmem>>, vector<8x512xf32>
      tpu.vector_store %arg7[%c0_15, %c0_16], %17 {strides = array<i32>} : memref<8x512xf32, #tpu.memory_space<vmem>>, vector<8x512xf32>,
    } else {
    }
    return
  }
  func.func @transform_0(%arg0: i32, %arg1: i32, %arg2: i32, %arg3: i32) -> (i32, i32, i32) {
    %c0_i32 = arith.constant 0 : i32
    return %arg1, %arg0, %arg3 : i32, i32, i32
  }
  func.func @transform_1(%arg0: i32, %arg1: i32, %arg2: i32, %arg3: i32) -> (i32, i32) {
    %c0_i32 = arith.constant 0 : i32
    return %arg3, %arg2 : i32, i32
  }
  func.func @transform_2(%arg0: i32, %arg1: i32, %arg2: i32, %arg3: i32) -> (i32, i32) {
    %c0_i32 = arith.constant 0 : i32
    %c0_i32_0 = arith.constant 0 : i32
    return %c0_i32, %arg2 : i32, i32
  }
  func.func @transform_3(%arg0: i32, %arg1: i32, %arg2: i32, %arg3: i32) -> (i32, i32) {
    %c1_i32 = arith.constant 1 : i32
    %0 = arith.muli %arg1, %c1_i32 : i32
    %1 = arith.addi %0, %arg2 : i32
    %c0_i32 = arith.constant 0 : i32
    return %arg0, %1 : i32, i32
  }
}

</mosaic_0001>

<llo_original>
// kernel: transformer_forward.12
$region0: #{transformer_forward.12}
  #allocation0 [shape = 'u32[]', space=smem, size = 0x4, offset = 0x4, fixed_abs, tag = 'smem constant byte address 0x4 - core index']
  #allocation1 [shape = 'u32[144,128]{1,0:T(1,128)}', space=vmem, size = 0x12000, scoped, tag = 'internal scratch']
  %s0 = inlined_call_operand.vmem [shape: f32[2,8,32], index: 0, kind: input, shape index: {}]
  %s1 = inlined_call_operand.vmem [shape: f32[8,32], index: 1, kind: input, shape index: {}]
  %s2 = inlined_call_operand.vmem [shape: f32[2,8,32], index: 2, kind: output, shape index: {}]
  %s3 = sld [smem:[#allocation0]]
  $region41: #{transformer_forward.12} parent=0
    _
  %s5 = ssub.s32 1, %s3
  %s6 = scalar_select 0, %s5, %s3
  loop: start=0, step=1, limit=4
  $region2: #{transformer_forward.12} parent=0 // loop_pre_header
    _
  $region3: #{transformer_forward.12} parent=0 // loop_header
    %s8 = sphi 0, %s12
    %p9 = scmp.ge.s32.totalorder %s8, 4
    %s15 = sphi 0, %s27
    %s16 = sphi 0, %s23
    %s17 = sphi 0, %s15
    %s18 = sphi 0, %s16
    %s19 = sphi 0, %s17
    %s20 = sphi 0, %s18
    %s32 = sphi 0, %s34
    %s35 = sphi 0, %s32
    %s36 = sphi 0, %s35
    %s52 = sphi 0, %s36
    %s58 = sphi 0, %s60
    %s61 = sphi 0, %s58
    %s62 = sphi 0, %s61
    %s78 = sphi 0, %s62
    %s86 = sphi 0, %s88
    %s89 = sphi 0, %s86
    %s90 = sphi 0, %s89
    %s106 = sphi 0, %s90
  $region4: #{transformer_forward.12} parent=0 // loop_header_branch
    %11 = sbr.rel (%p9) target = $region8
  $region5: #{transformer_forward.12} parent=0 // loop_body
    %s13 = ssub.s32 %s8, 1
    %s14 = ssub.s32 %s8, 2
    %s21 = sadd.s32 1, %s16
    %p22 = scmp.ge.s32.totalorder %s21, 1
    %s23 = scalar_select %p22, 0, %s21
    %s24 = sadd.s32 1, %s15
    %s25 = scalar_select %p22, %s24, %s15
    %p26 = scmp.ge.s32.totalorder %s25, 2
    %s27 = scalar_select %p26, 0, %s25
    %s28 = ssub.s32 %s15, %s27
    %s29 = ssub.s32 %s16, %s23
    %s30 = sor.u32 %s28, %s29
    %p31 = scmp.eq.s32.totalorder %s30, 0
    %s33 = sadd.s32 %s32, 1
    %s34 = scalar_select %p31, %s32, %s33
    %p37 = pneg %p31
    %p38 = scmp.eq.s32.totalorder %s8, 1
    %p39 = por %p37, %p38
    %p40 = scmp.ne.s32.totalorder %s32, %s35
    %p41 = scmp.eq.s32.totalorder %s8, 0
    %p42 = por %p40, %p41
    %p43 = scmp.ne.s32.totalorder %s32, %s35
    %p44 = scmp.eq.s32.totalorder %s13, 1
    %p45 = por %p43, %p44
    %p46 = scmp.ne.s32.totalorder %s35, %s36
    %p47 = scmp.eq.s32.totalorder %s13, 0
    %p48 = por %p46, %p47
    %p49 = scmp.ne.s32.totalorder %s35, %s36
    %p50 = scmp.eq.s32.totalorder %s14, 1
    %p51 = por %p49, %p50
    %p53 = scmp.ne.s32.totalorder %s36, %s52
    %p54 = scmp.eq.s32.totalorder %s14, 0
    %p55 = por %p53, %p54
    %s56 = ssub.s32 %s16, %s23
    %p57 = scmp.eq.s32.totalorder %s56, 0
    %s59 = sadd.s32 %s58, 1
    %s60 = scalar_select %p57, %s58, %s59
    %p63 = pneg %p57
    %p64 = scmp.eq.s32.totalorder %s8, 1
    %p65 = por %p63, %p64
    %p66 = scmp.ne.s32.totalorder %s58, %s61
    %p67 = scmp.eq.s32.totalorder %s8, 0
    %p68 = por %p66, %p67
    %p69 = scmp.ne.s32.totalorder %s58, %s61
    %p70 = scmp.eq.s32.totalorder %s13, 1
    %p71 = por %p69, %p70
    %p72 = scmp.ne.s32.totalorder %s61, %s62
    %p73 = scmp.eq.s32.totalorder %s13, 0
    %p74 = por %p72, %p73
    %p75 = scmp.ne.s32.totalorder %s61, %s62
    %p76 = scmp.eq.s32.totalorder %s14, 1
    %p77 = por %p75, %p76
    %p79 = scmp.ne.s32.totalorder %s62, %s78
    %p80 = scmp.eq.s32.totalorder %s14, 0
    %p81 = por %p79, %p80
    %s82 = ssub.s32 %s15, %s27
    %s83 = ssub.s32 %s16, %s23
    %s84 = sor.u32 %s82, %s83
    %p85 = scmp.eq.s32.totalorder %s84, 0
    %s87 = sadd.s32 %s86, 1
    %s88 = scalar_select %p85, %s86, %s87
    %p91 = pneg %p85
    %p92 = scmp.eq.s32.totalorder %s8, 1
    %p93 = por %p91, %p92
    %p94 = scmp.ne.s32.totalorder %s86, %s89
    %p95 = scmp.eq.s32.totalorder %s8, 0
    %p96 = por %p94, %p95
    %p97 = scmp.ne.s32.totalorder %s86, %s89
    %p98 = scmp.eq.s32.totalorder %s13, 1
    %p99 = por %p97, %p98
    %p100 = scmp.ne.s32.totalorder %s89, %s90
    %p101 = scmp.eq.s32.totalorder %s13, 0
    %p102 = por %p100, %p101
    %p103 = scmp.ne.s32.totalorder %s89, %s90
    %p104 = scmp.eq.s32.totalorder %s14, 1
    %p105 = por %p103, %p104
    %p107 = scmp.ne.s32.totalorder %s90, %s106
    %p108 = scmp.eq.s32.totalorder %s14, 0
    %p109 = por %p107, %p108
    %p110 = scmp.le.s32.totalorder 1, %s8
    %p111 = scmp.lt.s32.totalorder %s8, 3
    %p112 = pnand %p110, %p111
    %p113 = pneg %p112
    // Predicated region
    $region9: #{transformer_forward.12} parent=5 // pred_check
      _
    $region10: #{transformer_forward.12} parent=5 // pred_check_branch
      %115 = sbr.rel (%p112) target = $region12
    $region11: #{transformer_forward.12} parent=5 // pred_region
      %s116 = ssub.s32 %s8, 1
      // Predicated region
      $region13: #{transformer_forward.12} parent=11 // pred_check
        %p117 = pneg %p74
      $region14: #{transformer_forward.12} parent=11 // pred_check_branch
        %119 = sbr.rel (%p117) target = $region16
      $region15: #{transformer_forward.12} parent=11 // pred_region
        %p120 = scmp.lt.s32.totalorder %s18, 0
        %s121 = scalar_select %p120, %s18, 0
        %s122 = smul.addr %s121, 8
        %s123 = scalar_lea.vmem %s1, %s122
      $region16: #{transformer_forward.12} parent=11 // pred_fallthru
        _
    $region12: #{transformer_forward.12} parent=5 // pred_fallthru
      _
    %p124 = scmp.lt.s32.totalorder %s8, 2
    // Predicated region
    $region17: #{transformer_forward.12} parent=5 // pred_check
      %p125 = pneg %p124
    $region18: #{transformer_forward.12} parent=5 // pred_check_branch
      %127 = sbr.rel (%p125) target = $region20
    $region19: #{transformer_forward.12} parent=5 // pred_region
      // Predicated region
      $region21: #{transformer_forward.12} parent=19 // pred_check
        %p128 = pneg %p42
      $region22: #{transformer_forward.12} parent=19 // pred_check_branch
        %130 = sbr.rel (%p128) target = $region24
      $region23: #{transformer_forward.12} parent=19 // pred_region
        %p131 = scmp.lt.s32.totalorder %s15, 1
        %s132 = scalar_select %p131, %s15, 1
        %p133 = scmp.lt.s32.totalorder %s16, 0
        %s134 = scalar_select %p133, %s16, 0
        %s135 = sadd.s32 %s134, %s132
        %s136 = smul.addr %s135, 8
        %s137 = scalar_lea.vmem %s0, %s136
      $region24: #{transformer_forward.12} parent=19 // pred_fallthru
        _
    $region20: #{transformer_forward.12} parent=5 // pred_fallthru
      _
    %p138 = scmp.le.s32.totalorder 1, %s8
    %p139 = scmp.lt.s32.totalorder %s8, 3
    %p140 = pnand %p138, %p139
    %p141 = pneg %p140
    // Predicated region
    $region25: #{transformer_forward.12} parent=5 // pred_check
      _
    $region26: #{transformer_forward.12} parent=5 // pred_check_branch
      %143 = sbr.rel (%p140) target = $region28
    $region27: #{transformer_forward.12} parent=5 // pred_region
      %s144 = ssub.s32 %s8, 1
      %p145 = scmp.lt.s32.totalorder %s17, 1
      %s146 = scalar_select %p145, %s17, 1
      %p147 = scmp.lt.s32.totalorder %s18, 0
      %s148 = scalar_select %p147, %s18, 0
      %s149 = sadd.s32 %s148, %s146
      %s150 = smul.addr %s149, 8
      %s151 = scalar_lea.vmem %s0, %s150
      %p152 = pneg %p48
      %p153 = pneg %p45
      %p154 = scmp.lt.s32.totalorder %s18, 0
      %s155 = scalar_select %p154, %s18, 0
      %s156 = smul.addr %s155, 8
      %s157 = scalar_lea.vmem %s1, %s156
      %p158 = pneg %p74
      %p159 = pneg %p71
      %p160 = pneg %p102
      %p161 = pneg %p99
      %p162 = scmp.lt.s32.totalorder %s17, 1
      %s163 = scalar_select %p162, %s17, 1
      %p164 = scmp.lt.s32.totalorder %s18, 0
      %s165 = scalar_select %p164, %s18, 0
      %s166 = sadd.s32 %s165, %s163
      %s167 = smul.addr %s166, 8
      %s168 = scalar_lea.vmem %s2, %s167
      %p169 = scmp.lt.s32.totalorder %s17, 1
      %s170 = scalar_select %p169, %s17, 1
      %p171 = scmp.lt.s32.totalorder %s18, 0
      %s172 = scalar_select %p171, %s18, 0
      %s173 = sadd.s32 %s172, %s170
      %s174 = smul.addr %s173, 8
      %s175 = scalar_lea.vmem %s0, %s174
      %p176 = scmp.lt.s32.totalorder %s18, 0
      %s177 = scalar_select %p176, %s18, 0
      %s178 = smul.addr %s177, 8
      %s179 = scalar_lea.vmem %s1, %s178
      %p180 = scmp.lt.s32.totalorder %s17, 1
      %s181 = scalar_select %p180, %s17, 1
      %p182 = scmp.lt.s32.totalorder %s18, 0
      %s183 = scalar_select %p182, %s18, 0
      %s184 = sadd.s32 %s183, %s181
      %s185 = smul.addr %s184, 8
      %s186 = scalar_lea.vmem %s2, %s185
      %v187 = vld [vmem:[%s175] sm:$0xff]
      %v188 = vmul.f32 %v187, 5.656854
      %v189 = vld [vmem:[%s179] sm:$0xff]
      %v190 = vadd.f32 %v188, %v189
      %vm191 = vcmask 261120
      %192 = vst.msk [vmem:[%s186] sm:$0xff] %vm191, %v190
      %p193 = scmp.lt.s32.totalorder %s17, 1
      %s194 = scalar_select %p193, %s17, 1
      %p195 = scmp.lt.s32.totalorder %s18, 0
      %s196 = scalar_select %p195, %s18, 0
      %s197 = sadd.s32 %s196, %s194
      %s198 = smul.addr %s197, 8
      %s199 = scalar_lea.vmem %s2, %s198
      // Predicated region
      $region29: #{transformer_forward.12} parent=27 // pred_check
        %p200 = pneg %p99
      $region30: #{transformer_forward.12} parent=27 // pred_check_branch
        %202 = sbr.rel (%p200) target = $region32
      $region31: #{transformer_forward.12} parent=27 // pred_region
        _
      $region32: #{transformer_forward.12} parent=27 // pred_fallthru
        _
    $region28: #{transformer_forward.12} parent=5 // pred_fallthru
      _
    %p203 = scmp.le.s32.totalorder 2, %s8
    // Predicated region
    $region33: #{transformer_forward.12} parent=5 // pred_check
      %p204 = pneg %p203
    $region34: #{transformer_forward.12} parent=5 // pred_check_branch
      %206 = sbr.rel (%p204) target = $region36
    $region35: #{transformer_forward.12} parent=5 // pred_region
      %s207 = ssub.s32 %s8, 2
      // Predicated region
      $region37: #{transformer_forward.12} parent=35 // pred_check
        %p208 = pneg %p105
      $region38: #{transformer_forward.12} parent=35 // pred_check_branch
        %210 = sbr.rel (%p208) target = $region40
      $region39: #{transformer_forward.12} parent=35 // pred_region
        %p211 = scmp.lt.s32.totalorder %s19, 1
        %s212 = scalar_select %p211, %s19, 1
        %p213 = scmp.lt.s32.totalorder %s20, 0
        %s214 = scalar_select %p213, %s20, 0
        %s215 = sadd.s32 %s214, %s212
        %s216 = smul.addr %s215, 8
        %s217 = scalar_lea.vmem %s2, %s216
      $region40: #{transformer_forward.12} parent=35 // pred_fallthru
        _
    $region36: #{transformer_forward.12} parent=5 // pred_fallthru
      _
  $region6: #{transformer_forward.12} parent=0 // loop_footer
    %s12 = sadd.s32 1, %s8
  $region7: #{transformer_forward.12} parent=0 // loop_footer_branch
    %7 = sbr.rel target = $region3
  $region8: #{transformer_forward.12} parent=0 // loop_exit
    _

// kernel: transformer_forward.15
$region0: #{transformer_forward.15}
  #allocation0 [shape = 'u32[]', space=smem, size = 0x4, offset = 0x4, fixed_abs, tag = 'smem constant byte address 0x4 - core index']
  #allocation1 [shape = 'u32[144,128]{1,0:T(1,128)}', space=vmem, size = 0x12000, scoped, tag = 'internal scratch']
  #allocation2 [shape = 'f32[8,32]{1,0:T(8,128)}', space=vmem, size = 0x1000, scoped, tag = 'scratch operand']
  %s0 = inlined_call_operand.vmem [shape: bf16[2,2,8,16], index: 0, kind: input, shape index: {}]
  %s1 = inlined_call_operand.vmem [shape: bf16[2,16,32], index: 1, kind: input, shape index: {}]
  %s2 = inlined_call_operand.vmem [shape: f32[1,32], index: 2, kind: input, shape index: {}]
  %s3 = inlined_call_operand.vmem [shape: f32[2,8,32], index: 3, kind: input, shape index: {}]
  %s4 = inlined_call_operand.vmem [shape: f32[1,32], index: 4, kind: input, shape index: {}]
  %s5 = inlined_call_operand.vmem [shape: f32[1,32], index: 5, kind: input, shape index: {}]
  %s6 = inlined_call_operand.vmem [shape: f32[2,8,32], index: 6, kind: output, shape index: {}]
  %s7 = sld [smem:[#allocation0]]
  $region65: #{transformer_forward.15} parent=0
    _
  %s9 = ssub.s32 1, %s7
  %s10 = scalar_select 0, %s9, %s7
  loop: start=0, step=1, limit=6
  $region2: #{transformer_forward.15} parent=0 // loop_pre_header
    _
  $region3: #{transformer_forward.15} parent=0 // loop_header
    %s12 = sphi 0, %s16
    %p13 = scmp.ge.s32.totalorder %s12, 6
    %s19 = sphi 0, %s38
    %s20 = sphi 0, %s34
    %s21 = sphi 0, %s30
    %s22 = sphi 0, %s19
    %s23 = sphi 0, %s20
    %s24 = sphi 0, %s21
    %s25 = sphi 0, %s22
    %s26 = sphi 0, %s23
    %s27 = sphi 0, %s24
    %s45 = sphi 0, %s47
    %s48 = sphi 0, %s45
    %s49 = sphi 0, %s48
    %s65 = sphi 0, %s49
    %s71 = sphi 0, %s73
    %s74 = sphi 0, %s71
    %s75 = sphi 0, %s74
    %s91 = sphi 0, %s75
    %s95 = sphi 0, %s95
    %s97 = sphi 0, %s95
    %s98 = sphi 0, %s97
    %s112 = sphi 0, %s98
    %s120 = sphi 0, %s122
    %s123 = sphi 0, %s120
    %s124 = sphi 0, %s123
    %s140 = sphi 0, %s124
    %s144 = sphi 0, %s144
    %s146 = sphi 0, %s144
    %s147 = sphi 0, %s146
    %s161 = sphi 0, %s147
    %s165 = sphi 0, %s165
    %s167 = sphi 0, %s165
    %s168 = sphi 0, %s167
    %s182 = sphi 0, %s168
    %s190 = sphi 0, %s192
    %s193 = sphi 0, %s190
    %s194 = sphi 0, %s193
    %s210 = sphi 0, %s194
  $region4: #{transformer_forward.15} parent=0 // loop_header_branch
    %15 = sbr.rel (%p13) target = $region8
  $region5: #{transformer_forward.15} parent=0 // loop_body
    %s17 = ssub.s32 %s12, 1
    %s18 = ssub.s32 %s12, 2
    %s28 = sadd.s32 1, %s21
    %p29 = scmp.ge.s32.totalorder %s28, 2
    %s30 = scalar_select %p29, 0, %s28
    %s31 = sadd.s32 1, %s20
    %s32 = scalar_select %p29, %s31, %s20
    %p33 = scmp.ge.s32.totalorder %s32, 1
    %s34 = scalar_select %p33, 0, %s32
    %s35 = sadd.s32 1, %s19
    %s36 = scalar_select %p33, %s35, %s19
    %p37 = scmp.ge.s32.totalorder %s36, 2
    %s38 = scalar_select %p37, 0, %s36
    %s39 = ssub.s32 %s19, %s38
    %s40 = ssub.s32 %s21, %s30
    %s41 = sor.u32 %s39, %s40
    %s42 = ssub.s32 %s20, %s34
    %s43 = sor.u32 %s41, %s42
    %p44 = scmp.eq.s32.totalorder %s43, 0
    %s46 = sadd.s32 %s45, 1
    %s47 = scalar_select %p44, %s45, %s46
    %p50 = pneg %p44
    %p51 = scmp.eq.s32.totalorder %s12, 3
    %p52 = por %p50, %p51
    %p53 = scmp.ne.s32.totalorder %s45, %s48
    %p54 = scmp.eq.s32.totalorder %s12, 0
    %p55 = por %p53, %p54
    %p56 = scmp.ne.s32.totalorder %s45, %s48
    %p57 = scmp.eq.s32.totalorder %s17, 3
    %p58 = por %p56, %p57
    %p59 = scmp.ne.s32.totalorder %s48, %s49
    %p60 = scmp.eq.s32.totalorder %s17, 0
    %p61 = por %p59, %p60
    %p62 = scmp.ne.s32.totalorder %s48, %s49
    %p63 = scmp.eq.s32.totalorder %s18, 3
    %p64 = por %p62, %p63
    %p66 = scmp.ne.s32.totalorder %s49, %s65
    %p67 = scmp.eq.s32.totalorder %s18, 0
    %p68 = por %p66, %p67
    %s69 = ssub.s32 %s21, %s30
    %p70 = scmp.eq.s32.totalorder %s69, 0
    %s72 = sadd.s32 %s71, 1
    %s73 = scalar_select %p70, %s71, %s72
    %p76 = pneg %p70
    %p77 = scmp.eq.s32.totalorder %s12, 3
    %p78 = por %p76, %p77
    %p79 = scmp.ne.s32.totalorder %s71, %s74
    %p80 = scmp.eq.s32.totalorder %s12, 0
    %p81 = por %p79, %p80
    %p82 = scmp.ne.s32.totalorder %s71, %s74
    %p83 = scmp.eq.s32.totalorder %s17, 3
    %p84 = por %p82, %p83
    %p85 = scmp.ne.s32.totalorder %s74, %s75
    %p86 = scmp.eq.s32.totalorder %s17, 0
    %p87 = por %p85, %p86
    %p88 = scmp.ne.s32.totalorder %s74, %s75
    %p89 = scmp.eq.s32.totalorder %s18, 3
    %p90 = por %p88, %p89
    %p92 = scmp.ne.s32.totalorder %s75, %s91
    %p93 = scmp.eq.s32.totalorder %s18, 0
    %p94 = por %p92, %p93
    %s96 = sadd.s32 %s95, 1
    %p99 = scmp.eq.s32.totalorder %s12, 3
    %p100 = scmp.ne.s32.totalorder %s95, %s97
    %p101 = scmp.eq.s32.totalorder %s12, 0
    %p102 = por %p100, %p101
    %p103 = scmp.ne.s32.totalorder %s95, %s97
    %p104 = scmp.eq.s32.totalorder %s17, 3
    %p105 = por %p103, %p104
    %p106 = scmp.ne.s32.totalorder %s97, %s98
    %p107 = scmp.eq.s32.totalorder %s17, 0
    %p108 = por %p106, %p107
    %p109 = scmp.ne.s32.totalorder %s97, %s98
    %p110 = scmp.eq.s32.totalorder %s18, 3
    %p111 = por %p109, %p110
    %p113 = scmp.ne.s32.totalorder %s98, %s112
    %p114 = scmp.eq.s32.totalorder %s18, 0
    %p115 = por %p113, %p114
    %s116 = ssub.s32 %s19, %s38
    %s117 = ssub.s32 %s20, %s34
    %s118 = sor.u32 %s116, %s117
    %p119 = scmp.eq.s32.totalorder %s118, 0
    %s121 = sadd.s32 %s120, 1
    %s122 = scalar_select %p119, %s120, %s121
    %p125 = pneg %p119
    %p126 = scmp.eq.s32.totalorder %s12, 3
    %p127 = por %p125, %p126
    %p128 = scmp.ne.s32.totalorder %s120, %s123
    %p129 = scmp.eq.s32.totalorder %s12, 0
    %p130 = por %p128, %p129
    %p131 = scmp.ne.s32.totalorder %s120, %s123
    %p132 = scmp.eq.s32.totalorder %s17, 3
    %p133 = por %p131, %p132
    %p134 = scmp.ne.s32.totalorder %s123, %s124
    %p135 = scmp.eq.s32.totalorder %s17, 0
    %p136 = por %p134, %p135
    %p137 = scmp.ne.s32.totalorder %s123, %s124
    %p138 = scmp.eq.s32.totalorder %s18, 3
    %p139 = por %p137, %p138
    %p141 = scmp.ne.s32.totalorder %s124, %s140
    %p142 = scmp.eq.s32.totalorder %s18, 0
    %p143 = por %p141, %p142
    %s145 = sadd.s32 %s144, 1
    %p148 = scmp.eq.s32.totalorder %s12, 3
    %p149 = scmp.ne.s32.totalorder %s144, %s146
    %p150 = scmp.eq.s32.totalorder %s12, 0
    %p151 = por %p149, %p150
    %p152 = scmp.ne.s32.totalorder %s144, %s146
    %p153 = scmp.eq.s32.totalorder %s17, 3
    %p154 = por %p152, %p153
    %p155 = scmp.ne.s32.totalorder %s146, %s147
    %p156 = scmp.eq.s32.totalorder %s17, 0
    %p157 = por %p155, %p156
    %p158 = scmp.ne.s32.totalorder %s146, %s147
    %p159 = scmp.eq.s32.totalorder %s18, 3
    %p160 = por %p158, %p159
    %p162 = scmp.ne.s32.totalorder %s147, %s161
    %p163 = scmp.eq.s32.totalorder %s18, 0
    %p164 = por %p162, %p163
    %s166 = sadd.s32 %s165, 1
    %p169 = scmp.eq.s32.totalorder %s12, 3
    %p170 = scmp.ne.s32.totalorder %s165, %s167
    %p171 = scmp.eq.s32.totalorder %s12, 0
    %p172 = por %p170, %p171
    %p173 = scmp.ne.s32.totalorder %s165, %s167
    %p174 = scmp.eq.s32.totalorder %s17, 3
    %p175 = por %p173, %p174
    %p176 = scmp.ne.s32.totalorder %s167, %s168
    %p177 = scmp.eq.s32.totalorder %s17, 0
    %p178 = por %p176, %p177
    %p179 = scmp.ne.s32.totalorder %s167, %s168
    %p180 = scmp.eq.s32.totalorder %s18, 3
    %p181 = por %p179, %p180
    %p183 = scmp.ne.s32.totalorder %s168, %s182
    %p184 = scmp.eq.s32.totalorder %s18, 0
    %p185 = por %p183, %p184
    %s186 = ssub.s32 %s19, %s38
    %s187 = ssub.s32 %s20, %s34
    %s188 = sor.u32 %s186, %s187
    %p189 = scmp.eq.s32.totalorder %s188, 0
    %s191 = sadd.s32 %s190, 1
    %s192 = scalar_select %p189, %s190, %s191
    %p195 = pneg %p189
    %p196 = scmp.eq.s32.totalorder %s12, 3
    %p197 = por %p195, %p196
    %p198 = scmp.ne.s32.totalorder %s190, %s193
    %p199 = scmp.eq.s32.totalorder %s12, 0
    %p200 = por %p198, %p199
    %p201 = scmp.ne.s32.totalorder %s190, %s193
    %p202 = scmp.eq.s32.totalorder %s17, 3
    %p203 = por %p201, %p202
    %p204 = scmp.ne.s32.totalorder %s193, %s194
    %p205 = scmp.eq.s32.totalorder %s17, 0
    %p206 = por %p204, %p205
    %p207 = scmp.ne.s32.totalorder %s193, %s194
    %p208 = scmp.eq.s32.totalorder %s18, 3
    %p209 = por %p207, %p208
    %p211 = scmp.ne.s32.totalorder %s194, %s210
    %p212 = scmp.eq.s32.totalorder %s18, 0
    %p213 = por %p211, %p212
    %p214 = scmp.le.s32.totalorder 1, %s12
    %p215 = scmp.lt.s32.totalorder %s12, 5
    %p216 = pnand %p214, %p215
    %p217 = pneg %p216
    // Predicated region
    $region9: #{transformer_forward.15} parent=5 // pred_check
      _
    $region10: #{transformer_forward.15} parent=5 // pred_check_branch
      %219 = sbr.rel (%p216) target = $region12
    $region11: #{transformer_forward.15} parent=5 // pred_region
      %s220 = ssub.s32 %s12, 1
      // Predicated region
      $region13: #{transformer_forward.15} parent=11 // pred_check
        %p221 = pneg %p108
      $region14: #{transformer_forward.15} parent=11 // pred_check_branch
        %223 = sbr.rel (%p221) target = $region16
      $region15: #{transformer_forward.15} parent=11 // pred_region
        _
      $region16: #{transformer_forward.15} parent=11 // pred_fallthru
        _
      // Predicated region
      $region17: #{transformer_forward.15} parent=11 // pred_check
        %p224 = pneg %p157
      $region18: #{transformer_forward.15} parent=11 // pred_check_branch
        %226 = sbr.rel (%p224) target = $region20
      $region19: #{transformer_forward.15} parent=11 // pred_region
        _
      $region20: #{transformer_forward.15} parent=11 // pred_fallthru
        _
      // Predicated region
      $region21: #{transformer_forward.15} parent=11 // pred_check
        %p227 = pneg %p178
      $region22: #{transformer_forward.15} parent=11 // pred_check_branch
        %229 = sbr.rel (%p227) target = $region24
      $region23: #{transformer_forward.15} parent=11 // pred_region
        _
      $region24: #{transformer_forward.15} parent=11 // pred_fallthru
        _
    $region12: #{transformer_forward.15} parent=5 // pred_fallthru
      _
    %p230 = scmp.lt.s32.totalorder %s12, 4
    // Predicated region
    $region25: #{transformer_forward.15} parent=5 // pred_check
      %p231 = pneg %p230
    $region26: #{transformer_forward.15} parent=5 // pred_check_branch
      %233 = sbr.rel (%p231) target = $region28
    $region27: #{transformer_forward.15} parent=5 // pred_region
      // Predicated region
      $region29: #{transformer_forward.15} parent=27 // pred_check
        %p234 = pneg %p55
      $region30: #{transformer_forward.15} parent=27 // pred_check_branch
        %236 = sbr.rel (%p234) target = $region32
      $region31: #{transformer_forward.15} parent=27 // pred_region
        %p237 = scmp.lt.s32.totalorder %s19, 1
        %s238 = scalar_select %p237, %s19, 1
        %p239 = scmp.lt.s32.totalorder %s21, 1
        %s240 = scalar_select %p239, %s21, 1
        %p241 = scmp.lt.s32.totalorder %s20, 0
        %s242 = scalar_select %p241, %s20, 0
        %s243 = sadd.s32 %s242, %s240
        %s244 = smul.addr %s238, 2
        %s245 = sadd.s32 %s243, %s244
        %s246 = smul.addr %s245, 4
        %s247 = scalar_lea.vmem %s0, %s246
      $region32: #{transformer_forward.15} parent=27 // pred_fallthru
        _
      // Predicated region
      $region33: #{transformer_forward.15} parent=27 // pred_check
        %p248 = pneg %p81
      $region34: #{transformer_forward.15} parent=27 // pred_check_branch
        %250 = sbr.rel (%p248) target = $region36
      $region35: #{transformer_forward.15} parent=27 // pred_region
        %p251 = scmp.lt.s32.totalorder %s21, 1
        %s252 = scalar_select %p251, %s21, 1
        %s253 = smul.addr %s252, 2
        %s254 = smul.addr %s253, 4
        %s255 = scalar_lea.vmem %s1, %s254
      $region36: #{transformer_forward.15} parent=27 // pred_fallthru
        _
      // Predicated region
      $region37: #{transformer_forward.15} parent=27 // pred_check
        %p256 = pneg %p130
      $region38: #{transformer_forward.15} parent=27 // pred_check_branch
        %258 = sbr.rel (%p256) target = $region40
      $region39: #{transformer_forward.15} parent=27 // pred_region
        %p259 = scmp.lt.s32.totalorder %s19, 1
        %s260 = scalar_select %p259, %s19, 1
        %p261 = scmp.lt.s32.totalorder %s20, 0
        %s262 = scalar_select %p261, %s20, 0
        %s263 = sadd.s32 %s262, %s260
        %s264 = smul.addr %s263, 8
        %s265 = scalar_lea.vmem %s3, %s264
      $region40: #{transformer_forward.15} parent=27 // pred_fallthru
        _
    $region28: #{transformer_forward.15} parent=5 // pred_fallthru
      _
    %p266 = scmp.le.s32.totalorder 1, %s12
    %p267 = scmp.lt.s32.totalorder %s12, 5
    %p268 = pnand %p266, %p267
    %p269 = pneg %p268
    // Predicated region
    $region41: #{transformer_forward.15} parent=5 // pred_check
      _
    $region42: #{transformer_forward.15} parent=5 // pred_check_branch
      %271 = sbr.rel (%p268) target = $region44
    $region43: #{transformer_forward.15} parent=5 // pred_region
      %s272 = ssub.s32 %s12, 1
      %p273 = scmp.lt.s32.totalorder %s22, 1
      %s274 = scalar_select %p273, %s22, 1
      %p275 = scmp.lt.s32.totalorder %s24, 1
      %s276 = scalar_select %p275, %s24, 1
      %p277 = scmp.lt.s32.totalorder %s23, 0
      %s278 = scalar_select %p277, %s23, 0
      %s279 = sadd.s32 %s278, %s276
      %s280 = smul.addr %s274, 2
      %s281 = sadd.s32 %s279, %s280
      %s282 = smul.addr %s281, 4
      %s283 = scalar_lea.vmem %s0, %s282
      %p284 = pneg %p61
      %p285 = pneg %p58
      %p286 = scmp.lt.s32.totalorder %s24, 1
      %s287 = scalar_select %p286, %s24, 1
      %s288 = smul.addr %s287, 2
      %s289 = smul.addr %s288, 4
      %s290 = scalar_lea.vmem %s1, %s289
      %p291 = pneg %p87
      %p292 = pneg %p84
      %p293 = pneg %p108
      %p294 = pneg %p105
      %p295 = scmp.lt.s32.totalorder %s22, 1
      %s296 = scalar_select %p295, %s22, 1
      %p297 = scmp.lt.s32.totalorder %s23, 0
      %s298 = scalar_select %p297, %s23, 0
      %s299 = sadd.s32 %s298, %s296
      %s300 = smul.addr %s299, 8
      %s301 = scalar_lea.vmem %s3, %s300
      %p302 = pneg %p136
      %p303 = pneg %p133
      %p304 = pneg %p157
      %p305 = pneg %p154
      %p306 = pneg %p178
      %p307 = pneg %p175
      %p308 = pneg %p206
      %p309 = pneg %p203
      %p310 = scmp.lt.s32.totalorder %s22, 1
      %s311 = scalar_select %p310, %s22, 1
      %p312 = scmp.lt.s32.totalorder %s23, 0
      %s313 = scalar_select %p312, %s23, 0
      %s314 = sadd.s32 %s313, %s311
      %s315 = smul.addr %s314, 8
      %s316 = scalar_lea.vmem %s6, %s315
      %p317 = scmp.lt.s32.totalorder %s22, 1
      %s318 = scalar_select %p317, %s22, 1
      %p319 = scmp.lt.s32.totalorder %s24, 1
      %s320 = scalar_select %p319, %s24, 1
      %p321 = scmp.lt.s32.totalorder %s23, 0
      %s322 = scalar_select %p321, %s23, 0
      %s323 = sadd.s32 %s322, %s320
      %s324 = smul.addr %s318, 2
      %s325 = sadd.s32 %s323, %s324
      %s326 = smul.addr %s325, 4
      %s327 = scalar_lea.vmem %s0, %s326
      %p328 = scmp.lt.s32.totalorder %s24, 1
      %s329 = scalar_select %p328, %s24, 1
      %s330 = smul.addr %s329, 2
      %s331 = smul.addr %s330, 4
      %s332 = scalar_lea.vmem %s1, %s331
      %p333 = scmp.lt.s32.totalorder %s22, 1
      %s334 = scalar_select %p333, %s22, 1
      %p335 = scmp.lt.s32.totalorder %s23, 0
      %s336 = scalar_select %p335, %s23, 0
      %s337 = sadd.s32 %s336, %s334
      %s338 = smul.addr %s337, 8
      %s339 = scalar_lea.vmem %s3, %s338
      %p340 = scmp.lt.s32.totalorder %s22, 1
      %s341 = scalar_select %p340, %s22, 1
      %p342 = scmp.lt.s32.totalorder %s23, 0
      %s343 = scalar_select %p342, %s23, 0
      %s344 = sadd.s32 %s343, %s341
      %s345 = smul.addr %s344, 8
      %s346 = scalar_lea.vmem %s6, %s345
      %p348 = scmp.eq.s32.totalorder %s24, 0
      // Predicated region
      $region45: #{transformer_forward.15} parent=43 // pred_check
        %p349 = pneg %p348
      $region46: #{transformer_forward.15} parent=43 // pred_check_branch
        %351 = sbr.rel (%p349) target = $region48
      $region47: #{transformer_forward.15} parent=43 // pred_region
        %vm352 = vcmask 261120
        %353 = vst.msk [vmem:[#allocation2] sm:$0xff] %vm352, 0.0
      $region48: #{transformer_forward.15} parent=43 // pred_fallthru
        _
      %v354 = vld [vmem:[#allocation2] sm:$0xff]
      %v355 = vld [vmem:[%s327] sm:$0xf]
      %v356 = vld [vmem:[%s332] sm:$0xf]
      %v357 = vld [vmem:[%s332 + $0x4] sm:$0xf]
      %v360 = vunpack.c.l.b16 %v356
      %v361 = vunpack.c.l.b16 %v357
      %v362 = vpack.c.b16 %v361, %v360
      %vm364 = vcmask 130048
      %v366 = vsel %vm364, %v355, 0
      %368 = vmatprep.subr.bf16.mxu0 0
      %369 = vmatpush1.bf16.msra.mxu0 %v362
      %370 = vmatprep.subr.bf16.mxu0 0
      %371 = vmatpush1.bf16.msra.mxu0 0
      %372 = vmatprep.subr.bf16.mxu0 0
      %373 = vmatpush1.bf16.msra.mxu0 0
      %374 = vmatprep.subr.bf16.mxu0 0
      %375 = vmatpush1.bf16.msra.mxu0 0
      %376 = vmatprep.subr.bf16.mxu0 0
      %377 = vmatpush1.bf16.msra.mxu0 0
      %378 = vmatprep.subr.bf16.mxu0 0
      %379 = vmatpush1.bf16.msra.mxu0 0
      %380 = vmatprep.subr.bf16.mxu0 0
      %381 = vmatpush1.bf16.msra.mxu0 0
      %382 = vmatprep.subr.bf16.mxu0 0
      %383 = vmatpush1.bf16.msra.mxu0 0
      %384 = vmatprep.subr.bf16.mxu0 0
      %385 = vmatpush1.bf16.msra.mxu0 0
      %386 = vmatprep.subr.bf16.mxu0 0
      %387 = vmatpush1.bf16.msra.mxu0 0
      %388 = vmatprep.subr.bf16.mxu0 0
      %389 = vmatpush1.bf16.msra.mxu0 0
      %390 = vmatprep.subr.bf16.mxu0 0
      %391 = vmatpush1.bf16.msra.mxu0 0
      %392 = vmatprep.subr.bf16.mxu0 0
      %393 = vmatpush1.bf16.msra.mxu0 0
      %394 = vmatprep.subr.bf16.mxu0 0
      %395 = vmatpush1.bf16.msra.mxu0 0
      %396 = vmatprep.subr.bf16.mxu0 0
      %397 = vmatpush1.bf16.msra.mxu0 0
      %398 = vmatprep.subr.bf16.mxu0 0
      %399 = vmatpush1.bf16.msra.mxu0 0
      %400 = vmatprep.mubr.bf16.mxu0 0
      %401 = vmatmul.mubr.bf16.gmra.mrb[0].mxu0 %v366
      %v402 = vpop.f32.mrb[0].mxu0
      %v403 = vadd.f32 0.0, %v402
      %v404 = vpop.f32.mrb[0].mxu0
      %v405 = vpop.f32.mrb[0].mxu0
      %v406 = vpop.f32.mrb[0].mxu0
      %407 = vdwg.mxu0
      %v408 = vadd.f32 %v354, %v403
      %vm409 = vcmask 261120
      %410 = vst.msk [vmem:[#allocation2] sm:$0xff] %vm409, %v408
      %p411 = scmp.eq.s32.totalorder %s24, 1
      // Predicated region
      $region49: #{transformer_forward.15} parent=43 // pred_check
        %p412 = pneg %p411
      $region50: #{transformer_forward.15} parent=43 // pred_check_branch
        %414 = sbr.rel (%p412) target = $region52
      $region51: #{transformer_forward.15} parent=43 // pred_region
        %v415 = vld [vmem:[#allocation2] sm:$0xff]
        %v416 = vld [vmem:[%s2] sm:$0x1]
        %v418 = vlaneseq
        %v419 = vshrl.u32 %v418, 7
        %v420 = vsub.s32 0, %v419
        %v421 = vrot.slane %v416, %v420
        %v423 = vadd.f32 %v415, %v421
        %v424 = vld [vmem:[%s339] sm:$0xff]
        %v425 = vadd.f32 %v423, %v424
        %v426 = vsel %vm409, %v425, 0.0
        %427 = vadd.xlane.f32.xlu0 %v426
        %v428 = vpop.xlane.xlu0 %427
        %v429 = vrcp.pop 32.0
        %v430 = vmul.f32 %v428, %v429
        %v431 = vsub.f32 %v425, %v430
        %v432 = vmul.f32 %v431, %v431
        %v433 = vsel %vm409, %v432, 0.0
        %434 = vadd.xlane.f32.xlu0 %v433
        %v435 = vpop.xlane.xlu0 %434
        %v436 = vmul.f32 %v435, %v429
        %v437 = vadd.f32 %v436, 1e-05
        %v438 = vrsqrt.pop %v437
        %v439 = vmul.f32 %v431, %v438
        %v440 = vld [vmem:[%s4] sm:$0x1]
        %v442 = vlaneseq
        %v443 = vshrl.u32 %v442, 7
        %v444 = vsub.s32 0, %v443
        %v445 = vrot.slane %v440, %v444
        %v447 = vmul.f32 %v439, %v445
        %v448 = vld [vmem:[%s5] sm:$0x1]
        %v450 = vlaneseq
        %v451 = vshrl.u32 %v450, 7
        %v452 = vsub.s32 0, %v451
        %v453 = vrot.slane %v448, %v452
        %v455 = vadd.f32 %v447, %v453
        %456 = vst.msk [vmem:[%s346] sm:$0xff] %vm409, %v455
      $region52: #{transformer_forward.15} parent=43 // pred_fallthru
        _
      %p457 = scmp.lt.s32.totalorder %s22, 1
      %s458 = scalar_select %p457, %s22, 1
      %p459 = scmp.lt.s32.totalorder %s23, 0
      %s460 = scalar_select %p459, %s23, 0
      %s461 = sadd.s32 %s460, %s458
      %s462 = smul.addr %s461, 8
      %s463 = scalar_lea.vmem %s6, %s462
      // Predicated region
      $region53: #{transformer_forward.15} parent=43 // pred_check
        %p464 = pneg %p203
      $region54: #{transformer_forward.15} parent=43 // pred_check_branch
        %466 = sbr.rel (%p464) target = $region56
      $region55: #{transformer_forward.15} parent=43 // pred_region
        _
      $region56: #{transformer_forward.15} parent=43 // pred_fallthru
        _
    $region44: #{transformer_forward.15} parent=5 // pred_fallthru
      _
    %p467 = scmp.le.s32.totalorder 2, %s12
    // Predicated region
    $region57: #{transformer_forward.15} parent=5 // pred_check
      %p468 = pneg %p467
    $region58: #{transformer_forward.15} parent=5 // pred_check_branch
      %470 = sbr.rel (%p468) target = $region60
    $region59: #{transformer_forward.15} parent=5 // pred_region
      %s471 = ssub.s32 %s12, 2
      // Predicated region
      $region61: #{transformer_forward.15} parent=59 // pred_check
        %p472 = pneg %p209
      $region62: #{transformer_forward.15} parent=59 // pred_check_branch
        %474 = sbr.rel (%p472) target = $region64
      $region63: #{transformer_forward.15} parent=59 // pred_region
        %p475 = scmp.lt.s32.totalorder %s25, 1
        %s476 = scalar_select %p475, %s25, 1
        %p477 = scmp.lt.s32.totalorder %s26, 0
        %s478 = scalar_select %p477, %s26, 0
        %s479 = sadd.s32 %s478, %s476
        %s480 = smul.addr %s479, 8
        %s481 = scalar_lea.vmem %s6, %s480
      $region64: #{transformer_forward.15} parent=59 // pred_fallthru
        _
    $region60: #{transformer_forward.15} parent=5 // pred_fallthru
      _
  $region6: #{transformer_forward.15} parent=0 // loop_footer
    %s16 = sadd.s32 1, %s12
  $region7: #{transformer_forward.15} parent=0 // loop_footer_branch
    %11 = sbr.rel target = $region3
  $region8: #{transformer_forward.15} parent=0 // loop_exit
    _

// kernel: transformer_forward.14
$region0: #{transformer_forward.14}
  #allocation0 [shape = 'u32[]', space=smem, size = 0x4, offset = 0x4, fixed_abs, tag = 'smem constant byte address 0x4 - core index']
  #allocation1 [shape = 'u32[144,128]{1,0:T(1,128)}', space=vmem, size = 0x12000, scoped, tag = 'internal scratch']
  #allocation2 [shape = 'f32[8,1]{1,0:T(8,128)}', space=vmem, size = 0x1000, scoped, tag = 'scratch operand']
  #allocation3 [shape = 'f32[8,1]{1,0:T(8,128)}', space=vmem, size = 0x1000, scoped, tag = 'scratch operand']
  #allocation4 [shape = 'f32[8,16]{1,0:T(8,128)}', space=vmem, size = 0x1000, scoped, tag = 'scratch operand']
  %s0 = inlined_call_operand.vmem [shape: bf16[2,2,8,16], index: 0, kind: input, shape index: {}]
  %s1 = inlined_call_operand.vmem [shape: bf16[2,2,8,16], index: 1, kind: input, shape index: {}]
  %s2 = inlined_call_operand.vmem [shape: bf16[2,2,8,16], index: 2, kind: input, shape index: {}]
  %s3 = inlined_call_operand.vmem [shape: bf16[2,2,8,16], index: 3, kind: output, shape index: {}]
  %s4 = sld [smem:[#allocation0]]
  $region57: #{transformer_forward.14} parent=0
    _
  %s6 = ssub.s32 1, %s4
  %s7 = scalar_select 0, %s6, %s4
  loop: start=0, step=1, limit=6
  $region2: #{transformer_forward.14} parent=0 // loop_pre_header
    _
  $region3: #{transformer_forward.14} parent=0 // loop_header
    %s9 = sphi 0, %s13
    %p10 = scmp.ge.s32.totalorder %s9, 6
    %s16 = sphi 0, %s42
    %s17 = sphi 0, %s38
    %s18 = sphi 0, %s34
    %s19 = sphi 0, %s30
    %s20 = sphi 0, %s16
    %s21 = sphi 0, %s17
    %s22 = sphi 0, %s18
    %s23 = sphi 0, %s19
    %s24 = sphi 0, %s20
    %s25 = sphi 0, %s21
    %s26 = sphi 0, %s22
    %s27 = sphi 0, %s23
    %s49 = sphi 0, %s51
    %s52 = sphi 0, %s49
    %s53 = sphi 0, %s52
    %s69 = sphi 0, %s53
    %s79 = sphi 0, %s81
    %s82 = sphi 0, %s79
    %s83 = sphi 0, %s82
    %s99 = sphi 0, %s83
    %s109 = sphi 0, %s111
    %s112 = sphi 0, %s109
    %s113 = sphi 0, %s112
    %s129 = sphi 0, %s113
    %s139 = sphi 0, %s141
    %s142 = sphi 0, %s139
    %s143 = sphi 0, %s142
    %s159 = sphi 0, %s143
  $region4: #{transformer_forward.14} parent=0 // loop_header_branch
    %12 = sbr.rel (%p10) target = $region8
  $region5: #{transformer_forward.14} parent=0 // loop_body
    %s14 = ssub.s32 %s9, 1
    %s15 = ssub.s32 %s9, 2
    %s28 = sadd.s32 1, %s19
    %p29 = scmp.ge.s32.totalorder %s28, 1
    %s30 = scalar_select %p29, 0, %s28
    %s31 = sadd.s32 1, %s18
    %s32 = scalar_select %p29, %s31, %s18
    %p33 = scmp.ge.s32.totalorder %s32, 1
    %s34 = scalar_select %p33, 0, %s32
    %s35 = sadd.s32 1, %s17
    %s36 = scalar_select %p33, %s35, %s17
    %p37 = scmp.ge.s32.totalorder %s36, 2
    %s38 = scalar_select %p37, 0, %s36
    %s39 = sadd.s32 1, %s16
    %s40 = scalar_select %p37, %s39, %s16
    %p41 = scmp.ge.s32.totalorder %s40, 2
    %s42 = scalar_select %p41, 0, %s40
    %s43 = ssub.s32 %s16, %s42
    %s44 = ssub.s32 %s17, %s38
    %s45 = sor.u32 %s43, %s44
    %s46 = ssub.s32 %s18, %s34
    %s47 = sor.u32 %s45, %s46
    %p48 = scmp.eq.s32.totalorder %s47, 0
    %s50 = sadd.s32 %s49, 1
    %s51 = scalar_select %p48, %s49, %s50
    %p54 = pneg %p48
    %p55 = scmp.eq.s32.totalorder %s9, 3
    %p56 = por %p54, %p55
    %p57 = scmp.ne.s32.totalorder %s49, %s52
    %p58 = scmp.eq.s32.totalorder %s9, 0
    %p59 = por %p57, %p58
    %p60 = scmp.ne.s32.totalorder %s49, %s52
    %p61 = scmp.eq.s32.totalorder %s14, 3
    %p62 = por %p60, %p61
    %p63 = scmp.ne.s32.totalorder %s52, %s53
    %p64 = scmp.eq.s32.totalorder %s14, 0
    %p65 = por %p63, %p64
    %p66 = scmp.ne.s32.totalorder %s52, %s53
    %p67 = scmp.eq.s32.totalorder %s15, 3
    %p68 = por %p66, %p67
    %p70 = scmp.ne.s32.totalorder %s53, %s69
    %p71 = scmp.eq.s32.totalorder %s15, 0
    %p72 = por %p70, %p71
    %s73 = ssub.s32 %s16, %s42
    %s74 = ssub.s32 %s17, %s38
    %s75 = sor.u32 %s73, %s74
    %s76 = ssub.s32 %s19, %s30
    %s77 = sor.u32 %s75, %s76
    %p78 = scmp.eq.s32.totalorder %s77, 0
    %s80 = sadd.s32 %s79, 1
    %s81 = scalar_select %p78, %s79, %s80
    %p84 = pneg %p78
    %p85 = scmp.eq.s32.totalorder %s9, 3
    %p86 = por %p84, %p85
    %p87 = scmp.ne.s32.totalorder %s79, %s82
    %p88 = scmp.eq.s32.totalorder %s9, 0
    %p89 = por %p87, %p88
    %p90 = scmp.ne.s32.totalorder %s79, %s82
    %p91 = scmp.eq.s32.totalorder %s14, 3
    %p92 = por %p90, %p91
    %p93 = scmp.ne.s32.totalorder %s82, %s83
    %p94 = scmp.eq.s32.totalorder %s14, 0
    %p95 = por %p93, %p94
    %p96 = scmp.ne.s32.totalorder %s82, %s83
    %p97 = scmp.eq.s32.totalorder %s15, 3
    %p98 = por %p96, %p97
    %p100 = scmp.ne.s32.totalorder %s83, %s99
    %p101 = scmp.eq.s32.totalorder %s15, 0
    %p102 = por %p100, %p101
    %s103 = ssub.s32 %s16, %s42
    %s104 = ssub.s32 %s17, %s38
    %s105 = sor.u32 %s103, %s104
    %s106 = ssub.s32 %s19, %s30
    %s107 = sor.u32 %s105, %s106
    %p108 = scmp.eq.s32.totalorder %s107, 0
    %s110 = sadd.s32 %s109, 1
    %s111 = scalar_select %p108, %s109, %s110
    %p114 = pneg %p108
    %p115 = scmp.eq.s32.totalorder %s9, 3
    %p116 = por %p114, %p115
    %p117 = scmp.ne.s32.totalorder %s109, %s112
    %p118 = scmp.eq.s32.totalorder %s9, 0
    %p119 = por %p117, %p118
    %p120 = scmp.ne.s32.totalorder %s109, %s112
    %p121 = scmp.eq.s32.totalorder %s14, 3
    %p122 = por %p120, %p121
    %p123 = scmp.ne.s32.totalorder %s112, %s113
    %p124 = scmp.eq.s32.totalorder %s14, 0
    %p125 = por %p123, %p124
    %p126 = scmp.ne.s32.totalorder %s112, %s113
    %p127 = scmp.eq.s32.totalorder %s15, 3
    %p128 = por %p126, %p127
    %p130 = scmp.ne.s32.totalorder %s113, %s129
    %p131 = scmp.eq.s32.totalorder %s15, 0
    %p132 = por %p130, %p131
    %s133 = ssub.s32 %s16, %s42
    %s134 = ssub.s32 %s17, %s38
    %s135 = sor.u32 %s133, %s134
    %s136 = ssub.s32 %s18, %s34
    %s137 = sor.u32 %s135, %s136
    %p138 = scmp.eq.s32.totalorder %s137, 0
    %s140 = sadd.s32 %s139, 1
    %s141 = scalar_select %p138, %s139, %s140
    %p144 = pneg %p138
    %p145 = scmp.eq.s32.totalorder %s9, 3
    %p146 = por %p144, %p145
    %p147 = scmp.ne.s32.totalorder %s139, %s142
    %p148 = scmp.eq.s32.totalorder %s9, 0
    %p149 = por %p147, %p148
    %p150 = scmp.ne.s32.totalorder %s139, %s142
    %p151 = scmp.eq.s32.totalorder %s14, 3
    %p152 = por %p150, %p151
    %p153 = scmp.ne.s32.totalorder %s142, %s143
    %p154 = scmp.eq.s32.totalorder %s14, 0
    %p155 = por %p153, %p154
    %p156 = scmp.ne.s32.totalorder %s142, %s143
    %p157 = scmp.eq.s32.totalorder %s15, 3
    %p158 = por %p156, %p157
    %p160 = scmp.ne.s32.totalorder %s143, %s159
    %p161 = scmp.eq.s32.totalorder %s15, 0
    %p162 = por %p160, %p161
    %p163 = scmp.le.s32.totalorder 1, %s9
    %p164 = scmp.lt.s32.totalorder %s9, 5
    %p165 = pnand %p163, %p164
    %p166 = pneg %p165
    // Predicated region
    $region9: #{transformer_forward.14} parent=5 // pred_check
      _
    $region10: #{transformer_forward.14} parent=5 // pred_check_branch
      %168 = sbr.rel (%p165) target = $region12
    $region11: #{transformer_forward.14} parent=5 // pred_region
      %s169 = ssub.s32 %s9, 1
    $region12: #{transformer_forward.14} parent=5 // pred_fallthru
      _
    %p170 = scmp.lt.s32.totalorder %s9, 4
    // Predicated region
    $region13: #{transformer_forward.14} parent=5 // pred_check
      %p171 = pneg %p170
    $region14: #{transformer_forward.14} parent=5 // pred_check_branch
      %173 = sbr.rel (%p171) target = $region16
    $region15: #{transformer_forward.14} parent=5 // pred_region
      // Predicated region
      $region17: #{transformer_forward.14} parent=15 // pred_check
        %p174 = pneg %p59
      $region18: #{transformer_forward.14} parent=15 // pred_check_branch
        %176 = sbr.rel (%p174) target = $region20
      $region19: #{transformer_forward.14} parent=15 // pred_region
        %p177 = scmp.lt.s32.totalorder %s16, 1
        %s178 = scalar_select %p177, %s16, 1
        %p179 = scmp.lt.s32.totalorder %s17, 1
        %s180 = scalar_select %p179, %s17, 1
        %p181 = scmp.lt.s32.totalorder %s18, 0
        %s182 = scalar_select %p181, %s18, 0
        %s183 = sadd.s32 %s182, %s180
        %s184 = smul.addr %s178, 2
        %s185 = sadd.s32 %s183, %s184
        %s186 = smul.addr %s185, 4
        %s187 = scalar_lea.vmem %s0, %s186
      $region20: #{transformer_forward.14} parent=15 // pred_fallthru
        _
      // Predicated region
      $region21: #{transformer_forward.14} parent=15 // pred_check
        %p188 = pneg %p89
      $region22: #{transformer_forward.14} parent=15 // pred_check_branch
        %190 = sbr.rel (%p188) target = $region24
      $region23: #{transformer_forward.14} parent=15 // pred_region
        %p191 = scmp.lt.s32.totalorder %s16, 1
        %s192 = scalar_select %p191, %s16, 1
        %p193 = scmp.lt.s32.totalorder %s17, 1
        %s194 = scalar_select %p193, %s17, 1
        %p195 = scmp.lt.s32.totalorder %s19, 0
        %s196 = scalar_select %p195, %s19, 0
        %s197 = sadd.s32 %s196, %s194
        %s198 = smul.addr %s192, 2
        %s199 = sadd.s32 %s197, %s198
        %s200 = smul.addr %s199, 4
        %s201 = scalar_lea.vmem %s1, %s200
      $region24: #{transformer_forward.14} parent=15 // pred_fallthru
        _
      // Predicated region
      $region25: #{transformer_forward.14} parent=15 // pred_check
        %p202 = pneg %p119
      $region26: #{transformer_forward.14} parent=15 // pred_check_branch
        %204 = sbr.rel (%p202) target = $region28
      $region27: #{transformer_forward.14} parent=15 // pred_region
        %p205 = scmp.lt.s32.totalorder %s16, 1
        %s206 = scalar_select %p205, %s16, 1
        %p207 = scmp.lt.s32.totalorder %s17, 1
        %s208 = scalar_select %p207, %s17, 1
        %p209 = scmp.lt.s32.totalorder %s19, 0
        %s210 = scalar_select %p209, %s19, 0
        %s211 = sadd.s32 %s210, %s208
        %s212 = smul.addr %s206, 2
        %s213 = sadd.s32 %s211, %s212
        %s214 = smul.addr %s213, 4
        %s215 = scalar_lea.vmem %s2, %s214
      $region28: #{transformer_forward.14} parent=15 // pred_fallthru
        _
    $region16: #{transformer_forward.14} parent=5 // pred_fallthru
      _
    %p216 = scmp.le.s32.totalorder 1, %s9
    %p217 = scmp.lt.s32.totalorder %s9, 5
    %p218 = pnand %p216, %p217
    %p219 = pneg %p218
    // Predicated region
    $region29: #{transformer_forward.14} parent=5 // pred_check
      _
    $region30: #{transformer_forward.14} parent=5 // pred_check_branch
      %221 = sbr.rel (%p218) target = $region32
    $region31: #{transformer_forward.14} parent=5 // pred_region
      %s222 = ssub.s32 %s9, 1
      %p223 = scmp.lt.s32.totalorder %s20, 1
      %s224 = scalar_select %p223, %s20, 1
      %p225 = scmp.lt.s32.totalorder %s21, 1
      %s226 = scalar_select %p225, %s21, 1
      %p227 = scmp.lt.s32.totalorder %s22, 0
      %s228 = scalar_select %p227, %s22, 0
      %s229 = sadd.s32 %s228, %s226
      %s230 = smul.addr %s224, 2
      %s231 = sadd.s32 %s229, %s230
      %s232 = smul.addr %s231, 4
      %s233 = scalar_lea.vmem %s0, %s232
      %p234 = pneg %p65
      %p235 = pneg %p62
      %p236 = scmp.lt.s32.totalorder %s20, 1
      %s237 = scalar_select %p236, %s20, 1
      %p238 = scmp.lt.s32.totalorder %s21, 1
      %s239 = scalar_select %p238, %s21, 1
      %p240 = scmp.lt.s32.totalorder %s23, 0
      %s241 = scalar_select %p240, %s23, 0
      %s242 = sadd.s32 %s241, %s239
      %s243 = smul.addr %s237, 2
      %s244 = sadd.s32 %s242, %s243
      %s245 = smul.addr %s244, 4
      %s246 = scalar_lea.vmem %s1, %s245
      %p247 = pneg %p95
      %p248 = pneg %p92
      %p249 = scmp.lt.s32.totalorder %s20, 1
      %s250 = scalar_select %p249, %s20, 1
      %p251 = scmp.lt.s32.totalorder %s21, 1
      %s252 = scalar_select %p251, %s21, 1
      %p253 = scmp.lt.s32.totalorder %s23, 0
      %s254 = scalar_select %p253, %s23, 0
      %s255 = sadd.s32 %s254, %s252
      %s256 = smul.addr %s250, 2
      %s257 = sadd.s32 %s255, %s256
      %s258 = smul.addr %s257, 4
      %s259 = scalar_lea.vmem %s2, %s258
      %p260 = pneg %p125
      %p261 = pneg %p122
      %p262 = pneg %p155
      %p263 = pneg %p152
      %p264 = scmp.lt.s32.totalorder %s20, 1
      %s265 = scalar_select %p264, %s20, 1
      %p266 = scmp.lt.s32.totalorder %s21, 1
      %s267 = scalar_select %p266, %s21, 1
      %p268 = scmp.lt.s32.totalorder %s22, 0
      %s269 = scalar_select %p268, %s22, 0
      %s270 = sadd.s32 %s269, %s267
      %s271 = smul.addr %s265, 2
      %s272 = sadd.s32 %s270, %s271
      %s273 = smul.addr %s272, 4
      %s274 = scalar_lea.vmem %s3, %s273
      %p275 = scmp.lt.s32.totalorder %s20, 1
      %s276 = scalar_select %p275, %s20, 1
      %p277 = scmp.lt.s32.totalorder %s21, 1
      %s278 = scalar_select %p277, %s21, 1
      %p279 = scmp.lt.s32.totalorder %s22, 0
      %s280 = scalar_select %p279, %s22, 0
      %s281 = sadd.s32 %s280, %s278
      %s282 = smul.addr %s276, 2
      %s283 = sadd.s32 %s281, %s282
      %s284 = smul.addr %s283, 4
      %s285 = scalar_lea.vmem %s0, %s284
      %p286 = scmp.lt.s32.totalorder %s20, 1
      %s287 = scalar_select %p286, %s20, 1
      %p288 = scmp.lt.s32.totalorder %s21, 1
      %s289 = scalar_select %p288, %s21, 1
      %p290 = scmp.lt.s32.totalorder %s23, 0
      %s291 = scalar_select %p290, %s23, 0
      %s292 = sadd.s32 %s291, %s289
      %s293 = smul.addr %s287, 2
      %s294 = sadd.s32 %s292, %s293
      %s295 = smul.addr %s294, 4
      %s296 = scalar_lea.vmem %s1, %s295
      %p297 = scmp.lt.s32.totalorder %s20, 1
      %s298 = scalar_select %p297, %s20, 1
      %p299 = scmp.lt.s32.totalorder %s21, 1
      %s300 = scalar_select %p299, %s21, 1
      %p301 = scmp.lt.s32.totalorder %s23, 0
      %s302 = scalar_select %p301, %s23, 0
      %s303 = sadd.s32 %s302, %s300
      %s304 = smul.addr %s298, 2
      %s305 = sadd.s32 %s303, %s304
      %s306 = smul.addr %s305, 4
      %s307 = scalar_lea.vmem %s2, %s306
      %p308 = scmp.lt.s32.totalorder %s20, 1
      %s309 = scalar_select %p308, %s20, 1
      %p310 = scmp.lt.s32.totalorder %s21, 1
      %s311 = scalar_select %p310, %s21, 1
      %p312 = scmp.lt.s32.totalorder %s22, 0
      %s313 = scalar_select %p312, %s22, 0
      %s314 = sadd.s32 %s313, %s311
      %s315 = smul.addr %s309, 2
      %s316 = sadd.s32 %s314, %s315
      %s317 = smul.addr %s316, 4
      %s318 = scalar_lea.vmem %s3, %s317
      %p320 = scmp.eq.s32.totalorder %s23, 0
      // Predicated region
      $region33: #{transformer_forward.14} parent=31 // pred_check
        %p321 = pneg %p320
      $region34: #{transformer_forward.14} parent=31 // pred_check_branch
        %323 = sbr.rel (%p321) target = $region36
      $region35: #{transformer_forward.14} parent=31 // pred_region
        %vm324 = vcmask 7168
        %325 = vst.msk [vmem:[#allocation2] sm:$0xff] %vm324, -inf
        %326 = vst.msk [vmem:[#allocation3] sm:$0xff] %vm324, 0.0
        %vm327 = vcmask 130048
        %328 = vst.msk [vmem:[#allocation4] sm:$0xff] %vm327, 0.0
      $region36: #{transformer_forward.14} parent=31 // pred_fallthru
        _
      %s329 = smul.u32 %s23, 8
      %s330 = smul.u32 %s22, 8
      %s331 = sadd.s32 %s330, 7
      %p332 = scmp.le.s32.totalorder %s329, %s331
      // Predicated region
      $region37: #{transformer_forward.14} parent=31 // pred_check
        %p333 = pneg %p332
      $region38: #{transformer_forward.14} parent=31 // pred_check_branch
        %335 = sbr.rel (%p333) target = $region40
      $region39: #{transformer_forward.14} parent=31 // pred_region
        %v336 = vld [vmem:[%s285] sm:$0xf]
        %v337 = vld [vmem:[%s296] sm:$0xf]
        %vm338 = vcmask 130048
        %v340 = vsel %vm338, %v336, 0
        %v343 = vsel %vm338, %v337, 0
        %345 = vmatprep.subr.bf16.mxu0 0
        %346 = vmatpush1.bf16.xpose.msra.mxu0 %v343
        %347 = vmatprep.subr.bf16.mxu0 0
        %348 = vmatpush1.bf16.xpose.msra.mxu0 0
        %349 = vmatprep.subr.bf16.mxu0 0
        %350 = vmatpush1.bf16.xpose.msra.mxu0 0
        %351 = vmatprep.subr.bf16.mxu0 0
        %352 = vmatpush1.bf16.xpose.msra.mxu0 0
        %353 = vmatprep.subr.bf16.mxu0 0
        %354 = vmatpush1.bf16.xpose.msra.mxu0 0
        %355 = vmatprep.subr.bf16.mxu0 0
        %356 = vmatpush1.bf16.xpose.msra.mxu0 0
        %357 = vmatprep.subr.bf16.mxu0 0
        %358 = vmatpush1.bf16.xpose.msra.mxu0 0
        %359 = vmatprep.subr.bf16.mxu0 0
        %360 = vmatpush1.bf16.xpose.msra.mxu0 0
        %361 = vmatprep.subr.bf16.mxu0 0
        %362 = vmatpush1.bf16.xpose.msra.mxu0 0
        %363 = vmatprep.subr.bf16.mxu0 0
        %364 = vmatpush1.bf16.xpose.msra.mxu0 0
        %365 = vmatprep.subr.bf16.mxu0 0
        %366 = vmatpush1.bf16.xpose.msra.mxu0 0
        %367 = vmatprep.subr.bf16.mxu0 0
        %368 = vmatpush1.bf16.xpose.msra.mxu0 0
        %369 = vmatprep.subr.bf16.mxu0 0
        %370 = vmatpush1.bf16.xpose.msra.mxu0 0
        %371 = vmatprep.subr.bf16.mxu0 0
        %372 = vmatpush1.bf16.xpose.msra.mxu0 0
        %373 = vmatprep.subr.bf16.mxu0 0
        %374 = vmatpush1.bf16.xpose.msra.mxu0 0
        %375 = vmatprep.subr.bf16.mxu0 0
        %376 = vmatpush1.bf16.xpose.msra.mxu0 0
        %377 = vmatprep.mubr.bf16.mxu0 0
        %378 = vmatmul.mubr.bf16.gmra.mrb[0].mxu0 %v340
        %v379 = vpop.f32.mrb[0].mxu0
        %v380 = vadd.f32 0.0, %v379
        %v381 = vpop.f32.mrb[0].mxu0
        %v382 = vpop.f32.mrb[0].mxu0
        %v383 = vpop.f32.mrb[0].mxu0
        %384 = vdwg.mxu0
        %v385 = vlaneseq
        %v386 = vshrl.u32 %v385, 7
        %v387 = vstv %s330
        %v388 = vadd.s32 %v387, %v386
        %v389 = vlaneseq
        %v390 = vand.u32 %v389, 127
        %v391 = vstv %s329
        %v392 = vadd.s32 %v391, %v390
        %vm393 = vcmp.le.s32.totalorder %v392, %v388
        %v394 = vsel %vm393, %v380, -1e+30
        %v395 = vld [vmem:[#allocation2] sm:$0xff]
        %vm396 = vcmask 64512
        %v397 = vsel %vm396, %v394, -inf
        %398 = vmax.xlane.f32.xlu0 %v397
        %v399 = vpop.xlane.xlu0 %398
        %v400 = vmax.f32 %v395, %v399
        %v401 = vsub.f32 %v395, %v400
        %v402 = vmul.f32 %v401, 1.442695
        %v403 = vpow.pop %v402
        %405 = vset.pattern.permute.xlu0 0
        %406 = vperm.xlu0 %405, %v400
        %v407 = vpop.permute.xlu0 %406
        %v409 = vsub.f32 %v394, %v407
        %v410 = vmul.f32 %v409, 1.442695
        %v411 = vpow.pop %v410
        %v412 = vld [vmem:[#allocation3] sm:$0xff]
        %v413 = vmul.f32 %v403, %v412
        %v414 = vsel %vm396, %v411, 0.0
        %415 = vadd.xlane.f32.xlu0 %v414
        %v416 = vpop.xlane.xlu0 %415
        %v417 = vadd.f32 %v413, %v416
        %vm418 = vcmask 7168
        %419 = vst.msk [vmem:[#allocation3] sm:$0xff] %vm418, %v417
        %v420 = vld [vmem:[#allocation4] sm:$0xff]
        %422 = vset.pattern.permute.xlu0 0
        %423 = vperm.xlu0 %422, %v403
        %v424 = vpop.permute.xlu0 %423
        %v426 = vmul.f32 %v424, %v420
        %v427 = vpack.c.bf16 %v411, %v411
        %v428 = vld [vmem:[%s307] sm:$0xf]
        %v430 = vsel %vm396, %v427, 0
        %vm432 = vcmask 1043456
        %v434 = vsel %vm432, %v428, 0
        %436 = vmatprep.subr.bf16.mxu0 0
        %437 = vmatpush1.bf16.msra.mxu0 %v434
        %438 = vmatprep.subr.bf16.mxu0 0
        %439 = vmatpush1.bf16.msra.mxu0 0
        %440 = vmatprep.subr.bf16.mxu0 0
        %441 = vmatpush1.bf16.msra.mxu0 0
        %442 = vmatprep.subr.bf16.mxu0 0
        %443 = vmatpush1.bf16.msra.mxu0 0
        %444 = vmatprep.subr.bf16.mxu0 0
        %445 = vmatpush1.bf16.msra.mxu0 0
        %446 = vmatprep.subr.bf16.mxu0 0
        %447 = vmatpush1.bf16.msra.mxu0 0
        %448 = vmatprep.subr.bf16.mxu0 0
        %449 = vmatpush1.bf16.msra.mxu0 0
        %450 = vmatprep.subr.bf16.mxu0 0
        %451 = vmatpush1.bf16.msra.mxu0 0
        %452 = vmatprep.subr.bf16.mxu0 0
        %453 = vmatpush1.bf16.msra.mxu0 0
        %454 = vmatprep.subr.bf16.mxu0 0
        %455 = vmatpush1.bf16.msra.mxu0 0
        %456 = vmatprep.subr.bf16.mxu0 0
        %457 = vmatpush1.bf16.msra.mxu0 0
        %458 = vmatprep.subr.bf16.mxu0 0
        %459 = vmatpush1.bf16.msra.mxu0 0
        %460 = vmatprep.subr.bf16.mxu0 0
        %461 = vmatpush1.bf16.msra.mxu0 0
        %462 = vmatprep.subr.bf16.mxu0 0
        %463 = vmatpush1.bf16.msra.mxu0 0
        %464 = vmatprep.subr.bf16.mxu0 0
        %465 = vmatpush1.bf16.msra.mxu0 0
        %466 = vmatprep.subr.bf16.mxu0 0
        %467 = vmatpush1.bf16.msra.mxu0 0
        %468 = vmatprep.mubr.bf16.mxu0 0
        %469 = vmatmul.mubr.bf16.gmra.mrb[0].mxu0 %v430
        %v470 = vpop.f32.mrb[0].mxu0
        %v471 = vadd.f32 0.0, %v470
        %v472 = vpop.f32.mrb[0].mxu0
        %v473 = vpop.f32.mrb[0].mxu0
        %v474 = vpop.f32.mrb[0].mxu0
        %475 = vdwg.mxu0
        %v476 = vadd.f32 %v426, %v471
        %477 = vst.msk [vmem:[#allocation4] sm:$0xff] %vm338, %v476
        %478 = vst.msk [vmem:[#allocation2] sm:$0xff] %vm418, %v400
      $region40: #{transformer_forward.14} parent=31 // pred_fallthru
        _
      // Predicated region
      $region41: #{transformer_forward.14} parent=31 // pred_check
        %p479 = pneg %p320
      $region42: #{transformer_forward.14} parent=31 // pred_check_branch
        %481 = sbr.rel (%p479) target = $region44
      $region43: #{transformer_forward.14} parent=31 // pred_region
        %v482 = vld [vmem:[#allocation3] sm:$0xff]
        %v483 = vrcp.pop %v482
        %v484 = vld [vmem:[#allocation4] sm:$0xff]
        %486 = vset.pattern.permute.xlu0 0
        %487 = vperm.xlu0 %486, %v483
        %v488 = vpop.permute.xlu0 %487
        %v490 = vmul.f32 %v484, %v488
        %v491 = vpack.c.bf16 %v490, %v490
        %vm492 = vcmask 125952
        %493 = vst.msk [vmem:[%s318] sm:$0xf] %vm492, %v491
      $region44: #{transformer_forward.14} parent=31 // pred_fallthru
        _
      %p494 = scmp.lt.s32.totalorder %s20, 1
      %s495 = scalar_select %p494, %s20, 1
      %p496 = scmp.lt.s32.totalorder %s21, 1
      %s497 = scalar_select %p496, %s21, 1
      %p498 = scmp.lt.s32.totalorder %s22, 0
      %s499 = scalar_select %p498, %s22, 0
      %s500 = sadd.s32 %s499, %s497
      %s501 = smul.addr %s495, 2
      %s502 = sadd.s32 %s500, %s501
      %s503 = smul.addr %s502, 4
      %s504 = scalar_lea.vmem %s3, %s503
      // Predicated region
      $region45: #{transformer_forward.14} parent=31 // pred_check
        %p505 = pneg %p152
      $region46: #{transformer_forward.14} parent=31 // pred_check_branch
        %507 = sbr.rel (%p505) target = $region48
      $region47: #{transformer_forward.14} parent=31 // pred_region
        _
      $region48: #{transformer_forward.14} parent=31 // pred_fallthru
        _
    $region32: #{transformer_forward.14} parent=5 // pred_fallthru
      _
    %p508 = scmp.le.s32.totalorder 2, %s9
    // Predicated region
    $region49: #{transformer_forward.14} parent=5 // pred_check
      %p509 = pneg %p508
    $region50: #{transformer_forward.14} parent=5 // pred_check_branch
      %511 = sbr.rel (%p509) target = $region52
    $region51: #{transformer_forward.14} parent=5 // pred_region
      %s512 = ssub.s32 %s9, 2
      // Predicated region
      $region53: #{transformer_forward.14} parent=51 // pred_check
        %p513 = pneg %p158
      $region54: #{transformer_forward.14} parent=51 // pred_check_branch
        %515 = sbr.rel (%p513) target = $region56
      $region55: #{transformer_forward.14} parent=51 // pred_region
        %p516 = scmp.lt.s32.totalorder %s24, 1
        %s517 = scalar_select %p516, %s24, 1
        %p518 = scmp.lt.s32.totalorder %s25, 1
        %s519 = scalar_select %p518, %s25, 1
        %p520 = scmp.lt.s32.totalorder %s26, 0
        %s521 = scalar_select %p520, %s26, 0
        %s522 = sadd.s32 %s521, %s519
        %s523 = smul.addr %s517, 2
        %s524 = sadd.s32 %s522, %s523
        %s525 = smul.addr %s524, 4
        %s526 = scalar_lea.vmem %s3, %s525
      $region56: #{transformer_forward.14} parent=51 // pred_fallthru
        _
    $region52: #{transformer_forward.14} parent=5 // pred_fallthru
      _
  $region6: #{transformer_forward.14} parent=0 // loop_footer
    %s13 = sadd.s32 1, %s9
  $region7: #{transformer_forward.14} parent=0 // loop_footer_branch
    %8 = sbr.rel target = $region3
  $region8: #{transformer_forward.14} parent=0 // loop_exit
    _

// kernel: transformer_forward.13
$region0: #{transformer_forward.13}
  #allocation0 [shape = 'u32[]', space=smem, size = 0x4, offset = 0x4, fixed_abs, tag = 'smem constant byte address 0x4 - core index']
  #allocation1 [shape = 'u32[144,128]{1,0:T(1,128)}', space=vmem, size = 0x12000, scoped, tag = 'internal scratch']
  #allocation2 [shape = 'f32[8,16]{1,0:T(8,128)}', space=vmem, size = 0x1000, scoped, tag = 'scratch operand']
  #allocation3 [shape = 'f32[8,16]{1,0:T(8,128)}', space=vmem, size = 0x1000, scoped, tag = 'scratch operand']
  #allocation4 [shape = 'f32[8,16]{1,0:T(8,128)}', space=vmem, size = 0x1000, scoped, tag = 'scratch operand']
  %s0 = inlined_call_operand.vmem [shape: f32[2,8,32], index: 0, kind: input, shape index: {}]
  %s1 = inlined_call_operand.vmem [shape: bf16[2,32,16], index: 1, kind: input, shape index: {}]
  %s2 = inlined_call_operand.vmem [shape: bf16[2,32,16], index: 2, kind: input, shape index: {}]
  %s3 = inlined_call_operand.vmem [shape: bf16[2,32,16], index: 3, kind: input, shape index: {}]
  %s4 = inlined_call_operand.vmem [shape: f32[2,1,16], index: 4, kind: input, shape index: {}]
  %s5 = inlined_call_operand.vmem [shape: f32[2,1,16], index: 5, kind: input, shape index: {}]
  %s6 = inlined_call_operand.vmem [shape: f32[2,1,16], index: 6, kind: input, shape index: {}]
  %s7 = inlined_call_operand.vmem [shape: bf16[2,2,8,16], index: 7, kind: output, shape index: {0}]
  %s8 = inlined_call_operand.vmem [shape: bf16[2,2,8,16], index: 8, kind: output, shape index: {1}]
  %s9 = inlined_call_operand.vmem [shape: bf16[2,2,8,16], index: 9, kind: output, shape index: {2}]
  %10 = xla_tuple %s7, %s8, %s9
  %s11 = sld [smem:[#allocation0]]
  $region85: #{transformer_forward.13} parent=0
    _
  %s13 = ssub.s32 1, %s11
  %s14 = scalar_select 0, %s13, %s11
  loop: start=0, step=1, limit=6
  $region2: #{transformer_forward.13} parent=0 // loop_pre_header
    _
  $region3: #{transformer_forward.13} parent=0 // loop_header
    %s16 = sphi 0, %s20
    %p17 = scmp.ge.s32.totalorder %s16, 6
    %s23 = sphi 0, %s49
    %s24 = sphi 0, %s45
    %s25 = sphi 0, %s41
    %s26 = sphi 0, %s37
    %s27 = sphi 0, %s23
    %s28 = sphi 0, %s24
    %s29 = sphi 0, %s25
    %s30 = sphi 0, %s26
    %s31 = sphi 0, %s27
    %s32 = sphi 0, %s28
    %s33 = sphi 0, %s29
    %s34 = sphi 0, %s30
    %s56 = sphi 0, %s58
    %s59 = sphi 0, %s56
    %s60 = sphi 0, %s59
    %s76 = sphi 0, %s60
    %s84 = sphi 0, %s86
    %s87 = sphi 0, %s84
    %s88 = sphi 0, %s87
    %s104 = sphi 0, %s88
    %s112 = sphi 0, %s114
    %s115 = sphi 0, %s112
    %s116 = sphi 0, %s115
    %s132 = sphi 0, %s116
    %s140 = sphi 0, %s142
    %s143 = sphi 0, %s140
    %s144 = sphi 0, %s143
    %s160 = sphi 0, %s144
    %s166 = sphi 0, %s168
    %s169 = sphi 0, %s166
    %s170 = sphi 0, %s169
    %s186 = sphi 0, %s170
    %s192 = sphi 0, %s194
    %s195 = sphi 0, %s192
    %s196 = sphi 0, %s195
    %s212 = sphi 0, %s196
    %s218 = sphi 0, %s220
    %s221 = sphi 0, %s218
    %s222 = sphi 0, %s221
    %s238 = sphi 0, %s222
    %s248 = sphi 0, %s250
    %s251 = sphi 0, %s248
    %s252 = sphi 0, %s251
    %s268 = sphi 0, %s252
    %s278 = sphi 0, %s280
    %s281 = sphi 0, %s278
    %s282 = sphi 0, %s281
    %s298 = sphi 0, %s282
    %s308 = sphi 0, %s310
    %s311 = sphi 0, %s308
    %s312 = sphi 0, %s311
    %s328 = sphi 0, %s312
  $region4: #{transformer_forward.13} parent=0 // loop_header_branch
    %19 = sbr.rel (%p17) target = $region8
  $region5: #{transformer_forward.13} parent=0 // loop_body
    %s21 = ssub.s32 %s16, 1
    %s22 = ssub.s32 %s16, 2
    %s35 = sadd.s32 1, %s26
    %p36 = scmp.ge.s32.totalorder %s35, 1
    %s37 = scalar_select %p36, 0, %s35
    %s38 = sadd.s32 1, %s25
    %s39 = scalar_select %p36, %s38, %s25
    %p40 = scmp.ge.s32.totalorder %s39, 1
    %s41 = scalar_select %p40, 0, %s39
    %s42 = sadd.s32 1, %s24
    %s43 = scalar_select %p40, %s42, %s24
    %p44 = scmp.ge.s32.totalorder %s43, 2
    %s45 = scalar_select %p44, 0, %s43
    %s46 = sadd.s32 1, %s23
    %s47 = scalar_select %p44, %s46, %s23
    %p48 = scmp.ge.s32.totalorder %s47, 2
    %s49 = scalar_select %p48, 0, %s47
    %s50 = ssub.s32 %s23, %s49
    %s51 = ssub.s32 %s25, %s41
    %s52 = sor.u32 %s50, %s51
    %s53 = ssub.s32 %s26, %s37
    %s54 = sor.u32 %s52, %s53
    %p55 = scmp.eq.s32.totalorder %s54, 0
    %s57 = sadd.s32 %s56, 1
    %s58 = scalar_select %p55, %s56, %s57
    %p61 = pneg %p55
    %p62 = scmp.eq.s32.totalorder %s16, 3
    %p63 = por %p61, %p62
    %p64 = scmp.ne.s32.totalorder %s56, %s59
    %p65 = scmp.eq.s32.totalorder %s16, 0
    %p66 = por %p64, %p65
    %p67 = scmp.ne.s32.totalorder %s56, %s59
    %p68 = scmp.eq.s32.totalorder %s21, 3
    %p69 = por %p67, %p68
    %p70 = scmp.ne.s32.totalorder %s59, %s60
    %p71 = scmp.eq.s32.totalorder %s21, 0
    %p72 = por %p70, %p71
    %p73 = scmp.ne.s32.totalorder %s59, %s60
    %p74 = scmp.eq.s32.totalorder %s22, 3
    %p75 = por %p73, %p74
    %p77 = scmp.ne.s32.totalorder %s60, %s76
    %p78 = scmp.eq.s32.totalorder %s22, 0
    %p79 = por %p77, %p78
    %s80 = ssub.s32 %s24, %s45
    %s81 = ssub.s32 %s26, %s37
    %s82 = sor.u32 %s80, %s81
    %p83 = scmp.eq.s32.totalorder %s82, 0
    %s85 = sadd.s32 %s84, 1
    %s86 = scalar_select %p83, %s84, %s85
    %p89 = pneg %p83
    %p90 = scmp.eq.s32.totalorder %s16, 3
    %p91 = por %p89, %p90
    %p92 = scmp.ne.s32.totalorder %s84, %s87
    %p93 = scmp.eq.s32.totalorder %s16, 0
    %p94 = por %p92, %p93
    %p95 = scmp.ne.s32.totalorder %s84, %s87
    %p96 = scmp.eq.s32.totalorder %s21, 3
    %p97 = por %p95, %p96
    %p98 = scmp.ne.s32.totalorder %s87, %s88
    %p99 = scmp.eq.s32.totalorder %s21, 0
    %p100 = por %p98, %p99
    %p101 = scmp.ne.s32.totalorder %s87, %s88
    %p102 = scmp.eq.s32.totalorder %s22, 3
    %p103 = por %p101, %p102
    %p105 = scmp.ne.s32.totalorder %s88, %s104
    %p106 = scmp.eq.s32.totalorder %s22, 0
    %p107 = por %p105, %p106
    %s108 = ssub.s32 %s24, %s45
    %s109 = ssub.s32 %s26, %s37
    %s110 = sor.u32 %s108, %s109
    %p111 = scmp.eq.s32.totalorder %s110, 0
    %s113 = sadd.s32 %s112, 1
    %s114 = scalar_select %p111, %s112, %s113
    %p117 = pneg %p111
    %p118 = scmp.eq.s32.totalorder %s16, 3
    %p119 = por %p117, %p118
    %p120 = scmp.ne.s32.totalorder %s112, %s115
    %p121 = scmp.eq.s32.totalorder %s16, 0
    %p122 = por %p120, %p121
    %p123 = scmp.ne.s32.totalorder %s112, %s115
    %p124 = scmp.eq.s32.totalorder %s21, 3
    %p125 = por %p123, %p124
    %p126 = scmp.ne.s32.totalorder %s115, %s116
    %p127 = scmp.eq.s32.totalorder %s21, 0
    %p128 = por %p126, %p127
    %p129 = scmp.ne.s32.totalorder %s115, %s116
    %p130 = scmp.eq.s32.totalorder %s22, 3
    %p131 = por %p129, %p130
    %p133 = scmp.ne.s32.totalorder %s116, %s132
    %p134 = scmp.eq.s32.totalorder %s22, 0
    %p135 = por %p133, %p134
    %s136 = ssub.s32 %s24, %s45
    %s137 = ssub.s32 %s26, %s37
    %s138 = sor.u32 %s136, %s137
    %p139 = scmp.eq.s32.totalorder %s138, 0
    %s141 = sadd.s32 %s140, 1
    %s142 = scalar_select %p139, %s140, %s141
    %p145 = pneg %p139
    %p146 = scmp.eq.s32.totalorder %s16, 3
    %p147 = por %p145, %p146
    %p148 = scmp.ne.s32.totalorder %s140, %s143
    %p149 = scmp.eq.s32.totalorder %s16, 0
    %p150 = por %p148, %p149
    %p151 = scmp.ne.s32.totalorder %s140, %s143
    %p152 = scmp.eq.s32.totalorder %s21, 3
    %p153 = por %p151, %p152
    %p154 = scmp.ne.s32.totalorder %s143, %s144
    %p155 = scmp.eq.s32.totalorder %s21, 0
    %p156 = por %p154, %p155
    %p157 = scmp.ne.s32.totalorder %s143, %s144
    %p158 = scmp.eq.s32.totalorder %s22, 3
    %p159 = por %p157, %p158
    %p161 = scmp.ne.s32.totalorder %s144, %s160
    %p162 = scmp.eq.s32.totalorder %s22, 0
    %p163 = por %p161, %p162
    %s164 = ssub.s32 %s24, %s45
    %p165 = scmp.eq.s32.totalorder %s164, 0
    %s167 = sadd.s32 %s166, 1
    %s168 = scalar_select %p165, %s166, %s167
    %p171 = pneg %p165
    %p172 = scmp.eq.s32.totalorder %s16, 3
    %p173 = por %p171, %p172
    %p174 = scmp.ne.s32.totalorder %s166, %s169
    %p175 = scmp.eq.s32.totalorder %s16, 0
    %p176 = por %p174, %p175
    %p177 = scmp.ne.s32.totalorder %s166, %s169
    %p178 = scmp.eq.s32.totalorder %s21, 3
    %p179 = por %p177, %p178
    %p180 = scmp.ne.s32.totalorder %s169, %s170
    %p181 = scmp.eq.s32.totalorder %s21, 0
    %p182 = por %p180, %p181
    %p183 = scmp.ne.s32.totalorder %s169, %s170
    %p184 = scmp.eq.s32.totalorder %s22, 3
    %p185 = por %p183, %p184
    %p187 = scmp.ne.s32.totalorder %s170, %s186
    %p188 = scmp.eq.s32.totalorder %s22, 0
    %p189 = por %p187, %p188
    %s190 = ssub.s32 %s24, %s45
    %p191 = scmp.eq.s32.totalorder %s190, 0
    %s193 = sadd.s32 %s192, 1
    %s194 = scalar_select %p191, %s192, %s193
    %p197 = pneg %p191
    %p198 = scmp.eq.s32.totalorder %s16, 3
    %p199 = por %p197, %p198
    %p200 = scmp.ne.s32.totalorder %s192, %s195
    %p201 = scmp.eq.s32.totalorder %s16, 0
    %p202 = por %p200, %p201
    %p203 = scmp.ne.s32.totalorder %s192, %s195
    %p204 = scmp.eq.s32.totalorder %s21, 3
    %p205 = por %p203, %p204
    %p206 = scmp.ne.s32.totalorder %s195, %s196
    %p207 = scmp.eq.s32.totalorder %s21, 0
    %p208 = por %p206, %p207
    %p209 = scmp.ne.s32.totalorder %s195, %s196
    %p210 = scmp.eq.s32.totalorder %s22, 3
    %p211 = por %p209, %p210
    %p213 = scmp.ne.s32.totalorder %s196, %s212
    %p214 = scmp.eq.s32.totalorder %s22, 0
    %p215 = por %p213, %p214
    %s216 = ssub.s32 %s24, %s45
    %p217 = scmp.eq.s32.totalorder %s216, 0
    %s219 = sadd.s32 %s218, 1
    %s220 = scalar_select %p217, %s218, %s219
    %p223 = pneg %p217
    %p224 = scmp.eq.s32.totalorder %s16, 3
    %p225 = por %p223, %p224
    %p226 = scmp.ne.s32.totalorder %s218, %s221
    %p227 = scmp.eq.s32.totalorder %s16, 0
    %p228 = por %p226, %p227
    %p229 = scmp.ne.s32.totalorder %s218, %s221
    %p230 = scmp.eq.s32.totalorder %s21, 3
    %p231 = por %p229, %p230
    %p232 = scmp.ne.s32.totalorder %s221, %s222
    %p233 = scmp.eq.s32.totalorder %s21, 0
    %p234 = por %p232, %p233
    %p235 = scmp.ne.s32.totalorder %s221, %s222
    %p236 = scmp.eq.s32.totalorder %s22, 3
    %p237 = por %p235, %p236
    %p239 = scmp.ne.s32.totalorder %s222, %s238
    %p240 = scmp.eq.s32.totalorder %s22, 0
    %p241 = por %p239, %p240
    %s242 = ssub.s32 %s23, %s49
    %s243 = ssub.s32 %s24, %s45
    %s244 = sor.u32 %s242, %s243
    %s245 = ssub.s32 %s25, %s41
    %s246 = sor.u32 %s244, %s245
    %p247 = scmp.eq.s32.totalorder %s246, 0
    %s249 = sadd.s32 %s248, 1
    %s250 = scalar_select %p247, %s248, %s249
    %p253 = pneg %p247
    %p254 = scmp.eq.s32.totalorder %s16, 3
    %p255 = por %p253, %p254
    %p256 = scmp.ne.s32.totalorder %s248, %s251
    %p257 = scmp.eq.s32.totalorder %s16, 0
    %p258 = por %p256, %p257
    %p259 = scmp.ne.s32.totalorder %s248, %s251
    %p260 = scmp.eq.s32.totalorder %s21, 3
    %p261 = por %p259, %p260
    %p262 = scmp.ne.s32.totalorder %s251, %s252
    %p263 = scmp.eq.s32.totalorder %s21, 0
    %p264 = por %p262, %p263
    %p265 = scmp.ne.s32.totalorder %s251, %s252
    %p266 = scmp.eq.s32.totalorder %s22, 3
    %p267 = por %p265, %p266
    %p269 = scmp.ne.s32.totalorder %s252, %s268
    %p270 = scmp.eq.s32.totalorder %s22, 0
    %p271 = por %p269, %p270
    %s272 = ssub.s32 %s23, %s49
    %s273 = ssub.s32 %s24, %s45
    %s274 = sor.u32 %s272, %s273
    %s275 = ssub.s32 %s25, %s41
    %s276 = sor.u32 %s274, %s275
    %p277 = scmp.eq.s32.totalorder %s276, 0
    %s279 = sadd.s32 %s278, 1
    %s280 = scalar_select %p277, %s278, %s279
    %p283 = pneg %p277
    %p284 = scmp.eq.s32.totalorder %s16, 3
    %p285 = por %p283, %p284
    %p286 = scmp.ne.s32.totalorder %s278, %s281
    %p287 = scmp.eq.s32.totalorder %s16, 0
    %p288 = por %p286, %p287
    %p289 = scmp.ne.s32.totalorder %s278, %s281
    %p290 = scmp.eq.s32.totalorder %s21, 3
    %p291 = por %p289, %p290
    %p292 = scmp.ne.s32.totalorder %s281, %s282
    %p293 = scmp.eq.s32.totalorder %s21, 0
    %p294 = por %p292, %p293
    %p295 = scmp.ne.s32.totalorder %s281, %s282
    %p296 = scmp.eq.s32.totalorder %s22, 3
    %p297 = por %p295, %p296
    %p299 = scmp.ne.s32.totalorder %s282, %s298
    %p300 = scmp.eq.s32.totalorder %s22, 0
    %p301 = por %p299, %p300
    %s302 = ssub.s32 %s23, %s49
    %s303 = ssub.s32 %s24, %s45
    %s304 = sor.u32 %s302, %s303
    %s305 = ssub.s32 %s25, %s41
    %s306 = sor.u32 %s304, %s305
    %p307 = scmp.eq.s32.totalorder %s306, 0
    %s309 = sadd.s32 %s308, 1
    %s310 = scalar_select %p307, %s308, %s309
    %p313 = pneg %p307
    %p314 = scmp.eq.s32.totalorder %s16, 3
    %p315 = por %p313, %p314
    %p316 = scmp.ne.s32.totalorder %s308, %s311
    %p317 = scmp.eq.s32.totalorder %s16, 0
    %p318 = por %p316, %p317
    %p319 = scmp.ne.s32.totalorder %s308, %s311
    %p320 = scmp.eq.s32.totalorder %s21, 3
    %p321 = por %p319, %p320
    %p322 = scmp.ne.s32.totalorder %s311, %s312
    %p323 = scmp.eq.s32.totalorder %s21, 0
    %p324 = por %p322, %p323
    %p325 = scmp.ne.s32.totalorder %s311, %s312
    %p326 = scmp.eq.s32.totalorder %s22, 3
    %p327 = por %p325, %p326
    %p329 = scmp.ne.s32.totalorder %s312, %s328
    %p330 = scmp.eq.s32.totalorder %s22, 0
    %p331 = por %p329, %p330
    %p332 = scmp.le.s32.totalorder 1, %s16
    %p333 = scmp.lt.s32.totalorder %s16, 5
    %p334 = pnand %p332, %p333
    %p335 = pneg %p334
    // Predicated region
    $region9: #{transformer_forward.13} parent=5 // pred_check
      _
    $region10: #{transformer_forward.13} parent=5 // pred_check_branch
      %337 = sbr.rel (%p334) target = $region12
    $region11: #{transformer_forward.13} parent=5 // pred_region
      %s338 = ssub.s32 %s16, 1
    $region12: #{transformer_forward.13} parent=5 // pred_fallthru
      _
    %p339 = scmp.lt.s32.totalorder %s16, 4
    // Predicated region
    $region13: #{transformer_forward.13} parent=5 // pred_check
      %p340 = pneg %p339
    $region14: #{transformer_forward.13} parent=5 // pred_check_branch
      %342 = sbr.rel (%p340) target = $region16
    $region15: #{transformer_forward.13} parent=5 // pred_region
      // Predicated region
      $region17: #{transformer_forward.13} parent=15 // pred_check
        %p343 = pneg %p66
      $region18: #{transformer_forward.13} parent=15 // pred_check_branch
        %345 = sbr.rel (%p343) target = $region20
      $region19: #{transformer_forward.13} parent=15 // pred_region
        %p346 = scmp.lt.s32.totalorder %s23, 1
        %s347 = scalar_select %p346, %s23, 1
        %p348 = scmp.lt.s32.totalorder %s25, 0
        %s349 = scalar_select %p348, %s25, 0
        %p350 = scmp.lt.s32.totalorder %s26, 0
        %s351 = scalar_select %p350, %s26, 0
        %s352 = sadd.s32 %s351, %s349
        %s353 = sadd.s32 %s352, %s347
        %s354 = smul.addr %s353, 8
        %s355 = scalar_lea.vmem %s0, %s354
      $region20: #{transformer_forward.13} parent=15 // pred_fallthru
        _
      // Predicated region
      $region21: #{transformer_forward.13} parent=15 // pred_check
        %p356 = pneg %p94
      $region22: #{transformer_forward.13} parent=15 // pred_check_branch
        %358 = sbr.rel (%p356) target = $region24
      $region23: #{transformer_forward.13} parent=15 // pred_region
        %s359 = smul.u32 4, %s26
        %p360 = scmp.lt.s32.totalorder %s24, 1
        %s361 = scalar_select %p360, %s24, 1
        %p362 = scmp.lt.s32.totalorder %s359, 3
        %s363 = scalar_select %p362, %s359, 3
        %s364 = smul.addr %s361, 4
        %s365 = sadd.s32 %s363, %s364
        %s366 = smul.addr %s365, 4
        %s367 = scalar_lea.vmem %s1, %s366
        %s368 = smul.u32 4, %s26
      $region24: #{transformer_forward.13} parent=15 // pred_fallthru
        _
      // Predicated region
      $region25: #{transformer_forward.13} parent=15 // pred_check
        %p369 = pneg %p122
      $region26: #{transformer_forward.13} parent=15 // pred_check_branch
        %371 = sbr.rel (%p369) target = $region28
      $region27: #{transformer_forward.13} parent=15 // pred_region
        %s372 = smul.u32 4, %s26
        %p373 = scmp.lt.s32.totalorder %s24, 1
        %s374 = scalar_select %p373, %s24, 1
        %p375 = scmp.lt.s32.totalorder %s372, 3
        %s376 = scalar_select %p375, %s372, 3
        %s377 = smul.addr %s374, 4
        %s378 = sadd.s32 %s376, %s377
        %s379 = smul.addr %s378, 4
        %s380 = scalar_lea.vmem %s2, %s379
        %s381 = smul.u32 4, %s26
      $region28: #{transformer_forward.13} parent=15 // pred_fallthru
        _
      // Predicated region
      $region29: #{transformer_forward.13} parent=15 // pred_check
        %p382 = pneg %p150
      $region30: #{transformer_forward.13} parent=15 // pred_check_branch
        %384 = sbr.rel (%p382) target = $region32
      $region31: #{transformer_forward.13} parent=15 // pred_region
        %s385 = smul.u32 4, %s26
        %p386 = scmp.lt.s32.totalorder %s24, 1
        %s387 = scalar_select %p386, %s24, 1
        %p388 = scmp.lt.s32.totalorder %s385, 3
        %s389 = scalar_select %p388, %s385, 3
        %s390 = smul.addr %s387, 4
        %s391 = sadd.s32 %s389, %s390
        %s392 = smul.addr %s391, 4
        %s393 = scalar_lea.vmem %s3, %s392
        %s394 = smul.u32 4, %s26
      $region32: #{transformer_forward.13} parent=15 // pred_fallthru
        _
      // Predicated region
      $region33: #{transformer_forward.13} parent=15 // pred_check
        %p395 = pneg %p176
      $region34: #{transformer_forward.13} parent=15 // pred_check_branch
        %397 = sbr.rel (%p395) target = $region36
      $region35: #{transformer_forward.13} parent=15 // pred_region
        %p398 = scmp.lt.s32.totalorder %s24, 1
        %s399 = scalar_select %p398, %s24, 1
        %s400 = scalar_lea.vmem %s4, %s399
      $region36: #{transformer_forward.13} parent=15 // pred_fallthru
        _
      // Predicated region
      $region37: #{transformer_forward.13} parent=15 // pred_check
        %p401 = pneg %p202
      $region38: #{transformer_forward.13} parent=15 // pred_check_branch
        %403 = sbr.rel (%p401) target = $region40
      $region39: #{transformer_forward.13} parent=15 // pred_region
        %p404 = scmp.lt.s32.totalorder %s24, 1
        %s405 = scalar_select %p404, %s24, 1
        %s406 = scalar_lea.vmem %s5, %s405
      $region40: #{transformer_forward.13} parent=15 // pred_fallthru
        _
      // Predicated region
      $region41: #{transformer_forward.13} parent=15 // pred_check
        %p407 = pneg %p228
      $region42: #{transformer_forward.13} parent=15 // pred_check_branch
        %409 = sbr.rel (%p407) target = $region44
      $region43: #{transformer_forward.13} parent=15 // pred_region
        %p410 = scmp.lt.s32.totalorder %s24, 1
        %s411 = scalar_select %p410, %s24, 1
        %s412 = scalar_lea.vmem %s6, %s411
      $region44: #{transformer_forward.13} parent=15 // pred_fallthru
        _
    $region16: #{transformer_forward.13} parent=5 // pred_fallthru
      _
    %p413 = scmp.le.s32.totalorder 1, %s16
    %p414 = scmp.lt.s32.totalorder %s16, 5
    %p415 = pnand %p413, %p414
    %p416 = pneg %p415
    // Predicated region
    $region45: #{transformer_forward.13} parent=5 // pred_check
      _
    $region46: #{transformer_forward.13} parent=5 // pred_check_branch
      %418 = sbr.rel (%p415) target = $region48
    $region47: #{transformer_forward.13} parent=5 // pred_region
      %s419 = ssub.s32 %s16, 1
      %p420 = scmp.lt.s32.totalorder %s27, 1
      %s421 = scalar_select %p420, %s27, 1
      %p422 = scmp.lt.s32.totalorder %s29, 0
      %s423 = scalar_select %p422, %s29, 0
      %p424 = scmp.lt.s32.totalorder %s30, 0
      %s425 = scalar_select %p424, %s30, 0
      %s426 = sadd.s32 %s425, %s423
      %s427 = sadd.s32 %s426, %s421
      %s428 = smul.addr %s427, 8
      %s429 = scalar_lea.vmem %s0, %s428
      %p430 = pneg %p72
      %p431 = pneg %p69
      %s432 = smul.u32 4, %s30
      %p433 = scmp.lt.s32.totalorder %s28, 1
      %s434 = scalar_select %p433, %s28, 1
      %p435 = scmp.lt.s32.totalorder %s432, 3
      %s436 = scalar_select %p435, %s432, 3
      %s437 = smul.addr %s434, 4
      %s438 = sadd.s32 %s436, %s437
      %s439 = smul.addr %s438, 4
      %s440 = scalar_lea.vmem %s1, %s439
      %p441 = pneg %p100
      %p442 = pneg %p97
      %s443 = smul.u32 4, %s30
      %p444 = scmp.lt.s32.totalorder %s28, 1
      %s445 = scalar_select %p444, %s28, 1
      %p446 = scmp.lt.s32.totalorder %s443, 3
      %s447 = scalar_select %p446, %s443, 3
      %s448 = smul.addr %s445, 4
      %s449 = sadd.s32 %s447, %s448
      %s450 = smul.addr %s449, 4
      %s451 = scalar_lea.vmem %s2, %s450
      %p452 = pneg %p128
      %p453 = pneg %p125
      %s454 = smul.u32 4, %s30
      %p455 = scmp.lt.s32.totalorder %s28, 1
      %s456 = scalar_select %p455, %s28, 1
      %p457 = scmp.lt.s32.totalorder %s454, 3
      %s458 = scalar_select %p457, %s454, 3
      %s459 = smul.addr %s456, 4
      %s460 = sadd.s32 %s458, %s459
      %s461 = smul.addr %s460, 4
      %s462 = scalar_lea.vmem %s3, %s461
      %p463 = pneg %p156
      %p464 = pneg %p153
      %p465 = scmp.lt.s32.totalorder %s28, 1
      %s466 = scalar_select %p465, %s28, 1
      %s467 = scalar_lea.vmem %s4, %s466
      %p468 = pneg %p182
      %p469 = pneg %p179
      %p470 = scmp.lt.s32.totalorder %s28, 1
      %s471 = scalar_select %p470, %s28, 1
      %s472 = scalar_lea.vmem %s5, %s471
      %p473 = pneg %p208
      %p474 = pneg %p205
      %p475 = scmp.lt.s32.totalorder %s28, 1
      %s476 = scalar_select %p475, %s28, 1
      %s477 = scalar_lea.vmem %s6, %s476
      %p478 = pneg %p234
      %p479 = pneg %p231
      %p480 = pneg %p264
      %p481 = pneg %p261
      %p482 = scmp.lt.s32.totalorder %s27, 1
      %s483 = scalar_select %p482, %s27, 1
      %p484 = scmp.lt.s32.totalorder %s28, 1
      %s485 = scalar_select %p484, %s28, 1
      %p486 = scmp.lt.s32.totalorder %s29, 0
      %s487 = scalar_select %p486, %s29, 0
      %s488 = sadd.s32 %s487, %s485
      %s489 = smul.addr %s483, 2
      %s490 = sadd.s32 %s488, %s489
      %s491 = smul.addr %s490, 4
      %s492 = scalar_lea.vmem %s7, %s491
      %p493 = pneg %p294
      %p494 = pneg %p291
      %p495 = scmp.lt.s32.totalorder %s27, 1
      %s496 = scalar_select %p495, %s27, 1
      %p497 = scmp.lt.s32.totalorder %s28, 1
      %s498 = scalar_select %p497, %s28, 1
      %p499 = scmp.lt.s32.totalorder %s29, 0
      %s500 = scalar_select %p499, %s29, 0
      %s501 = sadd.s32 %s500, %s498
      %s502 = smul.addr %s496, 2
      %s503 = sadd.s32 %s501, %s502
      %s504 = smul.addr %s503, 4
      %s505 = scalar_lea.vmem %s8, %s504
      %p506 = pneg %p324
      %p507 = pneg %p321
      %p508 = scmp.lt.s32.totalorder %s27, 1
      %s509 = scalar_select %p508, %s27, 1
      %p510 = scmp.lt.s32.totalorder %s28, 1
      %s511 = scalar_select %p510, %s28, 1
      %p512 = scmp.lt.s32.totalorder %s29, 0
      %s513 = scalar_select %p512, %s29, 0
      %s514 = sadd.s32 %s513, %s511
      %s515 = smul.addr %s509, 2
      %s516 = sadd.s32 %s514, %s515
      %s517 = smul.addr %s516, 4
      %s518 = scalar_lea.vmem %s9, %s517
      %p519 = scmp.lt.s32.totalorder %s27, 1
      %s520 = scalar_select %p519, %s27, 1
      %p521 = scmp.lt.s32.totalorder %s29, 0
      %s522 = scalar_select %p521, %s29, 0
      %p523 = scmp.lt.s32.totalorder %s30, 0
      %s524 = scalar_select %p523, %s30, 0
      %s525 = sadd.s32 %s524, %s522
      %s526 = sadd.s32 %s525, %s520
      %s527 = smul.addr %s526, 8
      %s528 = scalar_lea.vmem %s0, %s527
      %s529 = smul.u32 4, %s30
      %p530 = scmp.lt.s32.totalorder %s28, 1
      %s531 = scalar_select %p530, %s28, 1
      %p532 = scmp.lt.s32.totalorder %s529, 3
      %s533 = scalar_select %p532, %s529, 3
      %s534 = smul.addr %s531, 4
      %s535 = sadd.s32 %s533, %s534
      %s536 = smul.addr %s535, 4
      %s537 = scalar_lea.vmem %s1, %s536
      %s538 = smul.u32 4, %s30
      %s539 = smul.u32 4, %s30
      %p540 = scmp.lt.s32.totalorder %s28, 1
      %s541 = scalar_select %p540, %s28, 1
      %p542 = scmp.lt.s32.totalorder %s539, 3
      %s543 = scalar_select %p542, %s539, 3
      %s544 = smul.addr %s541, 4
      %s545 = sadd.s32 %s543, %s544
      %s546 = smul.addr %s545, 4
      %s547 = scalar_lea.vmem %s2, %s546
      %s548 = smul.u32 4, %s30
      %s549 = smul.u32 4, %s30
      %p550 = scmp.lt.s32.totalorder %s28, 1
      %s551 = scalar_select %p550, %s28, 1
      %p552 = scmp.lt.s32.totalorder %s549, 3
      %s553 = scalar_select %p552, %s549, 3
      %s554 = smul.addr %s551, 4
      %s555 = sadd.s32 %s553, %s554
      %s556 = smul.addr %s555, 4
      %s557 = scalar_lea.vmem %s3, %s556
      %s558 = smul.u32 4, %s30
      %p559 = scmp.lt.s32.totalorder %s28, 1
      %s560 = scalar_select %p559, %s28, 1
      %s561 = scalar_lea.vmem %s4, %s560
      %p562 = scmp.lt.s32.totalorder %s28, 1
      %s563 = scalar_select %p562, %s28, 1
      %s564 = scalar_lea.vmem %s5, %s563
      %p565 = scmp.lt.s32.totalorder %s28, 1
      %s566 = scalar_select %p565, %s28, 1
      %s567 = scalar_lea.vmem %s6, %s566
      %p568 = scmp.lt.s32.totalorder %s27, 1
      %s569 = scalar_select %p568, %s27, 1
      %p570 = scmp.lt.s32.totalorder %s28, 1
      %s571 = scalar_select %p570, %s28, 1
      %p572 = scmp.lt.s32.totalorder %s29, 0
      %s573 = scalar_select %p572, %s29, 0
      %s574 = sadd.s32 %s573, %s571
      %s575 = smul.addr %s569, 2
      %s576 = sadd.s32 %s574, %s575
      %s577 = smul.addr %s576, 4
      %s578 = scalar_lea.vmem %s7, %s577
      %p579 = scmp.lt.s32.totalorder %s27, 1
      %s580 = scalar_select %p579, %s27, 1
      %p581 = scmp.lt.s32.totalorder %s28, 1
      %s582 = scalar_select %p581, %s28, 1
      %p583 = scmp.lt.s32.totalorder %s29, 0
      %s584 = scalar_select %p583, %s29, 0
      %s585 = sadd.s32 %s584, %s582
      %s586 = smul.addr %s580, 2
      %s587 = sadd.s32 %s585, %s586
      %s588 = smul.addr %s587, 4
      %s589 = scalar_lea.vmem %s8, %s588
      %p590 = scmp.lt.s32.totalorder %s27, 1
      %s591 = scalar_select %p590, %s27, 1
      %p592 = scmp.lt.s32.totalorder %s28, 1
      %s593 = scalar_select %p592, %s28, 1
      %p594 = scmp.lt.s32.totalorder %s29, 0
      %s595 = scalar_select %p594, %s29, 0
      %s596 = sadd.s32 %s595, %s593
      %s597 = smul.addr %s591, 2
      %s598 = sadd.s32 %s596, %s597
      %s599 = smul.addr %s598, 4
      %s600 = scalar_lea.vmem %s9, %s599
      %p602 = scmp.eq.s32.totalorder %s30, 0
      // Predicated region
      $region49: #{transformer_forward.13} parent=47 // pred_check
        %p603 = pneg %p602
      $region50: #{transformer_forward.13} parent=47 // pred_check_branch
        %605 = sbr.rel (%p603) target = $region52
      $region51: #{transformer_forward.13} parent=47 // pred_region
        %vm606 = vcmask 130048
        %607 = vst.msk [vmem:[#allocation2] sm:$0xff] %vm606, 0.0
        %608 = vst.msk [vmem:[#allocation3] sm:$0xff] %vm606, 0.0
        %609 = vst.msk [vmem:[#allocation4] sm:$0xff] %vm606, 0.0
      $region52: #{transformer_forward.13} parent=47 // pred_fallthru
        _
      %v610 = vld [vmem:[%s528] sm:$0xff]
      %v611 = vpack.c.bf16 %v610, %v610
      %v612 = vld [vmem:[#allocation2] sm:$0xff]
      %v613 = vld [vmem:[%s537] sm:$0xf]
      %v614 = vld [vmem:[%s537 + $0x4] sm:$0xf]
      %v615 = vld [vmem:[%s537 + $0x8] sm:$0xf]
      %v616 = vld [vmem:[%s537 + $0xc] sm:$0xf]
      %v621 = vunpack.c.l.b16 %v613
      %v622 = vunpack.c.l.b16 %v614
      %v623 = vunpack.c.l.b16 %v615
      %v624 = vunpack.c.l.b16 %v616
      %v625 = vpack.c.b16 %v622, %v621
      %v626 = vpack.c.b16 %v624, %v623
      %vm629 = vcmask 261120
      %v631 = vsel %vm629, %v611, 0
      %633 = vmatprep.subr.bf16.mxu0 0
      %634 = vmatpush1.bf16.msra.mxu0 %v625
      %635 = vmatprep.subr.bf16.mxu0 0
      %636 = vmatpush1.bf16.msra.mxu0 %v626
      %637 = vmatprep.subr.bf16.mxu0 0
      %638 = vmatpush1.bf16.msra.mxu0 0
      %639 = vmatprep.subr.bf16.mxu0 0
      %640 = vmatpush1.bf16.msra.mxu0 0
      %641 = vmatprep.subr.bf16.mxu0 0
      %642 = vmatpush1.bf16.msra.mxu0 0
      %643 = vmatprep.subr.bf16.mxu0 0
      %644 = vmatpush1.bf16.msra.mxu0 0
      %645 = vmatprep.subr.bf16.mxu0 0
      %646 = vmatpush1.bf16.msra.mxu0 0
      %647 = vmatprep.subr.bf16.mxu0 0
      %648 = vmatpush1.bf16.msra.mxu0 0
      %649 = vmatprep.subr.bf16.mxu0 0
      %650 = vmatpush1.bf16.msra.mxu0 0
      %651 = vmatprep.subr.bf16.mxu0 0
      %652 = vmatpush1.bf16.msra.mxu0 0
      %653 = vmatprep.subr.bf16.mxu0 0
      %654 = vmatpush1.bf16.msra.mxu0 0
      %655 = vmatprep.subr.bf16.mxu0 0
      %656 = vmatpush1.bf16.msra.mxu0 0
      %657 = vmatprep.subr.bf16.mxu0 0
      %658 = vmatpush1.bf16.msra.mxu0 0
      %659 = vmatprep.subr.bf16.mxu0 0
      %660 = vmatpush1.bf16.msra.mxu0 0
      %661 = vmatprep.subr.bf16.mxu0 0
      %662 = vmatpush1.bf16.msra.mxu0 0
      %663 = vmatprep.subr.bf16.mxu0 0
      %664 = vmatpush1.bf16.msra.mxu0 0
      %665 = vmatprep.mubr.bf16.mxu0 0
      %666 = vmatmul.mubr.bf16.gmra.mrb[0].mxu0 %v631
      %v667 = vpop.f32.mrb[0].mxu0
      %v668 = vadd.f32 0.0, %v667
      %v669 = vpop.f32.mrb[0].mxu0
      %v670 = vpop.f32.mrb[0].mxu0
      %v671 = vpop.f32.mrb[0].mxu0
      %672 = vdwg.mxu0
      %v673 = vadd.f32 %v612, %v668
      %vm674 = vcmask 130048
      %675 = vst.msk [vmem:[#allocation2] sm:$0xff] %vm674, %v673
      %v676 = vld [vmem:[#allocation3] sm:$0xff]
      %v677 = vld [vmem:[%s547] sm:$0xf]
      %v678 = vld [vmem:[%s547 + $0x4] sm:$0xf]
      %v679 = vld [vmem:[%s547 + $0x8] sm:$0xf]
      %v680 = vld [vmem:[%s547 + $0xc] sm:$0xf]
      %v685 = vunpack.c.l.b16 %v677
      %v686 = vunpack.c.l.b16 %v678
      %v687 = vunpack.c.l.b16 %v679
      %v688 = vunpack.c.l.b16 %v680
      %v689 = vpack.c.b16 %v686, %v685
      %v690 = vpack.c.b16 %v688, %v687
      %693 = vmatprep.subr.bf16.mxu0 0
      %694 = vmatpush1.bf16.msra.mxu0 %v689
      %695 = vmatprep.subr.bf16.mxu0 0
      %696 = vmatpush1.bf16.msra.mxu0 %v690
      %697 = vmatprep.subr.bf16.mxu0 0
      %698 = vmatpush1.bf16.msra.mxu0 0
      %699 = vmatprep.subr.bf16.mxu0 0
      %700 = vmatpush1.bf16.msra.mxu0 0
      %701 = vmatprep.subr.bf16.mxu0 0
      %702 = vmatpush1.bf16.msra.mxu0 0
      %703 = vmatprep.subr.bf16.mxu0 0
      %704 = vmatpush1.bf16.msra.mxu0 0
      %705 = vmatprep.subr.bf16.mxu0 0
      %706 = vmatpush1.bf16.msra.mxu0 0
      %707 = vmatprep.subr.bf16.mxu0 0
      %708 = vmatpush1.bf16.msra.mxu0 0
      %709 = vmatprep.subr.bf16.mxu0 0
      %710 = vmatpush1.bf16.msra.mxu0 0
      %711 = vmatprep.subr.bf16.mxu0 0
      %712 = vmatpush1.bf16.msra.mxu0 0
      %713 = vmatprep.subr.bf16.mxu0 0
      %714 = vmatpush1.bf16.msra.mxu0 0
      %715 = vmatprep.subr.bf16.mxu0 0
      %716 = vmatpush1.bf16.msra.mxu0 0
      %717 = vmatprep.subr.bf16.mxu0 0
      %718 = vmatpush1.bf16.msra.mxu0 0
      %719 = vmatprep.subr.bf16.mxu0 0
      %720 = vmatpush1.bf16.msra.mxu0 0
      %721 = vmatprep.subr.bf16.mxu0 0
      %722 = vmatpush1.bf16.msra.mxu0 0
      %723 = vmatprep.subr.bf16.mxu0 0
      %724 = vmatpush1.bf16.msra.mxu0 0
      %725 = vmatprep.mubr.bf16.mxu0 0
      %726 = vmatmul.mubr.bf16.gmra.mrb[0].mxu0 %v631
      %v727 = vpop.f32.mrb[0].mxu0
      %v728 = vadd.f32 0.0, %v727
      %v729 = vpop.f32.mrb[0].mxu0
      %v730 = vpop.f32.mrb[0].mxu0
      %v731 = vpop.f32.mrb[0].mxu0
      %732 = vdwg.mxu0
      %v733 = vadd.f32 %v676, %v728
      %734 = vst.msk [vmem:[#allocation3] sm:$0xff] %vm674, %v733
      %v735 = vld [vmem:[#allocation4] sm:$0xff]
      %v736 = vld [vmem:[%s557] sm:$0xf]
      %v737 = vld [vmem:[%s557 + $0x4] sm:$0xf]
      %v738 = vld [vmem:[%s557 + $0x8] sm:$0xf]
      %v739 = vld [vmem:[%s557 + $0xc] sm:$0xf]
      %v744 = vunpack.c.l.b16 %v736
      %v745 = vunpack.c.l.b16 %v737
      %v746 = vunpack.c.l.b16 %v738
      %v747 = vunpack.c.l.b16 %v739
      %v748 = vpack.c.b16 %v745, %v744
      %v749 = vpack.c.b16 %v747, %v746
      %752 = vmatprep.subr.bf16.mxu0 0
      %753 = vmatpush1.bf16.msra.mxu0 %v748
      %754 = vmatprep.subr.bf16.mxu0 0
      %755 = vmatpush1.bf16.msra.mxu0 %v749
      %756 = vmatprep.subr.bf16.mxu0 0
      %757 = vmatpush1.bf16.msra.mxu0 0
      %758 = vmatprep.subr.bf16.mxu0 0
      %759 = vmatpush1.bf16.msra.mxu0 0
      %760 = vmatprep.subr.bf16.mxu0 0
      %761 = vmatpush1.bf16.msra.mxu0 0
      %762 = vmatprep.subr.bf16.mxu0 0
      %763 = vmatpush1.bf16.msra.mxu0 0
      %764 = vmatprep.subr.bf16.mxu0 0
      %765 = vmatpush1.bf16.msra.mxu0 0
      %766 = vmatprep.subr.bf16.mxu0 0
      %767 = vmatpush1.bf16.msra.mxu0 0
      %768 = vmatprep.subr.bf16.mxu0 0
      %769 = vmatpush1.bf16.msra.mxu0 0
      %770 = vmatprep.subr.bf16.mxu0 0
      %771 = vmatpush1.bf16.msra.mxu0 0
      %772 = vmatprep.subr.bf16.mxu0 0
      %773 = vmatpush1.bf16.msra.mxu0 0
      %774 = vmatprep.subr.bf16.mxu0 0
      %775 = vmatpush1.bf16.msra.mxu0 0
      %776 = vmatprep.subr.bf16.mxu0 0
      %777 = vmatpush1.bf16.msra.mxu0 0
      %778 = vmatprep.subr.bf16.mxu0 0
      %779 = vmatpush1.bf16.msra.mxu0 0
      %780 = vmatprep.subr.bf16.mxu0 0
      %781 = vmatpush1.bf16.msra.mxu0 0
      %782 = vmatprep.subr.bf16.mxu0 0
      %783 = vmatpush1.bf16.msra.mxu0 0
      %784 = vmatprep.mubr.bf16.mxu0 0
      %785 = vmatmul.mubr.bf16.gmra.mrb[0].mxu0 %v631
      %v786 = vpop.f32.mrb[0].mxu0
      %v787 = vadd.f32 0.0, %v786
      %v788 = vpop.f32.mrb[0].mxu0
      %v789 = vpop.f32.mrb[0].mxu0
      %v790 = vpop.f32.mrb[0].mxu0
      %791 = vdwg.mxu0
      %v792 = vadd.f32 %v735, %v787
      %793 = vst.msk [vmem:[#allocation4] sm:$0xff] %vm674, %v792
      // Predicated region
      $region53: #{transformer_forward.13} parent=47 // pred_check
        %p794 = pneg %p602
      $region54: #{transformer_forward.13} parent=47 // pred_check_branch
        %796 = sbr.rel (%p794) target = $region56
      $region55: #{transformer_forward.13} parent=47 // pred_region
        %v797 = vld [vmem:[#allocation2] sm:$0xff]
        %v798 = vld [vmem:[%s561] sm:$0x1]
        %v800 = vlaneseq
        %v801 = vshrl.u32 %v800, 7
        %v802 = vsub.s32 0, %v801
        %v803 = vrot.slane %v798, %v802
        %v805 = vadd.f32 %v797, %v803
        %v806 = vmul.f32 %v805, 0.25
        %v807 = vpack.c.bf16 %v806, %v806
        %vm808 = vcmask 125952
        %809 = vst.msk [vmem:[%s578] sm:$0xf] %vm808, %v807
        %v810 = vld [vmem:[#allocation3] sm:$0xff]
        %v811 = vld [vmem:[%s564] sm:$0x1]
        %v813 = vlaneseq
        %v814 = vshrl.u32 %v813, 7
        %v815 = vsub.s32 0, %v814
        %v816 = vrot.slane %v811, %v815
        %v818 = vadd.f32 %v810, %v816
        %v819 = vpack.c.bf16 %v818, %v818
        %820 = vst.msk [vmem:[%s589] sm:$0xf] %vm808, %v819
        %v821 = vld [vmem:[#allocation4] sm:$0xff]
        %v822 = vld [vmem:[%s567] sm:$0x1]
        %v824 = vlaneseq
        %v825 = vshrl.u32 %v824, 7
        %v826 = vsub.s32 0, %v825
        %v827 = vrot.slane %v822, %v826
        %v829 = vadd.f32 %v821, %v827
        %v830 = vpack.c.bf16 %v829, %v829
        %831 = vst.msk [vmem:[%s600] sm:$0xf] %vm808, %v830
      $region56: #{transformer_forward.13} parent=47 // pred_fallthru
        _
      %p832 = scmp.lt.s32.totalorder %s27, 1
      %s833 = scalar_select %p832, %s27, 1
      %p834 = scmp.lt.s32.totalorder %s28, 1
      %s835 = scalar_select %p834, %s28, 1
      %p836 = scmp.lt.s32.totalorder %s29, 0
      %s837 = scalar_select %p836, %s29, 0
      %s838 = sadd.s32 %s837, %s835
      %s839 = smul.addr %s833, 2
      %s840 = sadd.s32 %s838, %s839
      %s841 = smul.addr %s840, 4
      %s842 = scalar_lea.vmem %s7, %s841
      %p843 = scmp.lt.s32.totalorder %s27, 1
      %s844 = scalar_select %p843, %s27, 1
      %p845 = scmp.lt.s32.totalorder %s28, 1
      %s846 = scalar_select %p845, %s28, 1
      %p847 = scmp.lt.s32.totalorder %s29, 0
      %s848 = scalar_select %p847, %s29, 0
      %s849 = sadd.s32 %s848, %s846
      %s850 = smul.addr %s844, 2
      %s851 = sadd.s32 %s849, %s850
      %s852 = smul.addr %s851, 4
      %s853 = scalar_lea.vmem %s8, %s852
      %p854 = scmp.lt.s32.totalorder %s27, 1
      %s855 = scalar_select %p854, %s27, 1
      %p856 = scmp.lt.s32.totalorder %s28, 1
      %s857 = scalar_select %p856, %s28, 1
      %p858 = scmp.lt.s32.totalorder %s29, 0
      %s859 = scalar_select %p858, %s29, 0
      %s860 = sadd.s32 %s859, %s857
      %s861 = smul.addr %s855, 2
      %s862 = sadd.s32 %s860, %s861
      %s863 = smul.addr %s862, 4
      %s864 = scalar_lea.vmem %s9, %s863
      // Predicated region
      $region57: #{transformer_forward.13} parent=47 // pred_check
        %p865 = pneg %p261
      $region58: #{transformer_forward.13} parent=47 // pred_check_branch
        %867 = sbr.rel (%p865) target = $region60
      $region59: #{transformer_forward.13} parent=47 // pred_region
        _
      $region60: #{transformer_forward.13} parent=47 // pred_fallthru
        _
      // Predicated region
      $region61: #{transformer_forward.13} parent=47 // pred_check
        %p868 = pneg %p291
      $region62: #{transformer_forward.13} parent=47 // pred_check_branch
        %870 = sbr.rel (%p868) target = $region64
      $region63: #{transformer_forward.13} parent=47 // pred_region
        _
      $region64: #{transformer_forward.13} parent=47 // pred_fallthru
        _
      // Predicated region
      $region65: #{transformer_forward.13} parent=47 // pred_check
        %p871 = pneg %p321
      $region66: #{transformer_forward.13} parent=47 // pred_check_branch
        %873 = sbr.rel (%p871) target = $region68
      $region67: #{transformer_forward.13} parent=47 // pred_region
        _
      $region68: #{transformer_forward.13} parent=47 // pred_fallthru
        _
    $region48: #{transformer_forward.13} parent=5 // pred_fallthru
      _
    %p874 = scmp.le.s32.totalorder 2, %s16
    // Predicated region
    $region69: #{transformer_forward.13} parent=5 // pred_check
      %p875 = pneg %p874
    $region70: #{transformer_forward.13} parent=5 // pred_check_branch
      %877 = sbr.rel (%p875) target = $region72
    $region71: #{transformer_forward.13} parent=5 // pred_region
      %s878 = ssub.s32 %s16, 2
      // Predicated region
      $region73: #{transformer_forward.13} parent=71 // pred_check
        %p879 = pneg %p267
      $region74: #{transformer_forward.13} parent=71 // pred_check_branch
        %881 = sbr.rel (%p879) target = $region76
      $region75: #{transformer_forward.13} parent=71 // pred_region
        %p882 = scmp.lt.s32.totalorder %s31, 1
        %s883 = scalar_select %p882, %s31, 1
        %p884 = scmp.lt.s32.totalorder %s32, 1
        %s885 = scalar_select %p884, %s32, 1
        %p886 = scmp.lt.s32.totalorder %s33, 0
        %s887 = scalar_select %p886, %s33, 0
        %s888 = sadd.s32 %s887, %s885
        %s889 = smul.addr %s883, 2
        %s890 = sadd.s32 %s888, %s889
        %s891 = smul.addr %s890, 4
        %s892 = scalar_lea.vmem %s7, %s891
      $region76: #{transformer_forward.13} parent=71 // pred_fallthru
        _
      // Predicated region
      $region77: #{transformer_forward.13} parent=71 // pred_check
        %p893 = pneg %p297
      $region78: #{transformer_forward.13} parent=71 // pred_check_branch
        %895 = sbr.rel (%p893) target = $region80
      $region79: #{transformer_forward.13} parent=71 // pred_region
        %p896 = scmp.lt.s32.totalorder %s31, 1
        %s897 = scalar_select %p896, %s31, 1
        %p898 = scmp.lt.s32.totalorder %s32, 1
        %s899 = scalar_select %p898, %s32, 1
        %p900 = scmp.lt.s32.totalorder %s33, 0
        %s901 = scalar_select %p900, %s33, 0
        %s902 = sadd.s32 %s901, %s899
        %s903 = smul.addr %s897, 2
        %s904 = sadd.s32 %s902, %s903
        %s905 = smul.addr %s904, 4
        %s906 = scalar_lea.vmem %s8, %s905
      $region80: #{transformer_forward.13} parent=71 // pred_fallthru
        _
      // Predicated region
      $region81: #{transformer_forward.13} parent=71 // pred_check
        %p907 = pneg %p327
      $region82: #{transformer_forward.13} parent=71 // pred_check_branch
        %909 = sbr.rel (%p907) target = $region84
      $region83: #{transformer_forward.13} parent=71 // pred_region
        %p910 = scmp.lt.s32.totalorder %s31, 1
        %s911 = scalar_select %p910, %s31, 1
        %p912 = scmp.lt.s32.totalorder %s32, 1
        %s913 = scalar_select %p912, %s32, 1
        %p914 = scmp.lt.s32.totalorder %s33, 0
        %s915 = scalar_select %p914, %s33, 0
        %s916 = sadd.s32 %s915, %s913
        %s917 = smul.addr %s911, 2
        %s918 = sadd.s32 %s916, %s917
        %s919 = smul.addr %s918, 4
        %s920 = scalar_lea.vmem %s9, %s919
      $region84: #{transformer_forward.13} parent=71 // pred_fallthru
        _
    $region72: #{transformer_forward.13} parent=5 // pred_fallthru
      _
  $region6: #{transformer_forward.13} parent=0 // loop_footer
    %s20 = sadd.s32 1, %s16
  $region7: #{transformer_forward.13} parent=0 // loop_footer_branch
    %15 = sbr.rel target = $region3
  $region8: #{transformer_forward.13} parent=0 // loop_exit
    _

// kernel: transformer_forward.16
$region0: #{transformer_forward.16}
  #allocation0 [shape = 'u32[]', space=smem, size = 0x4, offset = 0x4, fixed_abs, tag = 'smem constant byte address 0x4 - core index']
  #allocation1 [shape = 'u32[144,128]{1,0:T(1,128)}', space=vmem, size = 0x12000, scoped, tag = 'internal scratch']
  #allocation2 [shape = 'f32[16,64]{1,0:T(8,128)}', space=vmem, size = 0x2000, scoped, tag = 'scratch operand']
  %s0 = inlined_call_operand.vmem [shape: f32[16,32], index: 0, kind: input, shape index: {}]
  %s1 = inlined_call_operand.vmem [shape: bf16[32,64], index: 1, kind: input, shape index: {}]
  %s2 = inlined_call_operand.vmem [shape: f32[1,64], index: 2, kind: input, shape index: {}]
  %s3 = inlined_call_operand.vmem [shape: bf16[16,64], index: 3, kind: output, shape index: {}]
  %s4 = sld [smem:[#allocation0]]
  $region30: #{transformer_forward.16} parent=0
    _
  %s6 = ssub.s32 1, %s4
  %s7 = scalar_select 0, %s6, %s4
  // Predicated region
  $region2: #{transformer_forward.16} parent=0 // pred_check
    _
  $region3: #{transformer_forward.16} parent=0 // pred_check_branch
    %9 = sbr.rel (0) target = $region5
  $region4: #{transformer_forward.16} parent=0 // pred_region
    _
  $region5: #{transformer_forward.16} parent=0 // pred_fallthru
    _
  // Predicated region
  $region6: #{transformer_forward.16} parent=0 // pred_check
    _
  $region7: #{transformer_forward.16} parent=0 // pred_check_branch
    %11 = sbr.rel (0) target = $region9
  $region8: #{transformer_forward.16} parent=0 // pred_region
    _
  $region9: #{transformer_forward.16} parent=0 // pred_fallthru
    _
  // Predicated region
  $region10: #{transformer_forward.16} parent=0 // pred_check
    _
  $region11: #{transformer_forward.16} parent=0 // pred_check_branch
    %13 = sbr.rel (0) target = $region13
  $region12: #{transformer_forward.16} parent=0 // pred_region
    _
  $region13: #{transformer_forward.16} parent=0 // pred_fallthru
    _
  %p15 = scmp.eq.s32.totalorder 0, 0
  // Predicated region
  $region14: #{transformer_forward.16} parent=0 // pred_check
    %p16 = pneg %p15
  $region15: #{transformer_forward.16} parent=0 // pred_check_branch
    %18 = sbr.rel (%p16) target = $region17
  $region16: #{transformer_forward.16} parent=0 // pred_region
    %vm19 = vcmask 523264
    %20 = vst.msk [vmem:[#allocation2] sm:$0xff] %vm19, 0.0
    %21 = vst.msk [vmem:[#allocation2 + $0x8] sm:$0xff] %vm19, 0.0
  $region17: #{transformer_forward.16} parent=0 // pred_fallthru
    _
  %v22 = vld [vmem:[#allocation2] sm:$0xff]
  %v23 = vld [vmem:[#allocation2 + $0x8] sm:$0xff]
  %v24 = vld [vmem:[%s0] sm:$0xff]
  %v25 = vld [vmem:[%s0 + $0x8] sm:$0xff]
  %v26 = vpack.c.bf16 %v25, %v24
  %v27 = vld [vmem:[%s1] sm:$0xf]
  %v28 = vld [vmem:[%s1 + $0x4] sm:$0xf]
  %v29 = vld [vmem:[%s1 + $0x8] sm:$0xf]
  %v30 = vld [vmem:[%s1 + $0xc] sm:$0xf]
  %v35 = vunpack.c.l.b16 %v27
  %v36 = vunpack.c.l.b16 %v28
  %v37 = vunpack.c.l.b16 %v29
  %v38 = vunpack.c.l.b16 %v30
  %v39 = vpack.c.b16 %v36, %v35
  %v40 = vpack.c.b16 %v38, %v37
  %vm43 = vcmask 261120
  %v45 = vsel %vm43, %v26, 0
  %47 = vmatprep.subr.bf16.mxu0 0
  %48 = vmatpush1.bf16.msra.mxu0 %v39
  %49 = vmatprep.subr.bf16.mxu0 0
  %50 = vmatpush1.bf16.msra.mxu0 %v40
  %51 = vmatprep.subr.bf16.mxu0 0
  %52 = vmatpush1.bf16.msra.mxu0 0
  %53 = vmatprep.subr.bf16.mxu0 0
  %54 = vmatpush1.bf16.msra.mxu0 0
  %55 = vmatprep.subr.bf16.mxu0 0
  %56 = vmatpush1.bf16.msra.mxu0 0
  %57 = vmatprep.subr.bf16.mxu0 0
  %58 = vmatpush1.bf16.msra.mxu0 0
  %59 = vmatprep.subr.bf16.mxu0 0
  %60 = vmatpush1.bf16.msra.mxu0 0
  %61 = vmatprep.subr.bf16.mxu0 0
  %62 = vmatpush1.bf16.msra.mxu0 0
  %63 = vmatprep.subr.bf16.mxu0 0
  %64 = vmatpush1.bf16.msra.mxu0 0
  %65 = vmatprep.subr.bf16.mxu0 0
  %66 = vmatpush1.bf16.msra.mxu0 0
  %67 = vmatprep.subr.bf16.mxu0 0
  %68 = vmatpush1.bf16.msra.mxu0 0
  %69 = vmatprep.subr.bf16.mxu0 0
  %70 = vmatpush1.bf16.msra.mxu0 0
  %71 = vmatprep.subr.bf16.mxu0 0
  %72 = vmatpush1.bf16.msra.mxu0 0
  %73 = vmatprep.subr.bf16.mxu0 0
  %74 = vmatpush1.bf16.msra.mxu0 0
  %75 = vmatprep.subr.bf16.mxu0 0
  %76 = vmatpush1.bf16.msra.mxu0 0
  %77 = vmatprep.subr.bf16.mxu0 0
  %78 = vmatpush1.bf16.msra.mxu0 0
  %79 = vmatprep.mubr.bf16.mxu0 0
  %80 = vmatmul.mubr.bf16.gmra.mrb[0].mxu0 %v45
  %v81 = vpop.f32.mrb[0].mxu0
  %v82 = vadd.f32 0.0, %v81
  %v83 = vpop.f32.mrb[0].mxu0
  %v84 = vpop.f32.mrb[0].mxu0
  %v85 = vadd.f32 0.0, %v84
  %v86 = vpop.f32.mrb[0].mxu0
  %87 = vdwg.mxu0
  %v88 = vadd.f32 %v22, %v82
  %v89 = vadd.f32 %v23, %v85
  %vm90 = vcmask 523264
  %91 = vst.msk [vmem:[#allocation2] sm:$0xff] %vm90, %v88
  %92 = vst.msk [vmem:[#allocation2 + $0x8] sm:$0xff] %vm90, %v89
  // Predicated region
  $region18: #{transformer_forward.16} parent=0 // pred_check
    %p93 = pneg %p15
  $region19: #{transformer_forward.16} parent=0 // pred_check_branch
    %95 = sbr.rel (%p93) target = $region21
  $region20: #{transformer_forward.16} parent=0 // pred_region
    %v96 = vld [vmem:[#allocation2] sm:$0xff]
    %v97 = vld [vmem:[#allocation2 + $0x8] sm:$0xff]
    %v98 = vld [vmem:[%s2] sm:$0x1]
    %v100 = vlaneseq
    %v101 = vshrl.u32 %v100, 7
    %v102 = vsub.s32 0, %v101
    %v103 = vrot.slane %v98, %v102
    %v105 = vadd.f32 %v96, %v103
    %v106 = vadd.f32 %v97, %v103
    %v107 = vmax.f32 %v105, 0.0
    %v108 = vmax.f32 %v106, 0.0
    %v109 = vpack.c.bf16 %v108, %v107
    %v111 = vunpack.c.l.b16 %v109
    %v112 = vunpack.c.h.b16 %v109
    %v113 = vpack.c.b16 %v111, %v111
    %v114 = vpack.c.b16 %v112, %v112
    %vm117 = vcmask 519168
    %118 = vst.msk [vmem:[%s3] sm:$0xf] %vm117, %v113
    %119 = vst.msk [vmem:[%s3 + $0x4] sm:$0xf] %vm117, %v114
  $region21: #{transformer_forward.16} parent=0 // pred_fallthru
    _
  // Predicated region
  $region22: #{transformer_forward.16} parent=0 // pred_check
    _
  $region23: #{transformer_forward.16} parent=0 // pred_check_branch
    %121 = sbr.rel (0) target = $region25
  $region24: #{transformer_forward.16} parent=0 // pred_region
    _
  $region25: #{transformer_forward.16} parent=0 // pred_fallthru
    _
  // Predicated region
  $region26: #{transformer_forward.16} parent=0 // pred_check
    _
  $region27: #{transformer_forward.16} parent=0 // pred_check_branch
    %123 = sbr.rel (0) target = $region29
  $region28: #{transformer_forward.16} parent=0 // pred_region
    _
  $region29: #{transformer_forward.16} parent=0 // pred_fallthru
    _

// kernel: transformer_forward.23
$region0: #{transformer_forward.23}
  #allocation0 [shape = 'u32[]', space=smem, size = 0x4, offset = 0x4, fixed_abs, tag = 'smem constant byte address 0x4 - core index']
  #allocation1 [shape = 'u32[144,128]{1,0:T(1,128)}', space=vmem, size = 0x12000, scoped, tag = 'internal scratch']
  #allocation2 [shape = 'f32[8,512]{1,0:T(8,128)}', space=vmem, size = 0x4000, scoped, tag = 'scratch operand']
  %s0 = inlined_call_operand.vmem [shape: f32[2,8,32], index: 0, kind: input, shape index: {}]
  %s1 = inlined_call_operand.vmem [shape: bf16[32,512], index: 1, kind: input, shape index: {}]
  %s2 = inlined_call_operand.vmem [shape: f32[1,512], index: 2, kind: input, shape index: {}]
  %s3 = inlined_call_operand.vmem [shape: f32[8,1024], index: 3, kind: output, shape index: {}]
  %s4 = sld [smem:[#allocation0]]
  $region53: #{transformer_forward.23} parent=0
    _
  %s6 = ssub.s32 1, %s4
  %s7 = scalar_select 0, %s6, %s4
  loop: start=0, step=1, limit=4
  $region2: #{transformer_forward.23} parent=0 // loop_pre_header
    _
  $region3: #{transformer_forward.23} parent=0 // loop_header
    %s9 = sphi 0, %s13
    %p10 = scmp.ge.s32.totalorder %s9, 4
    %s16 = sphi 0, %s42
    %s17 = sphi 0, %s38
    %s18 = sphi 0, %s34
    %s19 = sphi 0, %s30
    %s20 = sphi 0, %s16
    %s21 = sphi 0, %s17
    %s22 = sphi 0, %s18
    %s23 = sphi 0, %s19
    %s24 = sphi 0, %s20
    %s25 = sphi 0, %s21
    %s26 = sphi 0, %s22
    %s27 = sphi 0, %s23
    %s49 = sphi 0, %s51
    %s52 = sphi 0, %s49
    %s53 = sphi 0, %s52
    %s69 = sphi 0, %s53
    %s77 = sphi 0, %s79
    %s80 = sphi 0, %s77
    %s81 = sphi 0, %s80
    %s97 = sphi 0, %s81
    %s103 = sphi 0, %s105
    %s106 = sphi 0, %s103
    %s107 = sphi 0, %s106
    %s123 = sphi 0, %s107
    %s133 = sphi 0, %s135
    %s136 = sphi 0, %s133
    %s137 = sphi 0, %s136
    %s153 = sphi 0, %s137
  $region4: #{transformer_forward.23} parent=0 // loop_header_branch
    %12 = sbr.rel (%p10) target = $region8
  $region5: #{transformer_forward.23} parent=0 // loop_body
    %s14 = ssub.s32 %s9, 1
    %s15 = ssub.s32 %s9, 2
    %s28 = sadd.s32 1, %s19
    %p29 = scmp.ge.s32.totalorder %s28, 1
    %s30 = scalar_select %p29, 0, %s28
    %s31 = sadd.s32 1, %s18
    %s32 = scalar_select %p29, %s31, %s18
    %p33 = scmp.ge.s32.totalorder %s32, 1
    %s34 = scalar_select %p33, 0, %s32
    %s35 = sadd.s32 1, %s17
    %s36 = scalar_select %p33, %s35, %s17
    %p37 = scmp.ge.s32.totalorder %s36, 2
    %s38 = scalar_select %p37, 0, %s36
    %s39 = sadd.s32 1, %s16
    %s40 = scalar_select %p37, %s39, %s16
    %p41 = scmp.ge.s32.totalorder %s40, 1
    %s42 = scalar_select %p41, 0, %s40
    %s43 = ssub.s32 %s17, %s38
    %s44 = ssub.s32 %s16, %s42
    %s45 = sor.u32 %s43, %s44
    %s46 = ssub.s32 %s19, %s30
    %s47 = sor.u32 %s45, %s46
    %p48 = scmp.eq.s32.totalorder %s47, 0
    %s50 = sadd.s32 %s49, 1
    %s51 = scalar_select %p48, %s49, %s50
    %p54 = pneg %p48
    %p55 = scmp.eq.s32.totalorder %s9, 1
    %p56 = por %p54, %p55
    %p57 = scmp.ne.s32.totalorder %s49, %s52
    %p58 = scmp.eq.s32.totalorder %s9, 0
    %p59 = por %p57, %p58
    %p60 = scmp.ne.s32.totalorder %s49, %s52
    %p61 = scmp.eq.s32.totalorder %s14, 1
    %p62 = por %p60, %p61
    %p63 = scmp.ne.s32.totalorder %s52, %s53
    %p64 = scmp.eq.s32.totalorder %s14, 0
    %p65 = por %p63, %p64
    %p66 = scmp.ne.s32.totalorder %s52, %s53
    %p67 = scmp.eq.s32.totalorder %s15, 1
    %p68 = por %p66, %p67
    %p70 = scmp.ne.s32.totalorder %s53, %s69
    %p71 = scmp.eq.s32.totalorder %s15, 0
    %p72 = por %p70, %p71
    %s73 = ssub.s32 %s19, %s30
    %s74 = ssub.s32 %s18, %s34
    %s75 = sor.u32 %s73, %s74
    %p76 = scmp.eq.s32.totalorder %s75, 0
    %s78 = sadd.s32 %s77, 1
    %s79 = scalar_select %p76, %s77, %s78
    %p82 = pneg %p76
    %p83 = scmp.eq.s32.totalorder %s9, 1
    %p84 = por %p82, %p83
    %p85 = scmp.ne.s32.totalorder %s77, %s80
    %p86 = scmp.eq.s32.totalorder %s9, 0
    %p87 = por %p85, %p86
    %p88 = scmp.ne.s32.totalorder %s77, %s80
    %p89 = scmp.eq.s32.totalorder %s14, 1
    %p90 = por %p88, %p89
    %p91 = scmp.ne.s32.totalorder %s80, %s81
    %p92 = scmp.eq.s32.totalorder %s14, 0
    %p93 = por %p91, %p92
    %p94 = scmp.ne.s32.totalorder %s80, %s81
    %p95 = scmp.eq.s32.totalorder %s15, 1
    %p96 = por %p94, %p95
    %p98 = scmp.ne.s32.totalorder %s81, %s97
    %p99 = scmp.eq.s32.totalorder %s15, 0
    %p100 = por %p98, %p99
    %s101 = ssub.s32 %s18, %s34
    %p102 = scmp.eq.s32.totalorder %s101, 0
    %s104 = sadd.s32 %s103, 1
    %s105 = scalar_select %p102, %s103, %s104
    %p108 = pneg %p102
    %p109 = scmp.eq.s32.totalorder %s9, 1
    %p110 = por %p108, %p109
    %p111 = scmp.ne.s32.totalorder %s103, %s106
    %p112 = scmp.eq.s32.totalorder %s9, 0
    %p113 = por %p111, %p112
    %p114 = scmp.ne.s32.totalorder %s103, %s106
    %p115 = scmp.eq.s32.totalorder %s14, 1
    %p116 = por %p114, %p115
    %p117 = scmp.ne.s32.totalorder %s106, %s107
    %p118 = scmp.eq.s32.totalorder %s14, 0
    %p119 = por %p117, %p118
    %p120 = scmp.ne.s32.totalorder %s106, %s107
    %p121 = scmp.eq.s32.totalorder %s15, 1
    %p122 = por %p120, %p121
    %p124 = scmp.ne.s32.totalorder %s107, %s123
    %p125 = scmp.eq.s32.totalorder %s15, 0
    %p126 = por %p124, %p125
    %s127 = sadd.s32 %s17, %s18
    %s128 = sadd.s32 %s38, %s34
    %s129 = ssub.s32 %s16, %s42
    %s130 = ssub.s32 %s127, %s128
    %s131 = sor.u32 %s129, %s130
    %p132 = scmp.eq.s32.totalorder %s131, 0
    %s134 = sadd.s32 %s133, 1
    %s135 = scalar_select %p132, %s133, %s134
    %p138 = pneg %p132
    %p139 = scmp.eq.s32.totalorder %s9, 1
    %p140 = por %p138, %p139
    %p141 = scmp.ne.s32.totalorder %s133, %s136
    %p142 = scmp.eq.s32.totalorder %s9, 0
    %p143 = por %p141, %p142
    %p144 = scmp.ne.s32.totalorder %s133, %s136
    %p145 = scmp.eq.s32.totalorder %s14, 1
    %p146 = por %p144, %p145
    %p147 = scmp.ne.s32.totalorder %s136, %s137
    %p148 = scmp.eq.s32.totalorder %s14, 0
    %p149 = por %p147, %p148
    %p150 = scmp.ne.s32.totalorder %s136, %s137
    %p151 = scmp.eq.s32.totalorder %s15, 1
    %p152 = por %p150, %p151
    %p154 = scmp.ne.s32.totalorder %s137, %s153
    %p155 = scmp.eq.s32.totalorder %s15, 0
    %p156 = por %p154, %p155
    %p157 = scmp.le.s32.totalorder 1, %s9
    %p158 = scmp.lt.s32.totalorder %s9, 3
    %p159 = pnand %p157, %p158
    %p160 = pneg %p159
    // Predicated region
    $region9: #{transformer_forward.23} parent=5 // pred_check
      _
    $region10: #{transformer_forward.23} parent=5 // pred_check_branch
      %162 = sbr.rel (%p159) target = $region12
    $region11: #{transformer_forward.23} parent=5 // pred_region
      %s163 = ssub.s32 %s9, 1
      // Predicated region
      $region13: #{transformer_forward.23} parent=11 // pred_check
        %p164 = pneg %p93
      $region14: #{transformer_forward.23} parent=11 // pred_check_branch
        %166 = sbr.rel (%p164) target = $region16
      $region15: #{transformer_forward.23} parent=11 // pred_region
        %s167 = smul.u32 4, %s23
        %s168 = smul.u32 4, %s22
        %p169 = scmp.lt.s32.totalorder %s167, 3
        %s170 = scalar_select %p169, %s167, 3
        %p171 = scmp.lt.s32.totalorder %s168, 3
        %s172 = scalar_select %p171, %s168, 3
        %s173 = smul.addr %s170, 4
        %s174 = sadd.s32 %s172, %s173
        %s175 = smul.addr %s174, 4
        %s176 = scalar_lea.vmem %s1, %s175
        %s177 = smul.u32 4, %s23
        %s178 = smul.u32 4, %s22
      $region16: #{transformer_forward.23} parent=11 // pred_fallthru
        _
      // Predicated region
      $region17: #{transformer_forward.23} parent=11 // pred_check
        %p179 = pneg %p119
      $region18: #{transformer_forward.23} parent=11 // pred_check_branch
        %181 = sbr.rel (%p179) target = $region20
      $region19: #{transformer_forward.23} parent=11 // pred_region
        %s182 = smul.u32 4, %s22
        %p183 = scmp.lt.s32.totalorder %s182, 3
        %s184 = scalar_select %p183, %s182, 3
        %s185 = scalar_lea.vmem %s2, %s184
        %s186 = smul.u32 4, %s22
      $region20: #{transformer_forward.23} parent=11 // pred_fallthru
        _
    $region12: #{transformer_forward.23} parent=5 // pred_fallthru
      _
    %p187 = scmp.lt.s32.totalorder %s9, 2
    // Predicated region
    $region21: #{transformer_forward.23} parent=5 // pred_check
      %p188 = pneg %p187
    $region22: #{transformer_forward.23} parent=5 // pred_check_branch
      %190 = sbr.rel (%p188) target = $region24
    $region23: #{transformer_forward.23} parent=5 // pred_region
      // Predicated region
      $region25: #{transformer_forward.23} parent=23 // pred_check
        %p191 = pneg %p59
      $region26: #{transformer_forward.23} parent=23 // pred_check_branch
        %193 = sbr.rel (%p191) target = $region28
      $region27: #{transformer_forward.23} parent=23 // pred_region
        %p194 = scmp.lt.s32.totalorder %s17, 1
        %s195 = scalar_select %p194, %s17, 1
        %p196 = scmp.lt.s32.totalorder %s16, 0
        %s197 = scalar_select %p196, %s16, 0
        %p198 = scmp.lt.s32.totalorder %s19, 0
        %s199 = scalar_select %p198, %s19, 0
        %s200 = sadd.s32 %s199, %s197
        %s201 = sadd.s32 %s200, %s195
        %s202 = smul.addr %s201, 8
        %s203 = scalar_lea.vmem %s0, %s202
      $region28: #{transformer_forward.23} parent=23 // pred_fallthru
        _
    $region24: #{transformer_forward.23} parent=5 // pred_fallthru
      _
    %p204 = scmp.le.s32.totalorder 1, %s9
    %p205 = scmp.lt.s32.totalorder %s9, 3
    %p206 = pnand %p204, %p205
    %p207 = pneg %p206
    // Predicated region
    $region29: #{transformer_forward.23} parent=5 // pred_check
      _
    $region30: #{transformer_forward.23} parent=5 // pred_check_branch
      %209 = sbr.rel (%p206) target = $region32
    $region31: #{transformer_forward.23} parent=5 // pred_region
      %s210 = ssub.s32 %s9, 1
      %p211 = scmp.lt.s32.totalorder %s21, 1
      %s212 = scalar_select %p211, %s21, 1
      %p213 = scmp.lt.s32.totalorder %s20, 0
      %s214 = scalar_select %p213, %s20, 0
      %p215 = scmp.lt.s32.totalorder %s23, 0
      %s216 = scalar_select %p215, %s23, 0
      %s217 = sadd.s32 %s216, %s214
      %s218 = sadd.s32 %s217, %s212
      %s219 = smul.addr %s218, 8
      %s220 = scalar_lea.vmem %s0, %s219
      %p221 = pneg %p65
      %p222 = pneg %p62
      %s223 = smul.u32 4, %s23
      %s224 = smul.u32 4, %s22
      %p225 = scmp.lt.s32.totalorder %s223, 3
      %s226 = scalar_select %p225, %s223, 3
      %p227 = scmp.lt.s32.totalorder %s224, 3
      %s228 = scalar_select %p227, %s224, 3
      %s229 = smul.addr %s226, 4
      %s230 = sadd.s32 %s228, %s229
      %s231 = smul.addr %s230, 4
      %s232 = scalar_lea.vmem %s1, %s231
      %p233 = pneg %p93
      %p234 = pneg %p90
      %s235 = smul.u32 4, %s22
      %p236 = scmp.lt.s32.totalorder %s235, 3
      %s237 = scalar_select %p236, %s235, 3
      %s238 = scalar_lea.vmem %s2, %s237
      %p239 = pneg %p119
      %p240 = pneg %p116
      %p241 = pneg %p149
      %p242 = pneg %p146
      %s243 = sadd.s32 %s21, %s22
      %s244 = smul.u32 4, %s243
      %p245 = scmp.lt.s32.totalorder %s20, 0
      %s246 = scalar_select %p245, %s20, 0
      %p247 = scmp.lt.s32.totalorder %s244, 7
      %s248 = scalar_select %p247, %s244, 7
      %s249 = smul.addr %s246, 8
      %s250 = sadd.s32 %s248, %s249
      %s251 = smul.addr %s250, 8
      %s252 = scalar_lea.vmem %s3, %s251
      %p253 = scmp.lt.s32.totalorder %s21, 1
      %s254 = scalar_select %p253, %s21, 1
      %p255 = scmp.lt.s32.totalorder %s20, 0
      %s256 = scalar_select %p255, %s20, 0
      %p257 = scmp.lt.s32.totalorder %s23, 0
      %s258 = scalar_select %p257, %s23, 0
      %s259 = sadd.s32 %s258, %s256
      %s260 = sadd.s32 %s259, %s254
      %s261 = smul.addr %s260, 8
      %s262 = scalar_lea.vmem %s0, %s261
      %s263 = smul.u32 4, %s23
      %s264 = smul.u32 4, %s22
      %p265 = scmp.lt.s32.totalorder %s263, 3
      %s266 = scalar_select %p265, %s263, 3
      %p267 = scmp.lt.s32.totalorder %s264, 3
      %s268 = scalar_select %p267, %s264, 3
      %s269 = smul.addr %s266, 4
      %s270 = sadd.s32 %s268, %s269
      %s271 = smul.addr %s270, 4
      %s272 = scalar_lea.vmem %s1, %s271
      %s273 = smul.u32 4, %s23
      %s274 = smul.u32 4, %s22
      %s275 = smul.u32 4, %s22
      %p276 = scmp.lt.s32.totalorder %s275, 3
      %s277 = scalar_select %p276, %s275, 3
      %s278 = scalar_lea.vmem %s2, %s277
      %s279 = smul.u32 4, %s22
      %s280 = sadd.s32 %s21, %s22
      %s281 = smul.u32 4, %s280
      %p282 = scmp.lt.s32.totalorder %s20, 0
      %s283 = scalar_select %p282, %s20, 0
      %p284 = scmp.lt.s32.totalorder %s281, 7
      %s285 = scalar_select %p284, %s281, 7
      %s286 = smul.addr %s283, 8
      %s287 = sadd.s32 %s285, %s286
      %s288 = smul.addr %s287, 8
      %s289 = scalar_lea.vmem %s3, %s288
      %s290 = sadd.s32 %s21, %s22
      %s291 = smul.u32 4, %s290
      %p293 = scmp.eq.s32.totalorder %s23, 0
      // Predicated region
      $region33: #{transformer_forward.23} parent=31 // pred_check
        %p294 = pneg %p293
      $region34: #{transformer_forward.23} parent=31 // pred_check_branch
        %296 = sbr.rel (%p294) target = $region36
      $region35: #{transformer_forward.23} parent=31 // pred_region
        %297 = vst [vmem:[#allocation2] sm:$0xff] 0.0
        %298 = vst [vmem:[#allocation2 + $0x8] sm:$0xff] 0.0
        %299 = vst [vmem:[#allocation2 + $0x10] sm:$0xff] 0.0
        %300 = vst [vmem:[#allocation2 + $0x18] sm:$0xff] 0.0
      $region36: #{transformer_forward.23} parent=31 // pred_fallthru
        _
      %v301 = vld [vmem:[#allocation2] sm:$0xff]
      %v302 = vld [vmem:[#allocation2 + $0x8] sm:$0xff]
      %v303 = vld [vmem:[#allocation2 + $0x10] sm:$0xff]
      %v304 = vld [vmem:[#allocation2 + $0x18] sm:$0xff]
      %v305 = vld [vmem:[%s262] sm:$0xff]
      %v306 = vpack.c.bf16 %v305, %v305
      %v307 = vld [vmem:[%s272] sm:$0xff]
      %v308 = vld [vmem:[%s272 + $0x8] sm:$0xff]
      %v309 = vld [vmem:[%s272 + $0x10] sm:$0xff]
      %v310 = vld [vmem:[%s272 + $0x18] sm:$0xff]
      %v311 = vld [vmem:[%s272 + $0x20] sm:$0xff]
      %v312 = vld [vmem:[%s272 + $0x28] sm:$0xff]
      %v313 = vld [vmem:[%s272 + $0x30] sm:$0xff]
      %v314 = vld [vmem:[%s272 + $0x38] sm:$0xff]
      %v323 = vunpack.c.l.b16 %v307
      %v324 = vunpack.c.h.b16 %v307
      %v325 = vunpack.c.l.b16 %v308
      %v326 = vunpack.c.h.b16 %v308
      %v327 = vunpack.c.l.b16 %v309
      %v328 = vunpack.c.h.b16 %v309
      %v329 = vunpack.c.l.b16 %v310
      %v330 = vunpack.c.h.b16 %v310
      %v331 = vunpack.c.l.b16 %v311
      %v332 = vunpack.c.h.b16 %v311
      %v333 = vunpack.c.l.b16 %v312
      %v334 = vunpack.c.h.b16 %v312
      %v335 = vunpack.c.l.b16 %v313
      %v336 = vunpack.c.h.b16 %v313
      %v337 = vunpack.c.l.b16 %v314
      %v338 = vunpack.c.h.b16 %v314
      %v339 = vpack.c.b16 %v327, %v323
      %v340 = vpack.c.b16 %v328, %v324
      %v341 = vpack.c.b16 %v329, %v325
      %v342 = vpack.c.b16 %v330, %v326
      %v343 = vpack.c.b16 %v335, %v331
      %v344 = vpack.c.b16 %v336, %v332
      %v345 = vpack.c.b16 %v337, %v333
      %v346 = vpack.c.b16 %v338, %v334
      %vm355 = vcmask 261120
      %v357 = vsel %vm355, %v306, 0
      %359 = vmatprep.subr.bf16.mxu0 %v340
      %360 = vmatpush1.bf16.msra.mxu0 %v339
      %361 = vmatprep.subr.bf16.mxu0 %v344
      %362 = vmatpush1.bf16.msra.mxu0 %v343
      %363 = vmatprep.subr.bf16.mxu0 0
      %364 = vmatpush1.bf16.msra.mxu0 0
      %365 = vmatprep.subr.bf16.mxu0 0
      %366 = vmatpush1.bf16.msra.mxu0 0
      %367 = vmatprep.subr.bf16.mxu0 0
      %368 = vmatpush1.bf16.msra.mxu0 0
      %369 = vmatprep.subr.bf16.mxu0 0
      %370 = vmatpush1.bf16.msra.mxu0 0
      %371 = vmatprep.subr.bf16.mxu0 0
      %372 = vmatpush1.bf16.msra.mxu0 0
      %373 = vmatprep.subr.bf16.mxu0 0
      %374 = vmatpush1.bf16.msra.mxu0 0
      %375 = vmatprep.subr.bf16.mxu0 0
      %376 = vmatpush1.bf16.msra.mxu0 0
      %377 = vmatprep.subr.bf16.mxu0 0
      %378 = vmatpush1.bf16.msra.mxu0 0
      %379 = vmatprep.subr.bf16.mxu0 0
      %380 = vmatpush1.bf16.msra.mxu0 0
      %381 = vmatprep.subr.bf16.mxu0 0
      %382 = vmatpush1.bf16.msra.mxu0 0
      %383 = vmatprep.subr.bf16.mxu0 0
      %384 = vmatpush1.bf16.msra.mxu0 0
      %385 = vmatprep.subr.bf16.mxu0 0
      %386 = vmatpush1.bf16.msra.mxu0 0
      %387 = vmatprep.subr.bf16.mxu0 0
      %388 = vmatpush1.bf16.msra.mxu0 0
      %389 = vmatprep.subr.bf16.mxu0 0
      %390 = vmatpush1.bf16.msra.mxu0 0
      %391 = vmatprep.mubr.bf16.mxu0 0
      %392 = vmatmul.mubr.bf16.gmra.mrb[0].mxu0 %v357
      %v393 = vpop.f32.mrb[0].mxu0
      %v394 = vadd.f32 0.0, %v393
      %v395 = vpop.f32.mrb[0].mxu0
      %v396 = vadd.f32 0.0, %v395
      %v397 = vpop.f32.mrb[0].mxu0
      %v398 = vpop.f32.mrb[0].mxu0
      %399 = vdwg.mxu0
      %400 = vmatprep.subr.bf16.mxu0 %v342
      %401 = vmatpush1.bf16.msra.mxu0 %v341
      %402 = vmatprep.subr.bf16.mxu0 %v346
      %403 = vmatpush1.bf16.msra.mxu0 %v345
      %404 = vmatprep.subr.bf16.mxu0 0
      %405 = vmatpush1.bf16.msra.mxu0 0
      %406 = vmatprep.subr.bf16.mxu0 0
      %407 = vmatpush1.bf16.msra.mxu0 0
      %408 = vmatprep.subr.bf16.mxu0 0
      %409 = vmatpush1.bf16.msra.mxu0 0
      %410 = vmatprep.subr.bf16.mxu0 0
      %411 = vmatpush1.bf16.msra.mxu0 0
      %412 = vmatprep.subr.bf16.mxu0 0
      %413 = vmatpush1.bf16.msra.mxu0 0
      %414 = vmatprep.subr.bf16.mxu0 0
      %415 = vmatpush1.bf16.msra.mxu0 0
      %416 = vmatprep.subr.bf16.mxu0 0
      %417 = vmatpush1.bf16.msra.mxu0 0
      %418 = vmatprep.subr.bf16.mxu0 0
      %419 = vmatpush1.bf16.msra.mxu0 0
      %420 = vmatprep.subr.bf16.mxu0 0
      %421 = vmatpush1.bf16.msra.mxu0 0
      %422 = vmatprep.subr.bf16.mxu0 0
      %423 = vmatpush1.bf16.msra.mxu0 0
      %424 = vmatprep.subr.bf16.mxu0 0
      %425 = vmatpush1.bf16.msra.mxu0 0
      %426 = vmatprep.subr.bf16.mxu0 0
      %427 = vmatpush1.bf16.msra.mxu0 0
      %428 = vmatprep.subr.bf16.mxu0 0
      %429 = vmatpush1.bf16.msra.mxu0 0
      %430 = vmatprep.subr.bf16.mxu0 0
      %431 = vmatpush1.bf16.msra.mxu0 0
      %432 = vmatprep.mubr.bf16.mxu0 0
      %433 = vmatmul.mubr.bf16.gmra.mrb[0].mxu0 %v357
      %v434 = vpop.f32.mrb[0].mxu0
      %v435 = vadd.f32 0.0, %v434
      %v436 = vpop.f32.mrb[0].mxu0
      %v437 = vadd.f32 0.0, %v436
      %v438 = vpop.f32.mrb[0].mxu0
      %v439 = vpop.f32.mrb[0].mxu0
      %440 = vdwg.mxu0
      %v441 = vadd.f32 %v301, %v394
      %v442 = vadd.f32 %v302, %v396
      %v443 = vadd.f32 %v303, %v435
      %v444 = vadd.f32 %v304, %v437
      %445 = vst [vmem:[#allocation2] sm:$0xff] %v441
      %446 = vst [vmem:[#allocation2 + $0x8] sm:$0xff] %v442
      %447 = vst [vmem:[#allocation2 + $0x10] sm:$0xff] %v443
      %448 = vst [vmem:[#allocation2 + $0x18] sm:$0xff] %v444
      // Predicated region
      $region37: #{transformer_forward.23} parent=31 // pred_check
        %p449 = pneg %p293
      $region38: #{transformer_forward.23} parent=31 // pred_check_branch
        %451 = sbr.rel (%p449) target = $region40
      $region39: #{transformer_forward.23} parent=31 // pred_region
        %v452 = vld [vmem:[#allocation2] sm:$0xff]
        %v453 = vld [vmem:[#allocation2 + $0x8] sm:$0xff]
        %v454 = vld [vmem:[#allocation2 + $0x10] sm:$0xff]
        %v455 = vld [vmem:[#allocation2 + $0x18] sm:$0xff]
        %v456 = vld [vmem:[%s278] sm:$0xf]
        %v458 = vlaneseq
        %v459 = vshrl.u32 %v458, 7
        %v460 = vsub.s32 0, %v459
        %v461 = vrot.slane %v456, %v460
        %v462 = vlaneseq
        %v463 = vshrl.u32 %v462, 7
        %v464 = vsub.s32 1, %v463
        %v465 = vrot.slane %v456, %v464
        %v466 = vlaneseq
        %v467 = vshrl.u32 %v466, 7
        %v468 = vsub.s32 2, %v467
        %v469 = vrot.slane %v456, %v468
        %v470 = vlaneseq
        %v471 = vshrl.u32 %v470, 7
        %v472 = vsub.s32 3, %v471
        %v473 = vrot.slane %v456, %v472
        %v478 = vadd.f32 %v452, %v461
        %v479 = vadd.f32 %v453, %v465
        %v480 = vadd.f32 %v454, %v469
        %v481 = vadd.f32 %v455, %v473
        %482 = vst [vmem:[%s289] sm:$0xff] %v478
        %483 = vst [vmem:[%s289 + $0x8] sm:$0xff] %v479
        %484 = vst [vmem:[%s289 + $0x10] sm:$0xff] %v480
        %485 = vst [vmem:[%s289 + $0x18] sm:$0xff] %v481
      $region40: #{transformer_forward.23} parent=31 // pred_fallthru
        _
      %s486 = sadd.s32 %s21, %s22
      %s487 = smul.u32 4, %s486
      %p488 = scmp.lt.s32.totalorder %s20, 0
      %s489 = scalar_select %p488, %s20, 0
      %p490 = scmp.lt.s32.totalorder %s487, 7
      %s491 = scalar_select %p490, %s487, 7
      %s492 = smul.addr %s489, 8
      %s493 = sadd.s32 %s491, %s492
      %s494 = smul.addr %s493, 8
      %s495 = scalar_lea.vmem %s3, %s494
      // Predicated region
      $region41: #{transformer_forward.23} parent=31 // pred_check
        %p496 = pneg %p146
      $region42: #{transformer_forward.23} parent=31 // pred_check_branch
        %498 = sbr.rel (%p496) target = $region44
      $region43: #{transformer_forward.23} parent=31 // pred_region
        %s499 = sadd.s32 %s21, %s22
        %s500 = smul.u32 4, %s499
      $region44: #{transformer_forward.23} parent=31 // pred_fallthru
        _
    $region32: #{transformer_forward.23} parent=5 // pred_fallthru
      _
    %p501 = scmp.le.s32.totalorder 2, %s9
    // Predicated region
    $region45: #{transformer_forward.23} parent=5 // pred_check
      %p502 = pneg %p501
    $region46: #{transformer_forward.23} parent=5 // pred_check_branch
      %504 = sbr.rel (%p502) target = $region48
    $region47: #{transformer_forward.23} parent=5 // pred_region
      %s505 = ssub.s32 %s9, 2
      // Predicated region
      $region49: #{transformer_forward.23} parent=47 // pred_check
        %p506 = pneg %p152
      $region50: #{transformer_forward.23} parent=47 // pred_check_branch
        %508 = sbr.rel (%p506) target = $region52
      $region51: #{transformer_forward.23} parent=47 // pred_region
        %s509 = sadd.s32 %s25, %s26
        %s510 = smul.u32 4, %s509
        %p511 = scmp.lt.s32.totalorder %s24, 0
        %s512 = scalar_select %p511, %s24, 0
        %p513 = scmp.lt.s32.totalorder %s510, 7
        %s514 = scalar_select %p513, %s510, 7
        %s515 = smul.addr %s512, 8
        %s516 = sadd.s32 %s514, %s515
        %s517 = smul.addr %s516, 8
        %s518 = scalar_lea.vmem %s3, %s517
      $region52: #{transformer_forward.23} parent=47 // pred_fallthru
        _
    $region48: #{transformer_forward.23} parent=5 // pred_fallthru
      _
  $region6: #{transformer_forward.23} parent=0 // loop_footer
    %s13 = sadd.s32 1, %s9
  $region7: #{transformer_forward.23} parent=0 // loop_footer_branch
    %8 = sbr.rel target = $region3
  $region8: #{transformer_forward.23} parent=0 // loop_exit
    _

// kernel: transformer_forward.17
$region0: #{transformer_forward.17}
  #allocation0 [shape = 'u32[]', space=smem, size = 0x4, offset = 0x4, fixed_abs, tag = 'smem constant byte address 0x4 - core index']
  #allocation1 [shape = 'u32[144,128]{1,0:T(1,128)}', space=vmem, size = 0x12000, scoped, tag = 'internal scratch']
  #allocation2 [shape = 'f32[16,32]{1,0:T(8,128)}', space=vmem, size = 0x2000, scoped, tag = 'scratch operand']
  %s0 = inlined_call_operand.vmem [shape: bf16[16,64], index: 0, kind: input, shape index: {}]
  %s1 = inlined_call_operand.vmem [shape: bf16[64,32], index: 1, kind: input, shape index: {}]
  %s2 = inlined_call_operand.vmem [shape: f32[1,32], index: 2, kind: input, shape index: {}]
  %s3 = inlined_call_operand.vmem [shape: f32[16,32], index: 3, kind: input, shape index: {}]
  %s4 = inlined_call_operand.vmem [shape: f32[1,32], index: 4, kind: input, shape index: {}]
  %s5 = inlined_call_operand.vmem [shape: f32[1,32], index: 5, kind: input, shape index: {}]
  %s6 = inlined_call_operand.vmem [shape: f32[16,32], index: 6, kind: output, shape index: {}]
  %s7 = sld [smem:[#allocation0]]
  $region42: #{transformer_forward.17} parent=0
    _
  %s9 = ssub.s32 1, %s7
  %s10 = scalar_select 0, %s9, %s7
  // Predicated region
  $region2: #{transformer_forward.17} parent=0 // pred_check
    _
  $region3: #{transformer_forward.17} parent=0 // pred_check_branch
    %12 = sbr.rel (0) target = $region5
  $region4: #{transformer_forward.17} parent=0 // pred_region
    _
  $region5: #{transformer_forward.17} parent=0 // pred_fallthru
    _
  // Predicated region
  $region6: #{transformer_forward.17} parent=0 // pred_check
    _
  $region7: #{transformer_forward.17} parent=0 // pred_check_branch
    %14 = sbr.rel (0) target = $region9
  $region8: #{transformer_forward.17} parent=0 // pred_region
    _
  $region9: #{transformer_forward.17} parent=0 // pred_fallthru
    _
  // Predicated region
  $region10: #{transformer_forward.17} parent=0 // pred_check
    _
  $region11: #{transformer_forward.17} parent=0 // pred_check_branch
    %16 = sbr.rel (0) target = $region13
  $region12: #{transformer_forward.17} parent=0 // pred_region
    _
  $region13: #{transformer_forward.17} parent=0 // pred_fallthru
    _
  // Predicated region
  $region14: #{transformer_forward.17} parent=0 // pred_check
    _
  $region15: #{transformer_forward.17} parent=0 // pred_check_branch
    %18 = sbr.rel (0) target = $region17
  $region16: #{transformer_forward.17} parent=0 // pred_region
    _
  $region17: #{transformer_forward.17} parent=0 // pred_fallthru
    _
  // Predicated region
  $region18: #{transformer_forward.17} parent=0 // pred_check
    _
  $region19: #{transformer_forward.17} parent=0 // pred_check_branch
    %20 = sbr.rel (0) target = $region21
  $region20: #{transformer_forward.17} parent=0 // pred_region
    _
  $region21: #{transformer_forward.17} parent=0 // pred_fallthru
    _
  // Predicated region
  $region22: #{transformer_forward.17} parent=0 // pred_check
    _
  $region23: #{transformer_forward.17} parent=0 // pred_check_branch
    %22 = sbr.rel (0) target = $region25
  $region24: #{transformer_forward.17} parent=0 // pred_region
    _
  $region25: #{transformer_forward.17} parent=0 // pred_fallthru
    _
  %p24 = scmp.eq.s32.totalorder 0, 0
  // Predicated region
  $region26: #{transformer_forward.17} parent=0 // pred_check
    %p25 = pneg %p24
  $region27: #{transformer_forward.17} parent=0 // pred_check_branch
    %27 = sbr.rel (%p25) target = $region29
  $region28: #{transformer_forward.17} parent=0 // pred_region
    %vm28 = vcmask 261120
    %29 = vst.msk [vmem:[#allocation2] sm:$0xff] %vm28, 0.0
    %30 = vst.msk [vmem:[#allocation2 + $0x8] sm:$0xff] %vm28, 0.0
  $region29: #{transformer_forward.17} parent=0 // pred_fallthru
    _
  %v31 = vld [vmem:[#allocation2] sm:$0xff]
  %v32 = vld [vmem:[#allocation2 + $0x8] sm:$0xff]
  %v33 = vld [vmem:[%s0] sm:$0xf]
  %v34 = vld [vmem:[%s0 + $0x4] sm:$0xf]
  %v35 = vld [vmem:[%s1] sm:$0xf]
  %v36 = vld [vmem:[%s1 + $0x4] sm:$0xf]
  %v37 = vld [vmem:[%s1 + $0x8] sm:$0xf]
  %v38 = vld [vmem:[%s1 + $0xc] sm:$0xf]
  %v39 = vld [vmem:[%s1 + $0x10] sm:$0xf]
  %v40 = vld [vmem:[%s1 + $0x14] sm:$0xf]
  %v41 = vld [vmem:[%s1 + $0x18] sm:$0xf]
  %v42 = vld [vmem:[%s1 + $0x1c] sm:$0xf]
  %v45 = vunpack.c.l.b16 %v33
  %v46 = vunpack.c.l.b16 %v34
  %v47 = vpack.c.b16 %v46, %v45
  %v56 = vunpack.c.l.b16 %v35
  %v57 = vunpack.c.l.b16 %v36
  %v58 = vunpack.c.l.b16 %v37
  %v59 = vunpack.c.l.b16 %v38
  %v60 = vunpack.c.l.b16 %v39
  %v61 = vunpack.c.l.b16 %v40
  %v62 = vunpack.c.l.b16 %v41
  %v63 = vunpack.c.l.b16 %v42
  %v64 = vpack.c.b16 %v57, %v56
  %v65 = vpack.c.b16 %v59, %v58
  %v66 = vpack.c.b16 %v61, %v60
  %v67 = vpack.c.b16 %v63, %v62
  %vm72 = vcmask 523264
  %v74 = vsel %vm72, %v47, 0
  %76 = vmatprep.subr.bf16.mxu0 0
  %77 = vmatpush1.bf16.msra.mxu0 %v64
  %78 = vmatprep.subr.bf16.mxu0 0
  %79 = vmatpush1.bf16.msra.mxu0 %v65
  %80 = vmatprep.subr.bf16.mxu0 0
  %81 = vmatpush1.bf16.msra.mxu0 %v66
  %82 = vmatprep.subr.bf16.mxu0 0
  %83 = vmatpush1.bf16.msra.mxu0 %v67
  %84 = vmatprep.subr.bf16.mxu0 0
  %85 = vmatpush1.bf16.msra.mxu0 0
  %86 = vmatprep.subr.bf16.mxu0 0
  %87 = vmatpush1.bf16.msra.mxu0 0
  %88 = vmatprep.subr.bf16.mxu0 0
  %89 = vmatpush1.bf16.msra.mxu0 0
  %90 = vmatprep.subr.bf16.mxu0 0
  %91 = vmatpush1.bf16.msra.mxu0 0
  %92 = vmatprep.subr.bf16.mxu0 0
  %93 = vmatpush1.bf16.msra.mxu0 0
  %94 = vmatprep.subr.bf16.mxu0 0
  %95 = vmatpush1.bf16.msra.mxu0 0
  %96 = vmatprep.subr.bf16.mxu0 0
  %97 = vmatpush1.bf16.msra.mxu0 0
  %98 = vmatprep.subr.bf16.mxu0 0
  %99 = vmatpush1.bf16.msra.mxu0 0
  %100 = vmatprep.subr.bf16.mxu0 0
  %101 = vmatpush1.bf16.msra.mxu0 0
  %102 = vmatprep.subr.bf16.mxu0 0
  %103 = vmatpush1.bf16.msra.mxu0 0
  %104 = vmatprep.subr.bf16.mxu0 0
  %105 = vmatpush1.bf16.msra.mxu0 0
  %106 = vmatprep.subr.bf16.mxu0 0
  %107 = vmatpush1.bf16.msra.mxu0 0
  %108 = vmatprep.mubr.bf16.mxu0 0
  %109 = vmatmul.mubr.bf16.gmra.mrb[0].mxu0 %v74
  %v110 = vpop.f32.mrb[0].mxu0
  %v111 = vadd.f32 0.0, %v110
  %v112 = vpop.f32.mrb[0].mxu0
  %v113 = vpop.f32.mrb[0].mxu0
  %v114 = vadd.f32 0.0, %v113
  %v115 = vpop.f32.mrb[0].mxu0
  %116 = vdwg.mxu0
  %v117 = vadd.f32 %v31, %v111
  %v118 = vadd.f32 %v32, %v114
  %vm119 = vcmask 261120
  %120 = vst.msk [vmem:[#allocation2] sm:$0xff] %vm119, %v117
  %121 = vst.msk [vmem:[#allocation2 + $0x8] sm:$0xff] %vm119, %v118
  // Predicated region
  $region30: #{transformer_forward.17} parent=0 // pred_check
    %p122 = pneg %p24
  $region31: #{transformer_forward.17} parent=0 // pred_check_branch
    %124 = sbr.rel (%p122) target = $region33
  $region32: #{transformer_forward.17} parent=0 // pred_region
    %v125 = vld [vmem:[#allocation2] sm:$0xff]
    %v126 = vld [vmem:[#allocation2 + $0x8] sm:$0xff]
    %v127 = vld [vmem:[%s2] sm:$0x1]
    %v129 = vlaneseq
    %v130 = vshrl.u32 %v129, 7
    %v131 = vsub.s32 0, %v130
    %v132 = vrot.slane %v127, %v131
    %v134 = vadd.f32 %v125, %v132
    %v135 = vadd.f32 %v126, %v132
    %v136 = vld [vmem:[%s3] sm:$0xff]
    %v137 = vld [vmem:[%s3 + $0x8] sm:$0xff]
    %v138 = vadd.f32 %v134, %v136
    %v139 = vadd.f32 %v135, %v137
    %v140 = vsel %vm119, %v138, 0.0
    %141 = vadd.xlane.f32.xlu0 %v140
    %v142 = vpop.xlane.xlu0 %141
    %v143 = vsel %vm119, %v139, 0.0
    %144 = vadd.xlane.f32.xlu0 %v143
    %v145 = vpop.xlane.xlu0 %144
    %v146 = vrcp.pop 32.0
    %v147 = vmul.f32 %v142, %v146
    %v148 = vmul.f32 %v145, %v146
    %v149 = vsub.f32 %v138, %v147
    %v150 = vsub.f32 %v139, %v148
    %v151 = vmul.f32 %v149, %v149
    %v152 = vmul.f32 %v150, %v150
    %v153 = vsel %vm119, %v151, 0.0
    %154 = vadd.xlane.f32.xlu0 %v153
    %v155 = vpop.xlane.xlu0 %154
    %v156 = vsel %vm119, %v152, 0.0
    %157 = vadd.xlane.f32.xlu0 %v156
    %v158 = vpop.xlane.xlu0 %157
    %v159 = vmul.f32 %v155, %v146
    %v160 = vmul.f32 %v158, %v146
    %v161 = vadd.f32 %v159, 1e-05
    %v162 = vadd.f32 %v160, 1e-05
    %v163 = vrsqrt.pop %v161
    %v164 = vrsqrt.pop %v162
    %v165 = vmul.f32 %v149, %v163
    %v166 = vmul.f32 %v150, %v164
    %v167 = vld [vmem:[%s4] sm:$0x1]
    %v169 = vlaneseq
    %v170 = vshrl.u32 %v169, 7
    %v171 = vsub.s32 0, %v170
    %v172 = vrot.slane %v167, %v171
    %v174 = vmul.f32 %v165, %v172
    %v175 = vmul.f32 %v166, %v172
    %v176 = vld [vmem:[%s5] sm:$0x1]
    %v178 = vlaneseq
    %v179 = vshrl.u32 %v178, 7
    %v180 = vsub.s32 0, %v179
    %v181 = vrot.slane %v176, %v180
    %v183 = vadd.f32 %v174, %v181
    %v184 = vadd.f32 %v175, %v181
    %185 = vst.msk [vmem:[%s6] sm:$0xff] %vm119, %v183
    %186 = vst.msk [vmem:[%s6 + $0x8] sm:$0xff] %vm119, %v184
  $region33: #{transformer_forward.17} parent=0 // pred_fallthru
    _
  // Predicated region
  $region34: #{transformer_forward.17} parent=0 // pred_check
    _
  $region35: #{transformer_forward.17} parent=0 // pred_check_branch
    %188 = sbr.rel (0) target = $region37
  $region36: #{transformer_forward.17} parent=0 // pred_region
    _
  $region37: #{transformer_forward.17} parent=0 // pred_fallthru
    _
  // Predicated region
  $region38: #{transformer_forward.17} parent=0 // pred_check
    _
  $region39: #{transformer_forward.17} parent=0 // pred_check_branch
    %190 = sbr.rel (0) target = $region41
  $region40: #{transformer_forward.17} parent=0 // pred_region
    _
  $region41: #{transformer_forward.17} parent=0 // pred_fallthru
    _

</llo_original>
